<compile_context>
chip_gen: v7x
topology: tpu7x:2x2x1
jax: 0.10.0
libtpu: 0.0.40
codegen_flags: <defaults>
</compile_context>

<pallas_src>
import functools

import jax
import jax.numpy as jnp
from jax import lax
from jax.experimental import pallas as pl
from jax.experimental.pallas import tpu as pltpu


def _round_up(x, m):
    return (x + m - 1) // m * m


def _vmem_budget_bytes():
    """Generation-aware VMEM budget: ~3/4 of physical, 48 MiB fallback (v7x-safe)."""
    cap = 64 * 1024 * 1024
    try:
        info = pltpu.get_tpu_info()
        cap = int(getattr(info, "vmem_capacity_bytes", cap))
    except Exception:
        pass
    return int(min(cap * 3 // 4, 100 * 1024 * 1024))


def _vmem_need_bytes(chunk, bt, din, hidden, out_bytes):
    """Per-grid-step VMEM: double-buffered pipeline blocks + persistent scratch."""
    db = 2                                               # pipeline double buffering
    x_blk = 2 * db * chunk * bt * din * 2                # bf16 x blocks, fwd+bwd
    y_blk = 2 * db * chunk * bt * hidden * out_bytes     # y blocks, fwd+bwd
    w_ih = 2 * db * din * 4 * hidden * 2                 # bf16 W_ih, fwd+bwd
    w_hh = 2 * db * hidden * 4 * hidden * 2              # bf16 W_hh, fwd+bwd
    bias = 2 * db * 4 * hidden * 4
    gx_scr = 2 * chunk * bt * 4 * hidden * 4             # f32 gate scratch (single buf)
    st_scr = 4 * bt * hidden * 4                         # h/c carries, both directions
    return x_blk + y_blk + w_ih + w_hh + bias + gx_scr + st_scr


def _pick_chunk(t, bt, din, hidden, budget, max_chunk=32):
    cands = [c for c in (32, 16, 8, 4, 2, 1) if c <= max(min(max_chunk, t), 1)]
    for c in cands:
        if _vmem_need_bytes(c, bt, din, hidden, 4) * 1.2 <= budget:
            return c
    return 1


def _to_tiled(a_tm, nb, bt):
    """(Tp, Bp, D) -> (nb, Tp*BT, D): row t*BT+i of tile j is (time t, batch j*BT+i)."""
    tp, bp, d = a_tm.shape
    return a_tm.reshape(tp, nb, bt, d).transpose(1, 0, 2, 3).reshape(nb, tp * bt, d)


def _from_tiled(a_r, tp, nb, bt):
    """(nb, Tp*BT, D) -> (Tp, Bp, D)."""
    d = a_r.shape[-1]
    return a_r.reshape(nb, tp, bt, d).transpose(1, 0, 2, 3).reshape(tp, nb * bt, d)


# ----------------------------------------------------------------------------
# Pallas kernel: one time-chunk of the fused bidirectional LSTM recurrence,
# including the per-chunk input (gate) projection on the MXU.
# ----------------------------------------------------------------------------
def _bilstm_chunk_kernel(len_ref, xf_ref, xb_ref, wihf_ref, wihb_ref,
                         bf_ref, bb_ref, whhf_ref, whhb_ref,
                         yf_ref, yb_ref,
                         hf_scr, cf_scr, hb_scr, cb_scr, gxf_scr, gxb_scr,
                         *, hidden, chunk, bt, t_total, unroll):
    c = pl.program_id(1)  # time-chunk index (sequential / "arbitrary")

    # Zero-init carried state at the first time chunk of each batch tile.
    @pl.when(c == 0)
    def _():
        hf_scr[...] = jnp.zeros_like(hf_scr)
        cf_scr[...] = jnp.zeros_like(cf_scr)
        hb_scr[...] = jnp.zeros_like(hb_scr)
        cb_scr[...] = jnp.zeros_like(cb_scr)

    # --- fused per-chunk input projection: (chunk*BT, Din) x (Din, 4H), bf16 -> f32 ---
    gxf_scr[...] = (jnp.dot(xf_ref[...], wihf_ref[...],
                            preferred_element_type=jnp.float32) + bf_ref[...])
    gxb_scr[...] = (jnp.dot(xb_ref[...], wihb_ref[...],
                            preferred_element_type=jnp.float32) + bb_ref[...])

    lengths = len_ref[...]     # (BT, 1) int32 valid length per sequence
    whh_f = whhf_ref[...]      # (H, 4H) bf16, hoisted out of the time loop
    whh_b = whhb_ref[...]
    H = hidden

    def cell(gates, c_prev):
        # PyTorch LSTM gate order: i, f, g, o. Gate math in f32 (v5e-safe).
        # For production models H % 128 == 0, so these slices are lane-aligned.
        i = jax.nn.sigmoid(gates[:, 0:H])
        f = jax.nn.sigmoid(gates[:, H:2 * H])
        g = jnp.tanh(gates[:, 2 * H:3 * H])
        o = jax.nn.sigmoid(gates[:, 3 * H:4 * H])
        c_new = f * c_prev + i * g
        h_new = o * jnp.tanh(c_new)
        return h_new, c_new

    def body(s, carry):
        h_f, c_f, h_b, c_b = carry

        # ---- forward direction: global time t_f, ascending ----
        t_f = c * chunk + s
        row_f = pl.multiple_of(s * bt, 8)
        g_f = gxf_scr[pl.ds(row_f, bt), :] + jnp.dot(
            h_f.astype(jnp.bfloat16), whh_f, preferred_element_type=jnp.float32)
        h_fn, c_fn = cell(g_f, c_f)
        valid_f = t_f < lengths                       # (BT, 1) bool
        h_f = jnp.where(valid_f, h_fn, h_f)
        c_f = jnp.where(valid_f, c_fn, c_f)
        yf_ref[pl.ds(row_f, bt), :] = jnp.where(valid_f, h_f, 0.0).astype(yf_ref.dtype)

        # ---- backward direction: global time t_b, descending (packed semantics:
        #      state stays zero until t_b < length[b], i.e. it starts at the last
        #      valid token with zero initial state) ----
        s_b = chunk - 1 - s
        t_b = t_total - 1 - t_f
        row_b = pl.multiple_of(s_b * bt, 8)
        g_b = gxb_scr[pl.ds(row_b, bt), :] + jnp.dot(
            h_b.astype(jnp.bfloat16), whh_b, preferred_element_type=jnp.float32)
        h_bn, c_bn = cell(g_b, c_b)
        valid_b = t_b < lengths
        h_b = jnp.where(valid_b, h_bn, h_b)
        c_b = jnp.where(valid_b, c_bn, c_b)
        yb_ref[pl.ds(row_b, bt), :] = jnp.where(valid_b, h_b, 0.0).astype(yb_ref.dtype)

        return h_f, c_f, h_b, c_b

    carry = (hf_scr[...], cf_scr[...], hb_scr[...], cb_scr[...])
    h_f, c_f, h_b, c_b = lax.fori_loop(0, chunk, body, carry, unroll=unroll)
    hf_scr[...] = h_f
    cf_scr[...] = c_f
    hb_scr[...] = h_b
    cb_scr[...] = c_b


# ----------------------------------------------------------------------------
# One bidirectional layer (single pallas_call, both directions fused).
# ----------------------------------------------------------------------------
def bilstm_layer(x_r, len_col, p, *, hidden, chunk, t_padded, bt, out_dtype, vmem_limit):
    """x_r: (nb, Tp*BT, Din) bf16 tiled/time-major. Returns (y_f, y_b) in same layout."""
    nb, _, din = x_r.shape
    H = hidden
    nt = t_padded // chunk

    wih_f = jnp.transpose(p["w_ih_f"]).astype(jnp.bfloat16)      # (Din, 4H)
    wih_b = jnp.transpose(p["w_ih_b"]).astype(jnp.bfloat16)
    whh_f = jnp.transpose(p["w_hh_f"]).astype(jnp.bfloat16)      # (H, 4H)
    whh_b = jnp.transpose(p["w_hh_b"]).astype(jnp.bfloat16)
    bias_f = (p["b_ih_f"] + p["b_hh_f"]).reshape(1, 4 * H).astype(jnp.float32)
    bias_b = (p["b_ih_b"] + p["b_hh_b"]).reshape(1, 4 * H).astype(jnp.float32)

    kernel = functools.partial(_bilstm_chunk_kernel, hidden=H, chunk=chunk, bt=bt,
                               t_total=t_padded, unroll=min(8, chunk))
    y_f, y_b = pl.pallas_call(
        kernel,
        out_shape=(jax.ShapeDtypeStruct((nb, t_padded * bt, H), out_dtype),
                   jax.ShapeDtypeStruct((nb, t_padded * bt, H), out_dtype)),
        grid_spec=pltpu.PrefetchScalarGridSpec(
            num_scalar_prefetch=0,
            grid=(nb, nt),
            in_specs=[
                pl.BlockSpec((bt, 1), lambda b, c: (b, 0)),                       # lengths
                pl.BlockSpec((None, chunk * bt, din), lambda b, c: (b, c, 0)),    # x fwd
                pl.BlockSpec((None, chunk * bt, din),
                             lambda b, c: (b, nt - 1 - c, 0)),                    # x bwd
                pl.BlockSpec((din, 4 * H), lambda b, c: (0, 0)),                  # W_ih fwd
                pl.BlockSpec((din, 4 * H), lambda b, c: (0, 0)),                  # W_ih bwd
                pl.BlockSpec((1, 4 * H), lambda b, c: (0, 0)),                    # bias fwd
                pl.BlockSpec((1, 4 * H), lambda b, c: (0, 0)),                    # bias bwd
                pl.BlockSpec((H, 4 * H), lambda b, c: (0, 0)),                    # W_hh fwd
                pl.BlockSpec((H, 4 * H), lambda b, c: (0, 0)),                    # W_hh bwd
            ],
            out_specs=[
                pl.BlockSpec((None, chunk * bt, H), lambda b, c: (b, c, 0)),          # y fwd
                pl.BlockSpec((None, chunk * bt, H), lambda b, c: (b, nt - 1 - c, 0)),  # y bwd
            ],
            scratch_shapes=[
                pltpu.VMEM((bt, H), jnp.float32),                # h forward
                pltpu.VMEM((bt, H), jnp.float32),                # c forward
                pltpu.VMEM((bt, H), jnp.float32),                # h backward
                pltpu.VMEM((bt, H), jnp.float32),                # c backward
                pltpu.VMEM((chunk * bt, 4 * H), jnp.float32),    # gate scratch fwd
                pltpu.VMEM((chunk * bt, 4 * H), jnp.float32),    # gate scratch bwd
            ],
        ),
        compiler_params=pltpu.CompilerParams(
            dimension_semantics=("parallel", "arbitrary"),
            vmem_limit_bytes=vmem_limit,
        ),
    )(len_col, x_r, x_r, wih_f, wih_b, bias_f, bias_b, whh_f, whh_b)
    return y_f, y_b


# ----------------------------------------------------------------------------
# RNNEncoder.forward equivalent (eval mode)
# ----------------------------------------------------------------------------
def rnn_encoder_forward(x, lengths, params, hidden_size, num_layers,
                        drop_prob=0.0, max_chunk_t=32):
    """Output (B, T, 2*hidden_size) f32; zeros at t >= lengths[b] (pad_packed semantics).

    The sort-by-length / unsort in the reference module is an exact round trip for this
    per-sequence computation and is omitted.
    """
    B, T, D = x.shape
    H = hidden_size

    # Batch padding + tiling: >=2 batch tiles whenever the batch allows it (v7x megacore).
    Bp = _round_up(max(B, 8), 8)
    if Bp >= 16:
        Bp = _round_up(Bp, 16)
        BT = Bp // 2
    else:
        BT = Bp
    nb = Bp // BT

    budget = _vmem_budget_bytes()
    din_max = max(D, 2 * H)
    chunk = _pick_chunk(T, BT, din_max, H, budget, max_chunk_t)
    Tp = _round_up(T, chunk)

    lengths = jnp.clip(lengths.astype(jnp.int32), 0, T)       # guard lengths > T
    len_col = jnp.zeros((Bp, 1), jnp.int32).at[:B, 0].set(lengths)

    # Time-major, padded, bf16, re-tiled batch layout: (nb, Tp*BT, D).
    x_tm = jnp.zeros((Tp, Bp, D), jnp.bfloat16)
    x_tm = x_tm.at[:T, :B, :].set(jnp.transpose(x, (1, 0, 2)).astype(jnp.bfloat16))
    inp = _to_tiled(x_tm, nb, BT)

    for layer in range(num_layers):
        last = layer == num_layers - 1
        out_dtype = jnp.float32 if last else jnp.bfloat16   # bf16 activations between layers
        y_f, y_b = bilstm_layer(inp, len_col, params[layer], hidden=H,
                                chunk=chunk, t_padded=Tp, bt=BT,
                                out_dtype=out_dtype, vmem_limit=budget)
        inp = jnp.concatenate([y_f, y_b], axis=-1)          # (nb, Tp*BT, 2H)
        # TODO(synk): inter-layer LSTM dropout and the trailing F.dropout are identity in
        # eval mode (self.training == False), so they are omitted.

    out_tm = _from_tiled(inp, Tp, nb, BT)                    # (Tp, Bp, 2H) f32
    return jnp.transpose(out_tm, (1, 0, 2))[:B, :T, :]


# ----------------------------------------------------------------------------
# Pure-JAX f32 reference (packed bidirectional LSTM) for validation.
# ----------------------------------------------------------------------------
def _lstm_ref(x, lengths, params, hidden_size, num_layers):
    B, T, _ = x.shape
    H = hidden_size
    inp = x.astype(jnp.float32)
    for layer in range(num_layers):
        p = params[layer]
        outs = []
        for d in ("f", "b"):
            wih, whh = p[f"w_ih_{d}"], p[f"w_hh_{d}"]
            bias = p[f"b_ih_{d}"] + p[f"b_hh_{d}"]
            order = range(T) if d == "f" else range(T - 1, -1, -1)
            h = jnp.zeros((B, H), jnp.float32)
            c = jnp.zeros((B, H), jnp.float32)
            y = jnp.zeros((B, T, H), jnp.float32)
            for t in order:
                g = inp[:, t, :] @ wih.T + h @ whh.T + bias
                i = jax.nn.sigmoid(g[:, :H])
                f = jax.nn.sigmoid(g[:, H:2 * H])
                gg = jnp.tanh(g[:, 2 * H:3 * H])
                o = jax.nn.sigmoid(g[:, 3 * H:])
                c_new = f * c + i * gg
                h_new = o * jnp.tanh(c_new)
                valid = (t < lengths)[:, None]
                h = jnp.where(valid, h_new, h)
                c = jnp.where(valid, c_new, c)
                y = y.at[:, t, :].set(jnp.where(valid, h, 0.0))
            outs.append(y)
        inp = jnp.concatenate(outs, axis=-1)
    return inp


def init_params(key, input_size, hidden_size, num_layers):
    """Deterministic PyTorch-style LSTM init: U(-1/sqrt(H), 1/sqrt(H))."""
    params = []
    k = 1.0 / float(hidden_size) ** 0.5
    for layer in range(num_layers):
        d_in = input_size if layer == 0 else 2 * hidden_size
        shapes = [
            ("w_ih_f", (4 * hidden_size, d_in)), ("w_hh_f", (4 * hidden_size, hidden_size)),
            ("b_ih_f", (4 * hidden_size,)), ("b_hh_f", (4 * hidden_size,)),
            ("w_ih_b", (4 * hidden_size, d_in)), ("w_hh_b", (4 * hidden_size, hidden_size)),
            ("b_ih_b", (4 * hidden_size,)), ("b_hh_b", (4 * hidden_size,)),
        ]
        layer_p = {}
        for name, shape in shapes:
            key, sub = jax.random.split(key)
            layer_p[name] = jax.random.uniform(sub, shape, jnp.float32, -k, k)
        params.append(layer_p)
    return params


if __name__ == "__main__":
    B, T, D, H, L = 2, 8, 16, 32, 2  # batch, seq, input_size, hidden_size, num_layers
    key = jax.random.PRNGKey(0)
    kx, kp = jax.random.split(key)
    x = jax.random.normal(kx, (B, T, D), jnp.float32)
    lengths = jnp.array([8, 5], dtype=jnp.int32)
    params = init_params(kp, D, H, L)

    out = rnn_encoder_forward(x, lengths, params, hidden_size=H, num_layers=L)
    out = jax.block_until_ready(out)
    assert out.shape == (B, T, 2 * H), out.shape
    # padded positions must be exactly zero (pad_packed_sequence semantics)
    assert bool(jnp.all(out[1, 5:, :] == 0.0))
    # numerical check against a pure-JAX f32 reference (bf16 weights/activations in the
    # kernel path -> compare with a tolerance, not exact match)
    ref = _lstm_ref(x, lengths, params, H, L)
    max_err = float(jnp.max(jnp.abs(out - ref)))
    assert max_err < 0.1, f"max abs error vs f32 reference: {max_err}"
    print("KERNEL_OK")
</pallas_src>

<mosaic_0001>
module attributes {stable_mosaic.version = 11 : i64} {
  func.func @_bilstm_chunk_kernel(%arg0: i32, %arg1: i32, %arg2: memref<8x1xi32, #tpu.memory_space<vmem>>, %arg3: memref<1x64x16xbf16, #tpu.memory_space<vmem>>, %arg4: memref<1x64x16xbf16, #tpu.memory_space<vmem>>, %arg5: memref<16x128xbf16, #tpu.memory_space<vmem>>, %arg6: memref<16x128xbf16, #tpu.memory_space<vmem>>, %arg7: memref<1x128xf32, #tpu.memory_space<vmem>>, %arg8: memref<1x128xf32, #tpu.memory_space<vmem>>, %arg9: memref<32x128xbf16, #tpu.memory_space<vmem>>, %arg10: memref<32x128xbf16, #tpu.memory_space<vmem>>, %arg11: memref<1x64x32xbf16, #tpu.memory_space<vmem>>, %arg12: memref<1x64x32xbf16, #tpu.memory_space<vmem>>, %arg13: memref<8x32xf32, #tpu.memory_space<vmem>>, %arg14: memref<8x32xf32, #tpu.memory_space<vmem>>, %arg15: memref<8x32xf32, #tpu.memory_space<vmem>>, %arg16: memref<8x32xf32, #tpu.memory_space<vmem>>, %arg17: memref<64x128xf32, #tpu.memory_space<vmem>>, %arg18: memref<64x128xf32, #tpu.memory_space<vmem>>) attributes {dimension_semantics = [#tpu.dimension_semantics<parallel>, #tpu.dimension_semantics<arbitrary>], iteration_bounds = array<i64: 1, 1>, scalar_prefetch = 0 : i64, scratch_operands = 6 : i64, tpu.core_type = #tpu.core_type<tc>, window_params = [{transform_indices = @transform_0, window_bounds = array<i64: 8, 1>}, {transform_indices = @transform_1, window_bounds = array<i64: 1, 64, 16>}, {transform_indices = @transform_2, window_bounds = array<i64: 1, 64, 16>}, {pipeline_mode = #tpu.pipeline_mode<synchronous>, transform_indices = @transform_3, window_bounds = array<i64: 16, 128>}, {pipeline_mode = #tpu.pipeline_mode<synchronous>, transform_indices = @transform_4, window_bounds = array<i64: 16, 128>}, {pipeline_mode = #tpu.pipeline_mode<synchronous>, transform_indices = @transform_5, window_bounds = array<i64: 1, 128>}, {pipeline_mode = #tpu.pipeline_mode<synchronous>, transform_indices = @transform_6, window_bounds = array<i64: 1, 128>}, {pipeline_mode = #tpu.pipeline_mode<synchronous>, transform_indices = @transform_7, window_bounds = array<i64: 32, 128>}, {pipeline_mode = #tpu.pipeline_mode<synchronous>, transform_indices = @transform_8, window_bounds = array<i64: 32, 128>}, {transform_indices = @transform_9, window_bounds = array<i64: 1, 64, 32>}, {transform_indices = @transform_10, window_bounds = array<i64: 1, 64, 32>}]} {
    %c0_i32 = arith.constant 0 : i32
    %0 = arith.cmpi eq, %arg1, %c0_i32 : i32
    %1 = arith.extui %0 : i1 to i32
    %c0_i32_0 = arith.constant 0 : i32
    %2 = arith.cmpi ne, %1, %c0_i32_0 : i32
    scf.if %2 {
      %cst_210 = arith.constant 0.000000e+00 : f32
      %846 = vector.broadcast %cst_210 : f32 to vector<8x32xf32>
      %c0_211 = arith.constant 0 : index
      %c0_212 = arith.constant 0 : index
      %847 = vector.load %arg13[%c0_211, %c0_212] : memref<8x32xf32, #tpu.memory_space<vmem>>, vector<8x32xf32>
      tpu.vector_store %arg13[%c0_211, %c0_212], %846 {strides = array<i32>} : memref<8x32xf32, #tpu.memory_space<vmem>>, vector<8x32xf32>,
      %cst_213 = arith.constant 0.000000e+00 : f32
      %848 = vector.broadcast %cst_213 : f32 to vector<8x32xf32>
      %c0_214 = arith.constant 0 : index
      %c0_215 = arith.constant 0 : index
      %849 = vector.load %arg14[%c0_214, %c0_215] : memref<8x32xf32, #tpu.memory_space<vmem>>, vector<8x32xf32>
      tpu.vector_store %arg14[%c0_214, %c0_215], %848 {strides = array<i32>} : memref<8x32xf32, #tpu.memory_space<vmem>>, vector<8x32xf32>,
      %cst_216 = arith.constant 0.000000e+00 : f32
      %850 = vector.broadcast %cst_216 : f32 to vector<8x32xf32>
      %c0_217 = arith.constant 0 : index
      %c0_218 = arith.constant 0 : index
      %851 = vector.load %arg15[%c0_217, %c0_218] : memref<8x32xf32, #tpu.memory_space<vmem>>, vector<8x32xf32>
      tpu.vector_store %arg15[%c0_217, %c0_218], %850 {strides = array<i32>} : memref<8x32xf32, #tpu.memory_space<vmem>>, vector<8x32xf32>,
      %cst_219 = arith.constant 0.000000e+00 : f32
      %852 = vector.broadcast %cst_219 : f32 to vector<8x32xf32>
      %c0_220 = arith.constant 0 : index
      %c0_221 = arith.constant 0 : index
      %853 = vector.load %arg16[%c0_220, %c0_221] : memref<8x32xf32, #tpu.memory_space<vmem>>, vector<8x32xf32>
      tpu.vector_store %arg16[%c0_220, %c0_221], %852 {strides = array<i32>} : memref<8x32xf32, #tpu.memory_space<vmem>>, vector<8x32xf32>,
    } else {
    }
    %c0 = arith.constant 0 : index
    %c0_1 = arith.constant 0 : index
    %c0_2 = arith.constant 0 : index
    %3 = vector.load %arg3[%c0, %c0_1, %c0_2] : memref<1x64x16xbf16, #tpu.memory_space<vmem>>, vector<1x64x16xbf16>
    %4 = vector.shape_cast %3 : vector<1x64x16xbf16> to vector<64x16xbf16>
    %c0_3 = arith.constant 0 : index
    %c0_4 = arith.constant 0 : index
    %5 = vector.load %arg5[%c0_3, %c0_4] : memref<16x128xbf16, #tpu.memory_space<vmem>>, vector<16x128xbf16>
    %cst = arith.constant dense<0.000000e+00> : vector<64x128xf32>
    %6 = tpu.matmul %4, %5, %cst {dimension_numbers = #tpu.dot_dimension_numbers<[1], [0], [0], [1], [0, 0, 1, 1], [], []>} : vector<64x16xbf16>, vector<16x128xbf16>, vector<64x128xf32> -> vector<64x128xf32>
    %c0_5 = arith.constant 0 : index
    %c0_6 = arith.constant 0 : index
    %7 = vector.load %arg7[%c0_5, %c0_6] : memref<1x128xf32, #tpu.memory_space<vmem>>, vector<1x128xf32>
    %8 = vector.broadcast %7 : vector<1x128xf32> to vector<64x128xf32>
    %9 = arith.addf %6, %8 : vector<64x128xf32>
    %c0_7 = arith.constant 0 : index
    %c0_8 = arith.constant 0 : index
    %10 = vector.load %arg17[%c0_7, %c0_8] : memref<64x128xf32, #tpu.memory_space<vmem>>, vector<64x128xf32>
    tpu.vector_store %arg17[%c0_7, %c0_8], %9 {strides = array<i32>} : memref<64x128xf32, #tpu.memory_space<vmem>>, vector<64x128xf32>,
    %c0_9 = arith.constant 0 : index
    %c0_10 = arith.constant 0 : index
    %c0_11 = arith.constant 0 : index
    %11 = vector.load %arg4[%c0_9, %c0_10, %c0_11] : memref<1x64x16xbf16, #tpu.memory_space<vmem>>, vector<1x64x16xbf16>
    %12 = vector.shape_cast %11 : vector<1x64x16xbf16> to vector<64x16xbf16>
    %c0_12 = arith.constant 0 : index
    %c0_13 = arith.constant 0 : index
    %13 = vector.load %arg6[%c0_12, %c0_13] : memref<16x128xbf16, #tpu.memory_space<vmem>>, vector<16x128xbf16>
    %cst_14 = arith.constant dense<0.000000e+00> : vector<64x128xf32>
    %14 = tpu.matmul %12, %13, %cst_14 {dimension_numbers = #tpu.dot_dimension_numbers<[1], [0], [0], [1], [0, 0, 1, 1], [], []>} : vector<64x16xbf16>, vector<16x128xbf16>, vector<64x128xf32> -> vector<64x128xf32>
    %c0_15 = arith.constant 0 : index
    %c0_16 = arith.constant 0 : index
    %15 = vector.load %arg8[%c0_15, %c0_16] : memref<1x128xf32, #tpu.memory_space<vmem>>, vector<1x128xf32>
    %16 = vector.broadcast %15 : vector<1x128xf32> to vector<64x128xf32>
    %17 = arith.addf %14, %16 : vector<64x128xf32>
    %c0_17 = arith.constant 0 : index
    %c0_18 = arith.constant 0 : index
    %18 = vector.load %arg18[%c0_17, %c0_18] : memref<64x128xf32, #tpu.memory_space<vmem>>, vector<64x128xf32>
    tpu.vector_store %arg18[%c0_17, %c0_18], %17 {strides = array<i32>} : memref<64x128xf32, #tpu.memory_space<vmem>>, vector<64x128xf32>,
    %c0_19 = arith.constant 0 : index
    %c0_20 = arith.constant 0 : index
    %19 = vector.load %arg2[%c0_19, %c0_20] : memref<8x1xi32, #tpu.memory_space<vmem>>, vector<8x1xi32>
    %c0_21 = arith.constant 0 : index
    %c0_22 = arith.constant 0 : index
    %20 = vector.load %arg9[%c0_21, %c0_22] : memref<32x128xbf16, #tpu.memory_space<vmem>>, vector<32x128xbf16>
    %c0_23 = arith.constant 0 : index
    %c0_24 = arith.constant 0 : index
    %21 = vector.load %arg10[%c0_23, %c0_24] : memref<32x128xbf16, #tpu.memory_space<vmem>>, vector<32x128xbf16>
    %c0_25 = arith.constant 0 : index
    %c0_26 = arith.constant 0 : index
    %22 = vector.load %arg13[%c0_25, %c0_26] : memref<8x32xf32, #tpu.memory_space<vmem>>, vector<8x32xf32>
    %c0_27 = arith.constant 0 : index
    %c0_28 = arith.constant 0 : index
    %23 = vector.load %arg14[%c0_27, %c0_28] : memref<8x32xf32, #tpu.memory_space<vmem>>, vector<8x32xf32>
    %c0_29 = arith.constant 0 : index
    %c0_30 = arith.constant 0 : index
    %24 = vector.load %arg15[%c0_29, %c0_30] : memref<8x32xf32, #tpu.memory_space<vmem>>, vector<8x32xf32>
    %c0_31 = arith.constant 0 : index
    %c0_32 = arith.constant 0 : index
    %25 = vector.load %arg16[%c0_31, %c0_32] : memref<8x32xf32, #tpu.memory_space<vmem>>, vector<8x32xf32>
    %c0_i32_33 = arith.constant 0 : i32
    %c8_i32 = arith.constant 8 : i32
    %26 = arith.muli %arg1, %c8_i32 : i32
    %27 = arith.addi %26, %c0_i32_33 : i32
    %c8_i32_34 = arith.constant 8 : i32
    %28 = arith.muli %c0_i32_33, %c8_i32_34 : i32
    %29 = tpu.assume_multiple %28, 8 : i32
    %30 = arith.index_cast %29 : i32 to index
    %c0_35 = arith.constant 0 : index
    %31 = vector.load %arg17[%30, %c0_35] : memref<64x128xf32, #tpu.memory_space<vmem>>, vector<8x128xf32>
    %32 = arith.truncf %22 : vector<8x32xf32> to vector<8x32xbf16>
    %cst_36 = arith.constant dense<0.000000e+00> : vector<8x128xf32>
    %33 = tpu.matmul %32, %20, %cst_36 {dimension_numbers = #tpu.dot_dimension_numbers<[1], [0], [0], [1], [0, 0, 1, 1], [], []>} : vector<8x32xbf16>, vector<32x128xbf16>, vector<8x128xf32> -> vector<8x128xf32>
    %34 = arith.addf %31, %33 : vector<8x128xf32>
    %35 = vector.extract_strided_slice %34 {offsets = [0, 0], sizes = [8, 32], strides = [1, 1]} : vector<8x128xf32> to vector<8x32xf32>
    %36 = arith.negf %35 : vector<8x32xf32>
    %37 = math.exp %36 : vector<8x32xf32>
    %cst_37 = arith.constant 1.000000e+00 : f32
    %38 = vector.broadcast %cst_37 : f32 to vector<8x32xf32>
    %39 = arith.addf %38, %37 : vector<8x32xf32>
    %40 = arith.divf %38, %39 : vector<8x32xf32>
    %41 = vector.extract_strided_slice %34 {offsets = [0, 32], sizes = [8, 32], strides = [1, 1]} : vector<8x128xf32> to vector<8x32xf32>
    %42 = arith.negf %41 : vector<8x32xf32>
    %43 = math.exp %42 : vector<8x32xf32>
    %cst_38 = arith.constant 1.000000e+00 : f32
    %44 = vector.broadcast %cst_38 : f32 to vector<8x32xf32>
    %45 = arith.addf %44, %43 : vector<8x32xf32>
    %46 = arith.divf %44, %45 : vector<8x32xf32>
    %47 = vector.extract_strided_slice %34 {offsets = [0, 64], sizes = [8, 32], strides = [1, 1]} : vector<8x128xf32> to vector<8x32xf32>
    %48 = math.tanh %47 : vector<8x32xf32>
    %49 = vector.extract_strided_slice %34 {offsets = [0, 96], sizes = [8, 32], strides = [1, 1]} : vector<8x128xf32> to vector<8x32xf32>
    %50 = arith.negf %49 : vector<8x32xf32>
    %51 = math.exp %50 : vector<8x32xf32>
    %cst_39 = arith.constant 1.000000e+00 : f32
    %52 = vector.broadcast %cst_39 : f32 to vector<8x32xf32>
    %53 = arith.addf %52, %51 : vector<8x32xf32>
    %54 = arith.divf %52, %53 : vector<8x32xf32>
    %55 = arith.mulf %46, %23 : vector<8x32xf32>
    %56 = arith.mulf %40, %48 : vector<8x32xf32>
    %57 = arith.addf %55, %56 : vector<8x32xf32>
    %58 = math.tanh %57 : vector<8x32xf32>
    %59 = arith.mulf %54, %58 : vector<8x32xf32>
    %60 = vector.broadcast %27 : i32 to vector<8x1xi32>
    %61 = arith.cmpi slt, %60, %19 : vector<8x1xi32>
    %62 = vector.shape_cast %61 : vector<8x1xi1> to vector<8x1xi1>
    %63 = vector.broadcast %62 : vector<8x1xi1> to vector<8x32xi1>
    %64 = arith.select %63, %59, %22 : vector<8x32xi1>, vector<8x32xf32>
    %65 = vector.shape_cast %61 : vector<8x1xi1> to vector<8x1xi1>
    %66 = vector.broadcast %65 : vector<8x1xi1> to vector<8x32xi1>
    %67 = arith.select %66, %57, %23 : vector<8x32xi1>, vector<8x32xf32>
    %cst_40 = arith.constant 0.000000e+00 : f32
    %68 = vector.shape_cast %61 : vector<8x1xi1> to vector<8x1xi1>
    %69 = vector.broadcast %68 : vector<8x1xi1> to vector<8x32xi1>
    %70 = vector.broadcast %cst_40 : f32 to vector<8x32xf32>
    %71 = arith.select %69, %64, %70 : vector<8x32xi1>, vector<8x32xf32>
    %72 = arith.truncf %71 : vector<8x32xf32> to vector<8x32xbf16>
    %c0_41 = arith.constant 0 : index
    %73 = arith.index_cast %29 : i32 to index
    %c0_42 = arith.constant 0 : index
    %74 = vector.load %arg11[%c0_41, %73, %c0_42] : memref<1x64x32xbf16, #tpu.memory_space<vmem>>, vector<1x8x32xbf16>
    %75 = vector.shape_cast %74 : vector<1x8x32xbf16> to vector<8x32xbf16>
    %76 = vector.shape_cast %72 : vector<8x32xbf16> to vector<1x8x32xbf16>
    tpu.vector_store %arg11[%c0_41, %73, %c0_42], %76 {strides = array<i32>} : memref<1x64x32xbf16, #tpu.memory_space<vmem>>, vector<1x8x32xbf16>,
    %c7_i32 = arith.constant 7 : i32
    %77 = arith.subi %c7_i32, %c0_i32_33 : i32
    %c7_i32_43 = arith.constant 7 : i32
    %78 = arith.subi %c7_i32_43, %27 : i32
    %c8_i32_44 = arith.constant 8 : i32
    %79 = arith.muli %77, %c8_i32_44 : i32
    %80 = tpu.assume_multiple %79, 8 : i32
    %81 = arith.index_cast %80 : i32 to index
    %c0_45 = arith.constant 0 : index
    %82 = vector.load %arg18[%81, %c0_45] : memref<64x128xf32, #tpu.memory_space<vmem>>, vector<8x128xf32>
    %83 = arith.truncf %24 : vector<8x32xf32> to vector<8x32xbf16>
    %cst_46 = arith.constant dense<0.000000e+00> : vector<8x128xf32>
    %84 = tpu.matmul %83, %21, %cst_46 {dimension_numbers = #tpu.dot_dimension_numbers<[1], [0], [0], [1], [0, 0, 1, 1], [], []>} : vector<8x32xbf16>, vector<32x128xbf16>, vector<8x128xf32> -> vector<8x128xf32>
    %85 = arith.addf %82, %84 : vector<8x128xf32>
    %86 = vector.extract_strided_slice %85 {offsets = [0, 0], sizes = [8, 32], strides = [1, 1]} : vector<8x128xf32> to vector<8x32xf32>
    %87 = arith.negf %86 : vector<8x32xf32>
    %88 = math.exp %87 : vector<8x32xf32>
    %cst_47 = arith.constant 1.000000e+00 : f32
    %89 = vector.broadcast %cst_47 : f32 to vector<8x32xf32>
    %90 = arith.addf %89, %88 : vector<8x32xf32>
    %91 = arith.divf %89, %90 : vector<8x32xf32>
    %92 = vector.extract_strided_slice %85 {offsets = [0, 32], sizes = [8, 32], strides = [1, 1]} : vector<8x128xf32> to vector<8x32xf32>
    %93 = arith.negf %92 : vector<8x32xf32>
    %94 = math.exp %93 : vector<8x32xf32>
    %cst_48 = arith.constant 1.000000e+00 : f32
    %95 = vector.broadcast %cst_48 : f32 to vector<8x32xf32>
    %96 = arith.addf %95, %94 : vector<8x32xf32>
    %97 = arith.divf %95, %96 : vector<8x32xf32>
    %98 = vector.extract_strided_slice %85 {offsets = [0, 64], sizes = [8, 32], strides = [1, 1]} : vector<8x128xf32> to vector<8x32xf32>
    %99 = math.tanh %98 : vector<8x32xf32>
    %100 = vector.extract_strided_slice %85 {offsets = [0, 96], sizes = [8, 32], strides = [1, 1]} : vector<8x128xf32> to vector<8x32xf32>
    %101 = arith.negf %100 : vector<8x32xf32>
    %102 = math.exp %101 : vector<8x32xf32>
    %cst_49 = arith.constant 1.000000e+00 : f32
    %103 = vector.broadcast %cst_49 : f32 to vector<8x32xf32>
    %104 = arith.addf %103, %102 : vector<8x32xf32>
    %105 = arith.divf %103, %104 : vector<8x32xf32>
    %106 = arith.mulf %97, %25 : vector<8x32xf32>
    %107 = arith.mulf %91, %99 : vector<8x32xf32>
    %108 = arith.addf %106, %107 : vector<8x32xf32>
    %109 = math.tanh %108 : vector<8x32xf32>
    %110 = arith.mulf %105, %109 : vector<8x32xf32>
    %111 = vector.broadcast %78 : i32 to vector<8x1xi32>
    %112 = arith.cmpi slt, %111, %19 : vector<8x1xi32>
    %113 = vector.shape_cast %112 : vector<8x1xi1> to vector<8x1xi1>
    %114 = vector.broadcast %113 : vector<8x1xi1> to vector<8x32xi1>
    %115 = arith.select %114, %110, %24 : vector<8x32xi1>, vector<8x32xf32>
    %116 = vector.shape_cast %112 : vector<8x1xi1> to vector<8x1xi1>
    %117 = vector.broadcast %116 : vector<8x1xi1> to vector<8x32xi1>
    %118 = arith.select %117, %108, %25 : vector<8x32xi1>, vector<8x32xf32>
    %cst_50 = arith.constant 0.000000e+00 : f32
    %119 = vector.shape_cast %112 : vector<8x1xi1> to vector<8x1xi1>
    %120 = vector.broadcast %119 : vector<8x1xi1> to vector<8x32xi1>
    %121 = vector.broadcast %cst_50 : f32 to vector<8x32xf32>
    %122 = arith.select %120, %115, %121 : vector<8x32xi1>, vector<8x32xf32>
    %123 = arith.truncf %122 : vector<8x32xf32> to vector<8x32xbf16>
    %c0_51 = arith.constant 0 : index
    %124 = arith.index_cast %80 : i32 to index
    %c0_52 = arith.constant 0 : index
    %125 = vector.load %arg12[%c0_51, %124, %c0_52] : memref<1x64x32xbf16, #tpu.memory_space<vmem>>, vector<1x8x32xbf16>
    %126 = vector.shape_cast %125 : vector<1x8x32xbf16> to vector<8x32xbf16>
    %127 = vector.shape_cast %123 : vector<8x32xbf16> to vector<1x8x32xbf16>
    tpu.vector_store %arg12[%c0_51, %124, %c0_52], %127 {strides = array<i32>} : memref<1x64x32xbf16, #tpu.memory_space<vmem>>, vector<1x8x32xbf16>,
    %c1_i32 = arith.constant 1 : i32
    %c8_i32_53 = arith.constant 8 : i32
    %128 = arith.muli %arg1, %c8_i32_53 : i32
    %129 = arith.addi %128, %c1_i32 : i32
    %c8_i32_54 = arith.constant 8 : i32
    %130 = arith.muli %c1_i32, %c8_i32_54 : i32
    %131 = tpu.assume_multiple %130, 8 : i32
    %132 = arith.index_cast %131 : i32 to index
    %c0_55 = arith.constant 0 : index
    %133 = vector.load %arg17[%132, %c0_55] : memref<64x128xf32, #tpu.memory_space<vmem>>, vector<8x128xf32>
    %134 = arith.truncf %64 : vector<8x32xf32> to vector<8x32xbf16>
    %cst_56 = arith.constant dense<0.000000e+00> : vector<8x128xf32>
    %135 = tpu.matmul %134, %20, %cst_56 {dimension_numbers = #tpu.dot_dimension_numbers<[1], [0], [0], [1], [0, 0, 1, 1], [], []>} : vector<8x32xbf16>, vector<32x128xbf16>, vector<8x128xf32> -> vector<8x128xf32>
    %136 = arith.addf %133, %135 : vector<8x128xf32>
    %137 = vector.extract_strided_slice %136 {offsets = [0, 0], sizes = [8, 32], strides = [1, 1]} : vector<8x128xf32> to vector<8x32xf32>
    %138 = arith.negf %137 : vector<8x32xf32>
    %139 = math.exp %138 : vector<8x32xf32>
    %cst_57 = arith.constant 1.000000e+00 : f32
    %140 = vector.broadcast %cst_57 : f32 to vector<8x32xf32>
    %141 = arith.addf %140, %139 : vector<8x32xf32>
    %142 = arith.divf %140, %141 : vector<8x32xf32>
    %143 = vector.extract_strided_slice %136 {offsets = [0, 32], sizes = [8, 32], strides = [1, 1]} : vector<8x128xf32> to vector<8x32xf32>
    %144 = arith.negf %143 : vector<8x32xf32>
    %145 = math.exp %144 : vector<8x32xf32>
    %cst_58 = arith.constant 1.000000e+00 : f32
    %146 = vector.broadcast %cst_58 : f32 to vector<8x32xf32>
    %147 = arith.addf %146, %145 : vector<8x32xf32>
    %148 = arith.divf %146, %147 : vector<8x32xf32>
    %149 = vector.extract_strided_slice %136 {offsets = [0, 64], sizes = [8, 32], strides = [1, 1]} : vector<8x128xf32> to vector<8x32xf32>
    %150 = math.tanh %149 : vector<8x32xf32>
    %151 = vector.extract_strided_slice %136 {offsets = [0, 96], sizes = [8, 32], strides = [1, 1]} : vector<8x128xf32> to vector<8x32xf32>
    %152 = arith.negf %151 : vector<8x32xf32>
    %153 = math.exp %152 : vector<8x32xf32>
    %cst_59 = arith.constant 1.000000e+00 : f32
    %154 = vector.broadcast %cst_59 : f32 to vector<8x32xf32>
    %155 = arith.addf %154, %153 : vector<8x32xf32>
    %156 = arith.divf %154, %155 : vector<8x32xf32>
    %157 = arith.mulf %148, %67 : vector<8x32xf32>
    %158 = arith.mulf %142, %150 : vector<8x32xf32>
    %159 = arith.addf %157, %158 : vector<8x32xf32>
    %160 = math.tanh %159 : vector<8x32xf32>
    %161 = arith.mulf %156, %160 : vector<8x32xf32>
    %162 = vector.broadcast %129 : i32 to vector<8x1xi32>
    %163 = arith.cmpi slt, %162, %19 : vector<8x1xi32>
    %164 = vector.shape_cast %163 : vector<8x1xi1> to vector<8x1xi1>
    %165 = vector.broadcast %164 : vector<8x1xi1> to vector<8x32xi1>
    %166 = arith.select %165, %161, %64 : vector<8x32xi1>, vector<8x32xf32>
    %167 = vector.shape_cast %163 : vector<8x1xi1> to vector<8x1xi1>
    %168 = vector.broadcast %167 : vector<8x1xi1> to vector<8x32xi1>
    %169 = arith.select %168, %159, %67 : vector<8x32xi1>, vector<8x32xf32>
    %cst_60 = arith.constant 0.000000e+00 : f32
    %170 = vector.shape_cast %163 : vector<8x1xi1> to vector<8x1xi1>
    %171 = vector.broadcast %170 : vector<8x1xi1> to vector<8x32xi1>
    %172 = vector.broadcast %cst_60 : f32 to vector<8x32xf32>
    %173 = arith.select %171, %166, %172 : vector<8x32xi1>, vector<8x32xf32>
    %174 = arith.truncf %173 : vector<8x32xf32> to vector<8x32xbf16>
    %c0_61 = arith.constant 0 : index
    %175 = arith.index_cast %131 : i32 to index
    %c0_62 = arith.constant 0 : index
    %176 = vector.load %arg11[%c0_61, %175, %c0_62] : memref<1x64x32xbf16, #tpu.memory_space<vmem>>, vector<1x8x32xbf16>
    %177 = vector.shape_cast %176 : vector<1x8x32xbf16> to vector<8x32xbf16>
    %178 = vector.shape_cast %174 : vector<8x32xbf16> to vector<1x8x32xbf16>
    tpu.vector_store %arg11[%c0_61, %175, %c0_62], %178 {strides = array<i32>} : memref<1x64x32xbf16, #tpu.memory_space<vmem>>, vector<1x8x32xbf16>,
    %c7_i32_63 = arith.constant 7 : i32
    %179 = arith.subi %c7_i32_63, %c1_i32 : i32
    %c7_i32_64 = arith.constant 7 : i32
    %180 = arith.subi %c7_i32_64, %129 : i32
    %c8_i32_65 = arith.constant 8 : i32
    %181 = arith.muli %179, %c8_i32_65 : i32
    %182 = tpu.assume_multiple %181, 8 : i32
    %183 = arith.index_cast %182 : i32 to index
    %c0_66 = arith.constant 0 : index
    %184 = vector.load %arg18[%183, %c0_66] : memref<64x128xf32, #tpu.memory_space<vmem>>, vector<8x128xf32>
    %185 = arith.truncf %115 : vector<8x32xf32> to vector<8x32xbf16>
    %cst_67 = arith.constant dense<0.000000e+00> : vector<8x128xf32>
    %186 = tpu.matmul %185, %21, %cst_67 {dimension_numbers = #tpu.dot_dimension_numbers<[1], [0], [0], [1], [0, 0, 1, 1], [], []>} : vector<8x32xbf16>, vector<32x128xbf16>, vector<8x128xf32> -> vector<8x128xf32>
    %187 = arith.addf %184, %186 : vector<8x128xf32>
    %188 = vector.extract_strided_slice %187 {offsets = [0, 0], sizes = [8, 32], strides = [1, 1]} : vector<8x128xf32> to vector<8x32xf32>
    %189 = arith.negf %188 : vector<8x32xf32>
    %190 = math.exp %189 : vector<8x32xf32>
    %cst_68 = arith.constant 1.000000e+00 : f32
    %191 = vector.broadcast %cst_68 : f32 to vector<8x32xf32>
    %192 = arith.addf %191, %190 : vector<8x32xf32>
    %193 = arith.divf %191, %192 : vector<8x32xf32>
    %194 = vector.extract_strided_slice %187 {offsets = [0, 32], sizes = [8, 32], strides = [1, 1]} : vector<8x128xf32> to vector<8x32xf32>
    %195 = arith.negf %194 : vector<8x32xf32>
    %196 = math.exp %195 : vector<8x32xf32>
    %cst_69 = arith.constant 1.000000e+00 : f32
    %197 = vector.broadcast %cst_69 : f32 to vector<8x32xf32>
    %198 = arith.addf %197, %196 : vector<8x32xf32>
    %199 = arith.divf %197, %198 : vector<8x32xf32>
    %200 = vector.extract_strided_slice %187 {offsets = [0, 64], sizes = [8, 32], strides = [1, 1]} : vector<8x128xf32> to vector<8x32xf32>
    %201 = math.tanh %200 : vector<8x32xf32>
    %202 = vector.extract_strided_slice %187 {offsets = [0, 96], sizes = [8, 32], strides = [1, 1]} : vector<8x128xf32> to vector<8x32xf32>
    %203 = arith.negf %202 : vector<8x32xf32>
    %204 = math.exp %203 : vector<8x32xf32>
    %cst_70 = arith.constant 1.000000e+00 : f32
    %205 = vector.broadcast %cst_70 : f32 to vector<8x32xf32>
    %206 = arith.addf %205, %204 : vector<8x32xf32>
    %207 = arith.divf %205, %206 : vector<8x32xf32>
    %208 = arith.mulf %199, %118 : vector<8x32xf32>
    %209 = arith.mulf %193, %201 : vector<8x32xf32>
    %210 = arith.addf %208, %209 : vector<8x32xf32>
    %211 = math.tanh %210 : vector<8x32xf32>
    %212 = arith.mulf %207, %211 : vector<8x32xf32>
    %213 = vector.broadcast %180 : i32 to vector<8x1xi32>
    %214 = arith.cmpi slt, %213, %19 : vector<8x1xi32>
    %215 = vector.shape_cast %214 : vector<8x1xi1> to vector<8x1xi1>
    %216 = vector.broadcast %215 : vector<8x1xi1> to vector<8x32xi1>
    %217 = arith.select %216, %212, %115 : vector<8x32xi1>, vector<8x32xf32>
    %218 = vector.shape_cast %214 : vector<8x1xi1> to vector<8x1xi1>
    %219 = vector.broadcast %218 : vector<8x1xi1> to vector<8x32xi1>
    %220 = arith.select %219, %210, %118 : vector<8x32xi1>, vector<8x32xf32>
    %cst_71 = arith.constant 0.000000e+00 : f32
    %221 = vector.shape_cast %214 : vector<8x1xi1> to vector<8x1xi1>
    %222 = vector.broadcast %221 : vector<8x1xi1> to vector<8x32xi1>
    %223 = vector.broadcast %cst_71 : f32 to vector<8x32xf32>
    %224 = arith.select %222, %217, %223 : vector<8x32xi1>, vector<8x32xf32>
    %225 = arith.truncf %224 : vector<8x32xf32> to vector<8x32xbf16>
    %c0_72 = arith.constant 0 : index
    %226 = arith.index_cast %182 : i32 to index
    %c0_73 = arith.constant 0 : index
    %227 = vector.load %arg12[%c0_72, %226, %c0_73] : memref<1x64x32xbf16, #tpu.memory_space<vmem>>, vector<1x8x32xbf16>
    %228 = vector.shape_cast %227 : vector<1x8x32xbf16> to vector<8x32xbf16>
    %229 = vector.shape_cast %225 : vector<8x32xbf16> to vector<1x8x32xbf16>
    tpu.vector_store %arg12[%c0_72, %226, %c0_73], %229 {strides = array<i32>} : memref<1x64x32xbf16, #tpu.memory_space<vmem>>, vector<1x8x32xbf16>,
    %c2_i32 = arith.constant 2 : i32
    %c8_i32_74 = arith.constant 8 : i32
    %230 = arith.muli %arg1, %c8_i32_74 : i32
    %231 = arith.addi %230, %c2_i32 : i32
    %c8_i32_75 = arith.constant 8 : i32
    %232 = arith.muli %c2_i32, %c8_i32_75 : i32
    %233 = tpu.assume_multiple %232, 8 : i32
    %234 = arith.index_cast %233 : i32 to index
    %c0_76 = arith.constant 0 : index
    %235 = vector.load %arg17[%234, %c0_76] : memref<64x128xf32, #tpu.memory_space<vmem>>, vector<8x128xf32>
    %236 = arith.truncf %166 : vector<8x32xf32> to vector<8x32xbf16>
    %cst_77 = arith.constant dense<0.000000e+00> : vector<8x128xf32>
    %237 = tpu.matmul %236, %20, %cst_77 {dimension_numbers = #tpu.dot_dimension_numbers<[1], [0], [0], [1], [0, 0, 1, 1], [], []>} : vector<8x32xbf16>, vector<32x128xbf16>, vector<8x128xf32> -> vector<8x128xf32>
    %238 = arith.addf %235, %237 : vector<8x128xf32>
    %239 = vector.extract_strided_slice %238 {offsets = [0, 0], sizes = [8, 32], strides = [1, 1]} : vector<8x128xf32> to vector<8x32xf32>
    %240 = arith.negf %239 : vector<8x32xf32>
    %241 = math.exp %240 : vector<8x32xf32>
    %cst_78 = arith.constant 1.000000e+00 : f32
    %242 = vector.broadcast %cst_78 : f32 to vector<8x32xf32>
    %243 = arith.addf %242, %241 : vector<8x32xf32>
    %244 = arith.divf %242, %243 : vector<8x32xf32>
    %245 = vector.extract_strided_slice %238 {offsets = [0, 32], sizes = [8, 32], strides = [1, 1]} : vector<8x128xf32> to vector<8x32xf32>
    %246 = arith.negf %245 : vector<8x32xf32>
    %247 = math.exp %246 : vector<8x32xf32>
    %cst_79 = arith.constant 1.000000e+00 : f32
    %248 = vector.broadcast %cst_79 : f32 to vector<8x32xf32>
    %249 = arith.addf %248, %247 : vector<8x32xf32>
    %250 = arith.divf %248, %249 : vector<8x32xf32>
    %251 = vector.extract_strided_slice %238 {offsets = [0, 64], sizes = [8, 32], strides = [1, 1]} : vector<8x128xf32> to vector<8x32xf32>
    %252 = math.tanh %251 : vector<8x32xf32>
    %253 = vector.extract_strided_slice %238 {offsets = [0, 96], sizes = [8, 32], strides = [1, 1]} : vector<8x128xf32> to vector<8x32xf32>
    %254 = arith.negf %253 : vector<8x32xf32>
    %255 = math.exp %254 : vector<8x32xf32>
    %cst_80 = arith.constant 1.000000e+00 : f32
    %256 = vector.broadcast %cst_80 : f32 to vector<8x32xf32>
    %257 = arith.addf %256, %255 : vector<8x32xf32>
    %258 = arith.divf %256, %257 : vector<8x32xf32>
    %259 = arith.mulf %250, %169 : vector<8x32xf32>
    %260 = arith.mulf %244, %252 : vector<8x32xf32>
    %261 = arith.addf %259, %260 : vector<8x32xf32>
    %262 = math.tanh %261 : vector<8x32xf32>
    %263 = arith.mulf %258, %262 : vector<8x32xf32>
    %264 = vector.broadcast %231 : i32 to vector<8x1xi32>
    %265 = arith.cmpi slt, %264, %19 : vector<8x1xi32>
    %266 = vector.shape_cast %265 : vector<8x1xi1> to vector<8x1xi1>
    %267 = vector.broadcast %266 : vector<8x1xi1> to vector<8x32xi1>
    %268 = arith.select %267, %263, %166 : vector<8x32xi1>, vector<8x32xf32>
    %269 = vector.shape_cast %265 : vector<8x1xi1> to vector<8x1xi1>
    %270 = vector.broadcast %269 : vector<8x1xi1> to vector<8x32xi1>
    %271 = arith.select %270, %261, %169 : vector<8x32xi1>, vector<8x32xf32>
    %cst_81 = arith.constant 0.000000e+00 : f32
    %272 = vector.shape_cast %265 : vector<8x1xi1> to vector<8x1xi1>
    %273 = vector.broadcast %272 : vector<8x1xi1> to vector<8x32xi1>
    %274 = vector.broadcast %cst_81 : f32 to vector<8x32xf32>
    %275 = arith.select %273, %268, %274 : vector<8x32xi1>, vector<8x32xf32>
    %276 = arith.truncf %275 : vector<8x32xf32> to vector<8x32xbf16>
    %c0_82 = arith.constant 0 : index
    %277 = arith.index_cast %233 : i32 to index
    %c0_83 = arith.constant 0 : index
    %278 = vector.load %arg11[%c0_82, %277, %c0_83] : memref<1x64x32xbf16, #tpu.memory_space<vmem>>, vector<1x8x32xbf16>
    %279 = vector.shape_cast %278 : vector<1x8x32xbf16> to vector<8x32xbf16>
    %280 = vector.shape_cast %276 : vector<8x32xbf16> to vector<1x8x32xbf16>
    tpu.vector_store %arg11[%c0_82, %277, %c0_83], %280 {strides = array<i32>} : memref<1x64x32xbf16, #tpu.memory_space<vmem>>, vector<1x8x32xbf16>,
    %c7_i32_84 = arith.constant 7 : i32
    %281 = arith.subi %c7_i32_84, %c2_i32 : i32
    %c7_i32_85 = arith.constant 7 : i32
    %282 = arith.subi %c7_i32_85, %231 : i32
    %c8_i32_86 = arith.constant 8 : i32
    %283 = arith.muli %281, %c8_i32_86 : i32
    %284 = tpu.assume_multiple %283, 8 : i32
    %285 = arith.index_cast %284 : i32 to index
    %c0_87 = arith.constant 0 : index
    %286 = vector.load %arg18[%285, %c0_87] : memref<64x128xf32, #tpu.memory_space<vmem>>, vector<8x128xf32>
    %287 = arith.truncf %217 : vector<8x32xf32> to vector<8x32xbf16>
    %cst_88 = arith.constant dense<0.000000e+00> : vector<8x128xf32>
    %288 = tpu.matmul %287, %21, %cst_88 {dimension_numbers = #tpu.dot_dimension_numbers<[1], [0], [0], [1], [0, 0, 1, 1], [], []>} : vector<8x32xbf16>, vector<32x128xbf16>, vector<8x128xf32> -> vector<8x128xf32>
    %289 = arith.addf %286, %288 : vector<8x128xf32>
    %290 = vector.extract_strided_slice %289 {offsets = [0, 0], sizes = [8, 32], strides = [1, 1]} : vector<8x128xf32> to vector<8x32xf32>
    %291 = arith.negf %290 : vector<8x32xf32>
    %292 = math.exp %291 : vector<8x32xf32>
    %cst_89 = arith.constant 1.000000e+00 : f32
    %293 = vector.broadcast %cst_89 : f32 to vector<8x32xf32>
    %294 = arith.addf %293, %292 : vector<8x32xf32>
    %295 = arith.divf %293, %294 : vector<8x32xf32>
    %296 = vector.extract_strided_slice %289 {offsets = [0, 32], sizes = [8, 32], strides = [1, 1]} : vector<8x128xf32> to vector<8x32xf32>
    %297 = arith.negf %296 : vector<8x32xf32>
    %298 = math.exp %297 : vector<8x32xf32>
    %cst_90 = arith.constant 1.000000e+00 : f32
    %299 = vector.broadcast %cst_90 : f32 to vector<8x32xf32>
    %300 = arith.addf %299, %298 : vector<8x32xf32>
    %301 = arith.divf %299, %300 : vector<8x32xf32>
    %302 = vector.extract_strided_slice %289 {offsets = [0, 64], sizes = [8, 32], strides = [1, 1]} : vector<8x128xf32> to vector<8x32xf32>
    %303 = math.tanh %302 : vector<8x32xf32>
    %304 = vector.extract_strided_slice %289 {offsets = [0, 96], sizes = [8, 32], strides = [1, 1]} : vector<8x128xf32> to vector<8x32xf32>
    %305 = arith.negf %304 : vector<8x32xf32>
    %306 = math.exp %305 : vector<8x32xf32>
    %cst_91 = arith.constant 1.000000e+00 : f32
    %307 = vector.broadcast %cst_91 : f32 to vector<8x32xf32>
    %308 = arith.addf %307, %306 : vector<8x32xf32>
    %309 = arith.divf %307, %308 : vector<8x32xf32>
    %310 = arith.mulf %301, %220 : vector<8x32xf32>
    %311 = arith.mulf %295, %303 : vector<8x32xf32>
    %312 = arith.addf %310, %311 : vector<8x32xf32>
    %313 = math.tanh %312 : vector<8x32xf32>
    %314 = arith.mulf %309, %313 : vector<8x32xf32>
    %315 = vector.broadcast %282 : i32 to vector<8x1xi32>
    %316 = arith.cmpi slt, %315, %19 : vector<8x1xi32>
    %317 = vector.shape_cast %316 : vector<8x1xi1> to vector<8x1xi1>
    %318 = vector.broadcast %317 : vector<8x1xi1> to vector<8x32xi1>
    %319 = arith.select %318, %314, %217 : vector<8x32xi1>, vector<8x32xf32>
    %320 = vector.shape_cast %316 : vector<8x1xi1> to vector<8x1xi1>
    %321 = vector.broadcast %320 : vector<8x1xi1> to vector<8x32xi1>
    %322 = arith.select %321, %312, %220 : vector<8x32xi1>, vector<8x32xf32>
    %cst_92 = arith.constant 0.000000e+00 : f32
    %323 = vector.shape_cast %316 : vector<8x1xi1> to vector<8x1xi1>
    %324 = vector.broadcast %323 : vector<8x1xi1> to vector<8x32xi1>
    %325 = vector.broadcast %cst_92 : f32 to vector<8x32xf32>
    %326 = arith.select %324, %319, %325 : vector<8x32xi1>, vector<8x32xf32>
    %327 = arith.truncf %326 : vector<8x32xf32> to vector<8x32xbf16>
    %c0_93 = arith.constant 0 : index
    %328 = arith.index_cast %284 : i32 to index
    %c0_94 = arith.constant 0 : index
    %329 = vector.load %arg12[%c0_93, %328, %c0_94] : memref<1x64x32xbf16, #tpu.memory_space<vmem>>, vector<1x8x32xbf16>
    %330 = vector.shape_cast %329 : vector<1x8x32xbf16> to vector<8x32xbf16>
    %331 = vector.shape_cast %327 : vector<8x32xbf16> to vector<1x8x32xbf16>
    tpu.vector_store %arg12[%c0_93, %328, %c0_94], %331 {strides = array<i32>} : memref<1x64x32xbf16, #tpu.memory_space<vmem>>, vector<1x8x32xbf16>,
    %c3_i32 = arith.constant 3 : i32
    %c8_i32_95 = arith.constant 8 : i32
    %332 = arith.muli %arg1, %c8_i32_95 : i32
    %333 = arith.addi %332, %c3_i32 : i32
    %c8_i32_96 = arith.constant 8 : i32
    %334 = arith.muli %c3_i32, %c8_i32_96 : i32
    %335 = tpu.assume_multiple %334, 8 : i32
    %336 = arith.index_cast %335 : i32 to index
    %c0_97 = arith.constant 0 : index
    %337 = vector.load %arg17[%336, %c0_97] : memref<64x128xf32, #tpu.memory_space<vmem>>, vector<8x128xf32>
    %338 = arith.truncf %268 : vector<8x32xf32> to vector<8x32xbf16>
    %cst_98 = arith.constant dense<0.000000e+00> : vector<8x128xf32>
    %339 = tpu.matmul %338, %20, %cst_98 {dimension_numbers = #tpu.dot_dimension_numbers<[1], [0], [0], [1], [0, 0, 1, 1], [], []>} : vector<8x32xbf16>, vector<32x128xbf16>, vector<8x128xf32> -> vector<8x128xf32>
    %340 = arith.addf %337, %339 : vector<8x128xf32>
    %341 = vector.extract_strided_slice %340 {offsets = [0, 0], sizes = [8, 32], strides = [1, 1]} : vector<8x128xf32> to vector<8x32xf32>
    %342 = arith.negf %341 : vector<8x32xf32>
    %343 = math.exp %342 : vector<8x32xf32>
    %cst_99 = arith.constant 1.000000e+00 : f32
    %344 = vector.broadcast %cst_99 : f32 to vector<8x32xf32>
    %345 = arith.addf %344, %343 : vector<8x32xf32>
    %346 = arith.divf %344, %345 : vector<8x32xf32>
    %347 = vector.extract_strided_slice %340 {offsets = [0, 32], sizes = [8, 32], strides = [1, 1]} : vector<8x128xf32> to vector<8x32xf32>
    %348 = arith.negf %347 : vector<8x32xf32>
    %349 = math.exp %348 : vector<8x32xf32>
    %cst_100 = arith.constant 1.000000e+00 : f32
    %350 = vector.broadcast %cst_100 : f32 to vector<8x32xf32>
    %351 = arith.addf %350, %349 : vector<8x32xf32>
    %352 = arith.divf %350, %351 : vector<8x32xf32>
    %353 = vector.extract_strided_slice %340 {offsets = [0, 64], sizes = [8, 32], strides = [1, 1]} : vector<8x128xf32> to vector<8x32xf32>
    %354 = math.tanh %353 : vector<8x32xf32>
    %355 = vector.extract_strided_slice %340 {offsets = [0, 96], sizes = [8, 32], strides = [1, 1]} : vector<8x128xf32> to vector<8x32xf32>
    %356 = arith.negf %355 : vector<8x32xf32>
    %357 = math.exp %356 : vector<8x32xf32>
    %cst_101 = arith.constant 1.000000e+00 : f32
    %358 = vector.broadcast %cst_101 : f32 to vector<8x32xf32>
    %359 = arith.addf %358, %357 : vector<8x32xf32>
    %360 = arith.divf %358, %359 : vector<8x32xf32>
    %361 = arith.mulf %352, %271 : vector<8x32xf32>
    %362 = arith.mulf %346, %354 : vector<8x32xf32>
    %363 = arith.addf %361, %362 : vector<8x32xf32>
    %364 = math.tanh %363 : vector<8x32xf32>
    %365 = arith.mulf %360, %364 : vector<8x32xf32>
    %366 = vector.broadcast %333 : i32 to vector<8x1xi32>
    %367 = arith.cmpi slt, %366, %19 : vector<8x1xi32>
    %368 = vector.shape_cast %367 : vector<8x1xi1> to vector<8x1xi1>
    %369 = vector.broadcast %368 : vector<8x1xi1> to vector<8x32xi1>
    %370 = arith.select %369, %365, %268 : vector<8x32xi1>, vector<8x32xf32>
    %371 = vector.shape_cast %367 : vector<8x1xi1> to vector<8x1xi1>
    %372 = vector.broadcast %371 : vector<8x1xi1> to vector<8x32xi1>
    %373 = arith.select %372, %363, %271 : vector<8x32xi1>, vector<8x32xf32>
    %cst_102 = arith.constant 0.000000e+00 : f32
    %374 = vector.shape_cast %367 : vector<8x1xi1> to vector<8x1xi1>
    %375 = vector.broadcast %374 : vector<8x1xi1> to vector<8x32xi1>
    %376 = vector.broadcast %cst_102 : f32 to vector<8x32xf32>
    %377 = arith.select %375, %370, %376 : vector<8x32xi1>, vector<8x32xf32>
    %378 = arith.truncf %377 : vector<8x32xf32> to vector<8x32xbf16>
    %c0_103 = arith.constant 0 : index
    %379 = arith.index_cast %335 : i32 to index
    %c0_104 = arith.constant 0 : index
    %380 = vector.load %arg11[%c0_103, %379, %c0_104] : memref<1x64x32xbf16, #tpu.memory_space<vmem>>, vector<1x8x32xbf16>
    %381 = vector.shape_cast %380 : vector<1x8x32xbf16> to vector<8x32xbf16>
    %382 = vector.shape_cast %378 : vector<8x32xbf16> to vector<1x8x32xbf16>
    tpu.vector_store %arg11[%c0_103, %379, %c0_104], %382 {strides = array<i32>} : memref<1x64x32xbf16, #tpu.memory_space<vmem>>, vector<1x8x32xbf16>,
    %c7_i32_105 = arith.constant 7 : i32
    %383 = arith.subi %c7_i32_105, %c3_i32 : i32
    %c7_i32_106 = arith.constant 7 : i32
    %384 = arith.subi %c7_i32_106, %333 : i32
    %c8_i32_107 = arith.constant 8 : i32
    %385 = arith.muli %383, %c8_i32_107 : i32
    %386 = tpu.assume_multiple %385, 8 : i32
    %387 = arith.index_cast %386 : i32 to index
    %c0_108 = arith.constant 0 : index
    %388 = vector.load %arg18[%387, %c0_108] : memref<64x128xf32, #tpu.memory_space<vmem>>, vector<8x128xf32>
    %389 = arith.truncf %319 : vector<8x32xf32> to vector<8x32xbf16>
    %cst_109 = arith.constant dense<0.000000e+00> : vector<8x128xf32>
    %390 = tpu.matmul %389, %21, %cst_109 {dimension_numbers = #tpu.dot_dimension_numbers<[1], [0], [0], [1], [0, 0, 1, 1], [], []>} : vector<8x32xbf16>, vector<32x128xbf16>, vector<8x128xf32> -> vector<8x128xf32>
    %391 = arith.addf %388, %390 : vector<8x128xf32>
    %392 = vector.extract_strided_slice %391 {offsets = [0, 0], sizes = [8, 32], strides = [1, 1]} : vector<8x128xf32> to vector<8x32xf32>
    %393 = arith.negf %392 : vector<8x32xf32>
    %394 = math.exp %393 : vector<8x32xf32>
    %cst_110 = arith.constant 1.000000e+00 : f32
    %395 = vector.broadcast %cst_110 : f32 to vector<8x32xf32>
    %396 = arith.addf %395, %394 : vector<8x32xf32>
    %397 = arith.divf %395, %396 : vector<8x32xf32>
    %398 = vector.extract_strided_slice %391 {offsets = [0, 32], sizes = [8, 32], strides = [1, 1]} : vector<8x128xf32> to vector<8x32xf32>
    %399 = arith.negf %398 : vector<8x32xf32>
    %400 = math.exp %399 : vector<8x32xf32>
    %cst_111 = arith.constant 1.000000e+00 : f32
    %401 = vector.broadcast %cst_111 : f32 to vector<8x32xf32>
    %402 = arith.addf %401, %400 : vector<8x32xf32>
    %403 = arith.divf %401, %402 : vector<8x32xf32>
    %404 = vector.extract_strided_slice %391 {offsets = [0, 64], sizes = [8, 32], strides = [1, 1]} : vector<8x128xf32> to vector<8x32xf32>
    %405 = math.tanh %404 : vector<8x32xf32>
    %406 = vector.extract_strided_slice %391 {offsets = [0, 96], sizes = [8, 32], strides = [1, 1]} : vector<8x128xf32> to vector<8x32xf32>
    %407 = arith.negf %406 : vector<8x32xf32>
    %408 = math.exp %407 : vector<8x32xf32>
    %cst_112 = arith.constant 1.000000e+00 : f32
    %409 = vector.broadcast %cst_112 : f32 to vector<8x32xf32>
    %410 = arith.addf %409, %408 : vector<8x32xf32>
    %411 = arith.divf %409, %410 : vector<8x32xf32>
    %412 = arith.mulf %403, %322 : vector<8x32xf32>
    %413 = arith.mulf %397, %405 : vector<8x32xf32>
    %414 = arith.addf %412, %413 : vector<8x32xf32>
    %415 = math.tanh %414 : vector<8x32xf32>
    %416 = arith.mulf %411, %415 : vector<8x32xf32>
    %417 = vector.broadcast %384 : i32 to vector<8x1xi32>
    %418 = arith.cmpi slt, %417, %19 : vector<8x1xi32>
    %419 = vector.shape_cast %418 : vector<8x1xi1> to vector<8x1xi1>
    %420 = vector.broadcast %419 : vector<8x1xi1> to vector<8x32xi1>
    %421 = arith.select %420, %416, %319 : vector<8x32xi1>, vector<8x32xf32>
    %422 = vector.shape_cast %418 : vector<8x1xi1> to vector<8x1xi1>
    %423 = vector.broadcast %422 : vector<8x1xi1> to vector<8x32xi1>
    %424 = arith.select %423, %414, %322 : vector<8x32xi1>, vector<8x32xf32>
    %cst_113 = arith.constant 0.000000e+00 : f32
    %425 = vector.shape_cast %418 : vector<8x1xi1> to vector<8x1xi1>
    %426 = vector.broadcast %425 : vector<8x1xi1> to vector<8x32xi1>
    %427 = vector.broadcast %cst_113 : f32 to vector<8x32xf32>
    %428 = arith.select %426, %421, %427 : vector<8x32xi1>, vector<8x32xf32>
    %429 = arith.truncf %428 : vector<8x32xf32> to vector<8x32xbf16>
    %c0_114 = arith.constant 0 : index
    %430 = arith.index_cast %386 : i32 to index
    %c0_115 = arith.constant 0 : index
    %431 = vector.load %arg12[%c0_114, %430, %c0_115] : memref<1x64x32xbf16, #tpu.memory_space<vmem>>, vector<1x8x32xbf16>
    %432 = vector.shape_cast %431 : vector<1x8x32xbf16> to vector<8x32xbf16>
    %433 = vector.shape_cast %429 : vector<8x32xbf16> to vector<1x8x32xbf16>
    tpu.vector_store %arg12[%c0_114, %430, %c0_115], %433 {strides = array<i32>} : memref<1x64x32xbf16, #tpu.memory_space<vmem>>, vector<1x8x32xbf16>,
    %c4_i32 = arith.constant 4 : i32
    %c8_i32_116 = arith.constant 8 : i32
    %434 = arith.muli %arg1, %c8_i32_116 : i32
    %435 = arith.addi %434, %c4_i32 : i32
    %c8_i32_117 = arith.constant 8 : i32
    %436 = arith.muli %c4_i32, %c8_i32_117 : i32
    %437 = tpu.assume_multiple %436, 8 : i32
    %438 = arith.index_cast %437 : i32 to index
    %c0_118 = arith.constant 0 : index
    %439 = vector.load %arg17[%438, %c0_118] : memref<64x128xf32, #tpu.memory_space<vmem>>, vector<8x128xf32>
    %440 = arith.truncf %370 : vector<8x32xf32> to vector<8x32xbf16>
    %cst_119 = arith.constant dense<0.000000e+00> : vector<8x128xf32>
    %441 = tpu.matmul %440, %20, %cst_119 {dimension_numbers = #tpu.dot_dimension_numbers<[1], [0], [0], [1], [0, 0, 1, 1], [], []>} : vector<8x32xbf16>, vector<32x128xbf16>, vector<8x128xf32> -> vector<8x128xf32>
    %442 = arith.addf %439, %441 : vector<8x128xf32>
    %443 = vector.extract_strided_slice %442 {offsets = [0, 0], sizes = [8, 32], strides = [1, 1]} : vector<8x128xf32> to vector<8x32xf32>
    %444 = arith.negf %443 : vector<8x32xf32>
    %445 = math.exp %444 : vector<8x32xf32>
    %cst_120 = arith.constant 1.000000e+00 : f32
    %446 = vector.broadcast %cst_120 : f32 to vector<8x32xf32>
    %447 = arith.addf %446, %445 : vector<8x32xf32>
    %448 = arith.divf %446, %447 : vector<8x32xf32>
    %449 = vector.extract_strided_slice %442 {offsets = [0, 32], sizes = [8, 32], strides = [1, 1]} : vector<8x128xf32> to vector<8x32xf32>
    %450 = arith.negf %449 : vector<8x32xf32>
    %451 = math.exp %450 : vector<8x32xf32>
    %cst_121 = arith.constant 1.000000e+00 : f32
    %452 = vector.broadcast %cst_121 : f32 to vector<8x32xf32>
    %453 = arith.addf %452, %451 : vector<8x32xf32>
    %454 = arith.divf %452, %453 : vector<8x32xf32>
    %455 = vector.extract_strided_slice %442 {offsets = [0, 64], sizes = [8, 32], strides = [1, 1]} : vector<8x128xf32> to vector<8x32xf32>
    %456 = math.tanh %455 : vector<8x32xf32>
    %457 = vector.extract_strided_slice %442 {offsets = [0, 96], sizes = [8, 32], strides = [1, 1]} : vector<8x128xf32> to vector<8x32xf32>
    %458 = arith.negf %457 : vector<8x32xf32>
    %459 = math.exp %458 : vector<8x32xf32>
    %cst_122 = arith.constant 1.000000e+00 : f32
    %460 = vector.broadcast %cst_122 : f32 to vector<8x32xf32>
    %461 = arith.addf %460, %459 : vector<8x32xf32>
    %462 = arith.divf %460, %461 : vector<8x32xf32>
    %463 = arith.mulf %454, %373 : vector<8x32xf32>
    %464 = arith.mulf %448, %456 : vector<8x32xf32>
    %465 = arith.addf %463, %464 : vector<8x32xf32>
    %466 = math.tanh %465 : vector<8x32xf32>
    %467 = arith.mulf %462, %466 : vector<8x32xf32>
    %468 = vector.broadcast %435 : i32 to vector<8x1xi32>
    %469 = arith.cmpi slt, %468, %19 : vector<8x1xi32>
    %470 = vector.shape_cast %469 : vector<8x1xi1> to vector<8x1xi1>
    %471 = vector.broadcast %470 : vector<8x1xi1> to vector<8x32xi1>
    %472 = arith.select %471, %467, %370 : vector<8x32xi1>, vector<8x32xf32>
    %473 = vector.shape_cast %469 : vector<8x1xi1> to vector<8x1xi1>
    %474 = vector.broadcast %473 : vector<8x1xi1> to vector<8x32xi1>
    %475 = arith.select %474, %465, %373 : vector<8x32xi1>, vector<8x32xf32>
    %cst_123 = arith.constant 0.000000e+00 : f32
    %476 = vector.shape_cast %469 : vector<8x1xi1> to vector<8x1xi1>
    %477 = vector.broadcast %476 : vector<8x1xi1> to vector<8x32xi1>
    %478 = vector.broadcast %cst_123 : f32 to vector<8x32xf32>
    %479 = arith.select %477, %472, %478 : vector<8x32xi1>, vector<8x32xf32>
    %480 = arith.truncf %479 : vector<8x32xf32> to vector<8x32xbf16>
    %c0_124 = arith.constant 0 : index
    %481 = arith.index_cast %437 : i32 to index
    %c0_125 = arith.constant 0 : index
    %482 = vector.load %arg11[%c0_124, %481, %c0_125] : memref<1x64x32xbf16, #tpu.memory_space<vmem>>, vector<1x8x32xbf16>
    %483 = vector.shape_cast %482 : vector<1x8x32xbf16> to vector<8x32xbf16>
    %484 = vector.shape_cast %480 : vector<8x32xbf16> to vector<1x8x32xbf16>
    tpu.vector_store %arg11[%c0_124, %481, %c0_125], %484 {strides = array<i32>} : memref<1x64x32xbf16, #tpu.memory_space<vmem>>, vector<1x8x32xbf16>,
    %c7_i32_126 = arith.constant 7 : i32
    %485 = arith.subi %c7_i32_126, %c4_i32 : i32
    %c7_i32_127 = arith.constant 7 : i32
    %486 = arith.subi %c7_i32_127, %435 : i32
    %c8_i32_128 = arith.constant 8 : i32
    %487 = arith.muli %485, %c8_i32_128 : i32
    %488 = tpu.assume_multiple %487, 8 : i32
    %489 = arith.index_cast %488 : i32 to index
    %c0_129 = arith.constant 0 : index
    %490 = vector.load %arg18[%489, %c0_129] : memref<64x128xf32, #tpu.memory_space<vmem>>, vector<8x128xf32>
    %491 = arith.truncf %421 : vector<8x32xf32> to vector<8x32xbf16>
    %cst_130 = arith.constant dense<0.000000e+00> : vector<8x128xf32>
    %492 = tpu.matmul %491, %21, %cst_130 {dimension_numbers = #tpu.dot_dimension_numbers<[1], [0], [0], [1], [0, 0, 1, 1], [], []>} : vector<8x32xbf16>, vector<32x128xbf16>, vector<8x128xf32> -> vector<8x128xf32>
    %493 = arith.addf %490, %492 : vector<8x128xf32>
    %494 = vector.extract_strided_slice %493 {offsets = [0, 0], sizes = [8, 32], strides = [1, 1]} : vector<8x128xf32> to vector<8x32xf32>
    %495 = arith.negf %494 : vector<8x32xf32>
    %496 = math.exp %495 : vector<8x32xf32>
    %cst_131 = arith.constant 1.000000e+00 : f32
    %497 = vector.broadcast %cst_131 : f32 to vector<8x32xf32>
    %498 = arith.addf %497, %496 : vector<8x32xf32>
    %499 = arith.divf %497, %498 : vector<8x32xf32>
    %500 = vector.extract_strided_slice %493 {offsets = [0, 32], sizes = [8, 32], strides = [1, 1]} : vector<8x128xf32> to vector<8x32xf32>
    %501 = arith.negf %500 : vector<8x32xf32>
    %502 = math.exp %501 : vector<8x32xf32>
    %cst_132 = arith.constant 1.000000e+00 : f32
    %503 = vector.broadcast %cst_132 : f32 to vector<8x32xf32>
    %504 = arith.addf %503, %502 : vector<8x32xf32>
    %505 = arith.divf %503, %504 : vector<8x32xf32>
    %506 = vector.extract_strided_slice %493 {offsets = [0, 64], sizes = [8, 32], strides = [1, 1]} : vector<8x128xf32> to vector<8x32xf32>
    %507 = math.tanh %506 : vector<8x32xf32>
    %508 = vector.extract_strided_slice %493 {offsets = [0, 96], sizes = [8, 32], strides = [1, 1]} : vector<8x128xf32> to vector<8x32xf32>
    %509 = arith.negf %508 : vector<8x32xf32>
    %510 = math.exp %509 : vector<8x32xf32>
    %cst_133 = arith.constant 1.000000e+00 : f32
    %511 = vector.broadcast %cst_133 : f32 to vector<8x32xf32>
    %512 = arith.addf %511, %510 : vector<8x32xf32>
    %513 = arith.divf %511, %512 : vector<8x32xf32>
    %514 = arith.mulf %505, %424 : vector<8x32xf32>
    %515 = arith.mulf %499, %507 : vector<8x32xf32>
    %516 = arith.addf %514, %515 : vector<8x32xf32>
    %517 = math.tanh %516 : vector<8x32xf32>
    %518 = arith.mulf %513, %517 : vector<8x32xf32>
    %519 = vector.broadcast %486 : i32 to vector<8x1xi32>
    %520 = arith.cmpi slt, %519, %19 : vector<8x1xi32>
    %521 = vector.shape_cast %520 : vector<8x1xi1> to vector<8x1xi1>
    %522 = vector.broadcast %521 : vector<8x1xi1> to vector<8x32xi1>
    %523 = arith.select %522, %518, %421 : vector<8x32xi1>, vector<8x32xf32>
    %524 = vector.shape_cast %520 : vector<8x1xi1> to vector<8x1xi1>
    %525 = vector.broadcast %524 : vector<8x1xi1> to vector<8x32xi1>
    %526 = arith.select %525, %516, %424 : vector<8x32xi1>, vector<8x32xf32>
    %cst_134 = arith.constant 0.000000e+00 : f32
    %527 = vector.shape_cast %520 : vector<8x1xi1> to vector<8x1xi1>
    %528 = vector.broadcast %527 : vector<8x1xi1> to vector<8x32xi1>
    %529 = vector.broadcast %cst_134 : f32 to vector<8x32xf32>
    %530 = arith.select %528, %523, %529 : vector<8x32xi1>, vector<8x32xf32>
    %531 = arith.truncf %530 : vector<8x32xf32> to vector<8x32xbf16>
    %c0_135 = arith.constant 0 : index
    %532 = arith.index_cast %488 : i32 to index
    %c0_136 = arith.constant 0 : index
    %533 = vector.load %arg12[%c0_135, %532, %c0_136] : memref<1x64x32xbf16, #tpu.memory_space<vmem>>, vector<1x8x32xbf16>
    %534 = vector.shape_cast %533 : vector<1x8x32xbf16> to vector<8x32xbf16>
    %535 = vector.shape_cast %531 : vector<8x32xbf16> to vector<1x8x32xbf16>
    tpu.vector_store %arg12[%c0_135, %532, %c0_136], %535 {strides = array<i32>} : memref<1x64x32xbf16, #tpu.memory_space<vmem>>, vector<1x8x32xbf16>,
    %c5_i32 = arith.constant 5 : i32
    %c8_i32_137 = arith.constant 8 : i32
    %536 = arith.muli %arg1, %c8_i32_137 : i32
    %537 = arith.addi %536, %c5_i32 : i32
    %c8_i32_138 = arith.constant 8 : i32
    %538 = arith.muli %c5_i32, %c8_i32_138 : i32
    %539 = tpu.assume_multiple %538, 8 : i32
    %540 = arith.index_cast %539 : i32 to index
    %c0_139 = arith.constant 0 : index
    %541 = vector.load %arg17[%540, %c0_139] : memref<64x128xf32, #tpu.memory_space<vmem>>, vector<8x128xf32>
    %542 = arith.truncf %472 : vector<8x32xf32> to vector<8x32xbf16>
    %cst_140 = arith.constant dense<0.000000e+00> : vector<8x128xf32>
    %543 = tpu.matmul %542, %20, %cst_140 {dimension_numbers = #tpu.dot_dimension_numbers<[1], [0], [0], [1], [0, 0, 1, 1], [], []>} : vector<8x32xbf16>, vector<32x128xbf16>, vector<8x128xf32> -> vector<8x128xf32>
    %544 = arith.addf %541, %543 : vector<8x128xf32>
    %545 = vector.extract_strided_slice %544 {offsets = [0, 0], sizes = [8, 32], strides = [1, 1]} : vector<8x128xf32> to vector<8x32xf32>
    %546 = arith.negf %545 : vector<8x32xf32>
    %547 = math.exp %546 : vector<8x32xf32>
    %cst_141 = arith.constant 1.000000e+00 : f32
    %548 = vector.broadcast %cst_141 : f32 to vector<8x32xf32>
    %549 = arith.addf %548, %547 : vector<8x32xf32>
    %550 = arith.divf %548, %549 : vector<8x32xf32>
    %551 = vector.extract_strided_slice %544 {offsets = [0, 32], sizes = [8, 32], strides = [1, 1]} : vector<8x128xf32> to vector<8x32xf32>
    %552 = arith.negf %551 : vector<8x32xf32>
    %553 = math.exp %552 : vector<8x32xf32>
    %cst_142 = arith.constant 1.000000e+00 : f32
    %554 = vector.broadcast %cst_142 : f32 to vector<8x32xf32>
    %555 = arith.addf %554, %553 : vector<8x32xf32>
    %556 = arith.divf %554, %555 : vector<8x32xf32>
    %557 = vector.extract_strided_slice %544 {offsets = [0, 64], sizes = [8, 32], strides = [1, 1]} : vector<8x128xf32> to vector<8x32xf32>
    %558 = math.tanh %557 : vector<8x32xf32>
    %559 = vector.extract_strided_slice %544 {offsets = [0, 96], sizes = [8, 32], strides = [1, 1]} : vector<8x128xf32> to vector<8x32xf32>
    %560 = arith.negf %559 : vector<8x32xf32>
    %561 = math.exp %560 : vector<8x32xf32>
    %cst_143 = arith.constant 1.000000e+00 : f32
    %562 = vector.broadcast %cst_143 : f32 to vector<8x32xf32>
    %563 = arith.addf %562, %561 : vector<8x32xf32>
    %564 = arith.divf %562, %563 : vector<8x32xf32>
    %565 = arith.mulf %556, %475 : vector<8x32xf32>
    %566 = arith.mulf %550, %558 : vector<8x32xf32>
    %567 = arith.addf %565, %566 : vector<8x32xf32>
    %568 = math.tanh %567 : vector<8x32xf32>
    %569 = arith.mulf %564, %568 : vector<8x32xf32>
    %570 = vector.broadcast %537 : i32 to vector<8x1xi32>
    %571 = arith.cmpi slt, %570, %19 : vector<8x1xi32>
    %572 = vector.shape_cast %571 : vector<8x1xi1> to vector<8x1xi1>
    %573 = vector.broadcast %572 : vector<8x1xi1> to vector<8x32xi1>
    %574 = arith.select %573, %569, %472 : vector<8x32xi1>, vector<8x32xf32>
    %575 = vector.shape_cast %571 : vector<8x1xi1> to vector<8x1xi1>
    %576 = vector.broadcast %575 : vector<8x1xi1> to vector<8x32xi1>
    %577 = arith.select %576, %567, %475 : vector<8x32xi1>, vector<8x32xf32>
    %cst_144 = arith.constant 0.000000e+00 : f32
    %578 = vector.shape_cast %571 : vector<8x1xi1> to vector<8x1xi1>
    %579 = vector.broadcast %578 : vector<8x1xi1> to vector<8x32xi1>
    %580 = vector.broadcast %cst_144 : f32 to vector<8x32xf32>
    %581 = arith.select %579, %574, %580 : vector<8x32xi1>, vector<8x32xf32>
    %582 = arith.truncf %581 : vector<8x32xf32> to vector<8x32xbf16>
    %c0_145 = arith.constant 0 : index
    %583 = arith.index_cast %539 : i32 to index
    %c0_146 = arith.constant 0 : index
    %584 = vector.load %arg11[%c0_145, %583, %c0_146] : memref<1x64x32xbf16, #tpu.memory_space<vmem>>, vector<1x8x32xbf16>
    %585 = vector.shape_cast %584 : vector<1x8x32xbf16> to vector<8x32xbf16>
    %586 = vector.shape_cast %582 : vector<8x32xbf16> to vector<1x8x32xbf16>
    tpu.vector_store %arg11[%c0_145, %583, %c0_146], %586 {strides = array<i32>} : memref<1x64x32xbf16, #tpu.memory_space<vmem>>, vector<1x8x32xbf16>,
    %c7_i32_147 = arith.constant 7 : i32
    %587 = arith.subi %c7_i32_147, %c5_i32 : i32
    %c7_i32_148 = arith.constant 7 : i32
    %588 = arith.subi %c7_i32_148, %537 : i32
    %c8_i32_149 = arith.constant 8 : i32
    %589 = arith.muli %587, %c8_i32_149 : i32
    %590 = tpu.assume_multiple %589, 8 : i32
    %591 = arith.index_cast %590 : i32 to index
    %c0_150 = arith.constant 0 : index
    %592 = vector.load %arg18[%591, %c0_150] : memref<64x128xf32, #tpu.memory_space<vmem>>, vector<8x128xf32>
    %593 = arith.truncf %523 : vector<8x32xf32> to vector<8x32xbf16>
    %cst_151 = arith.constant dense<0.000000e+00> : vector<8x128xf32>
    %594 = tpu.matmul %593, %21, %cst_151 {dimension_numbers = #tpu.dot_dimension_numbers<[1], [0], [0], [1], [0, 0, 1, 1], [], []>} : vector<8x32xbf16>, vector<32x128xbf16>, vector<8x128xf32> -> vector<8x128xf32>
    %595 = arith.addf %592, %594 : vector<8x128xf32>
    %596 = vector.extract_strided_slice %595 {offsets = [0, 0], sizes = [8, 32], strides = [1, 1]} : vector<8x128xf32> to vector<8x32xf32>
    %597 = arith.negf %596 : vector<8x32xf32>
    %598 = math.exp %597 : vector<8x32xf32>
    %cst_152 = arith.constant 1.000000e+00 : f32
    %599 = vector.broadcast %cst_152 : f32 to vector<8x32xf32>
    %600 = arith.addf %599, %598 : vector<8x32xf32>
    %601 = arith.divf %599, %600 : vector<8x32xf32>
    %602 = vector.extract_strided_slice %595 {offsets = [0, 32], sizes = [8, 32], strides = [1, 1]} : vector<8x128xf32> to vector<8x32xf32>
    %603 = arith.negf %602 : vector<8x32xf32>
    %604 = math.exp %603 : vector<8x32xf32>
    %cst_153 = arith.constant 1.000000e+00 : f32
    %605 = vector.broadcast %cst_153 : f32 to vector<8x32xf32>
    %606 = arith.addf %605, %604 : vector<8x32xf32>
    %607 = arith.divf %605, %606 : vector<8x32xf32>
    %608 = vector.extract_strided_slice %595 {offsets = [0, 64], sizes = [8, 32], strides = [1, 1]} : vector<8x128xf32> to vector<8x32xf32>
    %609 = math.tanh %608 : vector<8x32xf32>
    %610 = vector.extract_strided_slice %595 {offsets = [0, 96], sizes = [8, 32], strides = [1, 1]} : vector<8x128xf32> to vector<8x32xf32>
    %611 = arith.negf %610 : vector<8x32xf32>
    %612 = math.exp %611 : vector<8x32xf32>
    %cst_154 = arith.constant 1.000000e+00 : f32
    %613 = vector.broadcast %cst_154 : f32 to vector<8x32xf32>
    %614 = arith.addf %613, %612 : vector<8x32xf32>
    %615 = arith.divf %613, %614 : vector<8x32xf32>
    %616 = arith.mulf %607, %526 : vector<8x32xf32>
    %617 = arith.mulf %601, %609 : vector<8x32xf32>
    %618 = arith.addf %616, %617 : vector<8x32xf32>
    %619 = math.tanh %618 : vector<8x32xf32>
    %620 = arith.mulf %615, %619 : vector<8x32xf32>
    %621 = vector.broadcast %588 : i32 to vector<8x1xi32>
    %622 = arith.cmpi slt, %621, %19 : vector<8x1xi32>
    %623 = vector.shape_cast %622 : vector<8x1xi1> to vector<8x1xi1>
    %624 = vector.broadcast %623 : vector<8x1xi1> to vector<8x32xi1>
    %625 = arith.select %624, %620, %523 : vector<8x32xi1>, vector<8x32xf32>
    %626 = vector.shape_cast %622 : vector<8x1xi1> to vector<8x1xi1>
    %627 = vector.broadcast %626 : vector<8x1xi1> to vector<8x32xi1>
    %628 = arith.select %627, %618, %526 : vector<8x32xi1>, vector<8x32xf32>
    %cst_155 = arith.constant 0.000000e+00 : f32
    %629 = vector.shape_cast %622 : vector<8x1xi1> to vector<8x1xi1>
    %630 = vector.broadcast %629 : vector<8x1xi1> to vector<8x32xi1>
    %631 = vector.broadcast %cst_155 : f32 to vector<8x32xf32>
    %632 = arith.select %630, %625, %631 : vector<8x32xi1>, vector<8x32xf32>
    %633 = arith.truncf %632 : vector<8x32xf32> to vector<8x32xbf16>
    %c0_156 = arith.constant 0 : index
    %634 = arith.index_cast %590 : i32 to index
    %c0_157 = arith.constant 0 : index
    %635 = vector.load %arg12[%c0_156, %634, %c0_157] : memref<1x64x32xbf16, #tpu.memory_space<vmem>>, vector<1x8x32xbf16>
    %636 = vector.shape_cast %635 : vector<1x8x32xbf16> to vector<8x32xbf16>
    %637 = vector.shape_cast %633 : vector<8x32xbf16> to vector<1x8x32xbf16>
    tpu.vector_store %arg12[%c0_156, %634, %c0_157], %637 {strides = array<i32>} : memref<1x64x32xbf16, #tpu.memory_space<vmem>>, vector<1x8x32xbf16>,
    %c6_i32 = arith.constant 6 : i32
    %c8_i32_158 = arith.constant 8 : i32
    %638 = arith.muli %arg1, %c8_i32_158 : i32
    %639 = arith.addi %638, %c6_i32 : i32
    %c8_i32_159 = arith.constant 8 : i32
    %640 = arith.muli %c6_i32, %c8_i32_159 : i32
    %641 = tpu.assume_multiple %640, 8 : i32
    %642 = arith.index_cast %641 : i32 to index
    %c0_160 = arith.constant 0 : index
    %643 = vector.load %arg17[%642, %c0_160] : memref<64x128xf32, #tpu.memory_space<vmem>>, vector<8x128xf32>
    %644 = arith.truncf %574 : vector<8x32xf32> to vector<8x32xbf16>
    %cst_161 = arith.constant dense<0.000000e+00> : vector<8x128xf32>
    %645 = tpu.matmul %644, %20, %cst_161 {dimension_numbers = #tpu.dot_dimension_numbers<[1], [0], [0], [1], [0, 0, 1, 1], [], []>} : vector<8x32xbf16>, vector<32x128xbf16>, vector<8x128xf32> -> vector<8x128xf32>
    %646 = arith.addf %643, %645 : vector<8x128xf32>
    %647 = vector.extract_strided_slice %646 {offsets = [0, 0], sizes = [8, 32], strides = [1, 1]} : vector<8x128xf32> to vector<8x32xf32>
    %648 = arith.negf %647 : vector<8x32xf32>
    %649 = math.exp %648 : vector<8x32xf32>
    %cst_162 = arith.constant 1.000000e+00 : f32
    %650 = vector.broadcast %cst_162 : f32 to vector<8x32xf32>
    %651 = arith.addf %650, %649 : vector<8x32xf32>
    %652 = arith.divf %650, %651 : vector<8x32xf32>
    %653 = vector.extract_strided_slice %646 {offsets = [0, 32], sizes = [8, 32], strides = [1, 1]} : vector<8x128xf32> to vector<8x32xf32>
    %654 = arith.negf %653 : vector<8x32xf32>
    %655 = math.exp %654 : vector<8x32xf32>
    %cst_163 = arith.constant 1.000000e+00 : f32
    %656 = vector.broadcast %cst_163 : f32 to vector<8x32xf32>
    %657 = arith.addf %656, %655 : vector<8x32xf32>
    %658 = arith.divf %656, %657 : vector<8x32xf32>
    %659 = vector.extract_strided_slice %646 {offsets = [0, 64], sizes = [8, 32], strides = [1, 1]} : vector<8x128xf32> to vector<8x32xf32>
    %660 = math.tanh %659 : vector<8x32xf32>
    %661 = vector.extract_strided_slice %646 {offsets = [0, 96], sizes = [8, 32], strides = [1, 1]} : vector<8x128xf32> to vector<8x32xf32>
    %662 = arith.negf %661 : vector<8x32xf32>
    %663 = math.exp %662 : vector<8x32xf32>
    %cst_164 = arith.constant 1.000000e+00 : f32
    %664 = vector.broadcast %cst_164 : f32 to vector<8x32xf32>
    %665 = arith.addf %664, %663 : vector<8x32xf32>
    %666 = arith.divf %664, %665 : vector<8x32xf32>
    %667 = arith.mulf %658, %577 : vector<8x32xf32>
    %668 = arith.mulf %652, %660 : vector<8x32xf32>
    %669 = arith.addf %667, %668 : vector<8x32xf32>
    %670 = math.tanh %669 : vector<8x32xf32>
    %671 = arith.mulf %666, %670 : vector<8x32xf32>
    %672 = vector.broadcast %639 : i32 to vector<8x1xi32>
    %673 = arith.cmpi slt, %672, %19 : vector<8x1xi32>
    %674 = vector.shape_cast %673 : vector<8x1xi1> to vector<8x1xi1>
    %675 = vector.broadcast %674 : vector<8x1xi1> to vector<8x32xi1>
    %676 = arith.select %675, %671, %574 : vector<8x32xi1>, vector<8x32xf32>
    %677 = vector.shape_cast %673 : vector<8x1xi1> to vector<8x1xi1>
    %678 = vector.broadcast %677 : vector<8x1xi1> to vector<8x32xi1>
    %679 = arith.select %678, %669, %577 : vector<8x32xi1>, vector<8x32xf32>
    %cst_165 = arith.constant 0.000000e+00 : f32
    %680 = vector.shape_cast %673 : vector<8x1xi1> to vector<8x1xi1>
    %681 = vector.broadcast %680 : vector<8x1xi1> to vector<8x32xi1>
    %682 = vector.broadcast %cst_165 : f32 to vector<8x32xf32>
    %683 = arith.select %681, %676, %682 : vector<8x32xi1>, vector<8x32xf32>
    %684 = arith.truncf %683 : vector<8x32xf32> to vector<8x32xbf16>
    %c0_166 = arith.constant 0 : index
    %685 = arith.index_cast %641 : i32 to index
    %c0_167 = arith.constant 0 : index
    %686 = vector.load %arg11[%c0_166, %685, %c0_167] : memref<1x64x32xbf16, #tpu.memory_space<vmem>>, vector<1x8x32xbf16>
    %687 = vector.shape_cast %686 : vector<1x8x32xbf16> to vector<8x32xbf16>
    %688 = vector.shape_cast %684 : vector<8x32xbf16> to vector<1x8x32xbf16>
    tpu.vector_store %arg11[%c0_166, %685, %c0_167], %688 {strides = array<i32>} : memref<1x64x32xbf16, #tpu.memory_space<vmem>>, vector<1x8x32xbf16>,
    %c7_i32_168 = arith.constant 7 : i32
    %689 = arith.subi %c7_i32_168, %c6_i32 : i32
    %c7_i32_169 = arith.constant 7 : i32
    %690 = arith.subi %c7_i32_169, %639 : i32
    %c8_i32_170 = arith.constant 8 : i32
    %691 = arith.muli %689, %c8_i32_170 : i32
    %692 = tpu.assume_multiple %691, 8 : i32
    %693 = arith.index_cast %692 : i32 to index
    %c0_171 = arith.constant 0 : index
    %694 = vector.load %arg18[%693, %c0_171] : memref<64x128xf32, #tpu.memory_space<vmem>>, vector<8x128xf32>
    %695 = arith.truncf %625 : vector<8x32xf32> to vector<8x32xbf16>
    %cst_172 = arith.constant dense<0.000000e+00> : vector<8x128xf32>
    %696 = tpu.matmul %695, %21, %cst_172 {dimension_numbers = #tpu.dot_dimension_numbers<[1], [0], [0], [1], [0, 0, 1, 1], [], []>} : vector<8x32xbf16>, vector<32x128xbf16>, vector<8x128xf32> -> vector<8x128xf32>
    %697 = arith.addf %694, %696 : vector<8x128xf32>
    %698 = vector.extract_strided_slice %697 {offsets = [0, 0], sizes = [8, 32], strides = [1, 1]} : vector<8x128xf32> to vector<8x32xf32>
    %699 = arith.negf %698 : vector<8x32xf32>
    %700 = math.exp %699 : vector<8x32xf32>
    %cst_173 = arith.constant 1.000000e+00 : f32
    %701 = vector.broadcast %cst_173 : f32 to vector<8x32xf32>
    %702 = arith.addf %701, %700 : vector<8x32xf32>
    %703 = arith.divf %701, %702 : vector<8x32xf32>
    %704 = vector.extract_strided_slice %697 {offsets = [0, 32], sizes = [8, 32], strides = [1, 1]} : vector<8x128xf32> to vector<8x32xf32>
    %705 = arith.negf %704 : vector<8x32xf32>
    %706 = math.exp %705 : vector<8x32xf32>
    %cst_174 = arith.constant 1.000000e+00 : f32
    %707 = vector.broadcast %cst_174 : f32 to vector<8x32xf32>
    %708 = arith.addf %707, %706 : vector<8x32xf32>
    %709 = arith.divf %707, %708 : vector<8x32xf32>
    %710 = vector.extract_strided_slice %697 {offsets = [0, 64], sizes = [8, 32], strides = [1, 1]} : vector<8x128xf32> to vector<8x32xf32>
    %711 = math.tanh %710 : vector<8x32xf32>
    %712 = vector.extract_strided_slice %697 {offsets = [0, 96], sizes = [8, 32], strides = [1, 1]} : vector<8x128xf32> to vector<8x32xf32>
    %713 = arith.negf %712 : vector<8x32xf32>
    %714 = math.exp %713 : vector<8x32xf32>
    %cst_175 = arith.constant 1.000000e+00 : f32
    %715 = vector.broadcast %cst_175 : f32 to vector<8x32xf32>
    %716 = arith.addf %715, %714 : vector<8x32xf32>
    %717 = arith.divf %715, %716 : vector<8x32xf32>
    %718 = arith.mulf %709, %628 : vector<8x32xf32>
    %719 = arith.mulf %703, %711 : vector<8x32xf32>
    %720 = arith.addf %718, %719 : vector<8x32xf32>
    %721 = math.tanh %720 : vector<8x32xf32>
    %722 = arith.mulf %717, %721 : vector<8x32xf32>
    %723 = vector.broadcast %690 : i32 to vector<8x1xi32>
    %724 = arith.cmpi slt, %723, %19 : vector<8x1xi32>
    %725 = vector.shape_cast %724 : vector<8x1xi1> to vector<8x1xi1>
    %726 = vector.broadcast %725 : vector<8x1xi1> to vector<8x32xi1>
    %727 = arith.select %726, %722, %625 : vector<8x32xi1>, vector<8x32xf32>
    %728 = vector.shape_cast %724 : vector<8x1xi1> to vector<8x1xi1>
    %729 = vector.broadcast %728 : vector<8x1xi1> to vector<8x32xi1>
    %730 = arith.select %729, %720, %628 : vector<8x32xi1>, vector<8x32xf32>
    %cst_176 = arith.constant 0.000000e+00 : f32
    %731 = vector.shape_cast %724 : vector<8x1xi1> to vector<8x1xi1>
    %732 = vector.broadcast %731 : vector<8x1xi1> to vector<8x32xi1>
    %733 = vector.broadcast %cst_176 : f32 to vector<8x32xf32>
    %734 = arith.select %732, %727, %733 : vector<8x32xi1>, vector<8x32xf32>
    %735 = arith.truncf %734 : vector<8x32xf32> to vector<8x32xbf16>
    %c0_177 = arith.constant 0 : index
    %736 = arith.index_cast %692 : i32 to index
    %c0_178 = arith.constant 0 : index
    %737 = vector.load %arg12[%c0_177, %736, %c0_178] : memref<1x64x32xbf16, #tpu.memory_space<vmem>>, vector<1x8x32xbf16>
    %738 = vector.shape_cast %737 : vector<1x8x32xbf16> to vector<8x32xbf16>
    %739 = vector.shape_cast %735 : vector<8x32xbf16> to vector<1x8x32xbf16>
    tpu.vector_store %arg12[%c0_177, %736, %c0_178], %739 {strides = array<i32>} : memref<1x64x32xbf16, #tpu.memory_space<vmem>>, vector<1x8x32xbf16>,
    %c7_i32_179 = arith.constant 7 : i32
    %c8_i32_180 = arith.constant 8 : i32
    %740 = arith.muli %arg1, %c8_i32_180 : i32
    %741 = arith.addi %740, %c7_i32_179 : i32
    %c8_i32_181 = arith.constant 8 : i32
    %742 = arith.muli %c7_i32_179, %c8_i32_181 : i32
    %743 = tpu.assume_multiple %742, 8 : i32
    %744 = arith.index_cast %743 : i32 to index
    %c0_182 = arith.constant 0 : index
    %745 = vector.load %arg17[%744, %c0_182] : memref<64x128xf32, #tpu.memory_space<vmem>>, vector<8x128xf32>
    %746 = arith.truncf %676 : vector<8x32xf32> to vector<8x32xbf16>
    %cst_183 = arith.constant dense<0.000000e+00> : vector<8x128xf32>
    %747 = tpu.matmul %746, %20, %cst_183 {dimension_numbers = #tpu.dot_dimension_numbers<[1], [0], [0], [1], [0, 0, 1, 1], [], []>} : vector<8x32xbf16>, vector<32x128xbf16>, vector<8x128xf32> -> vector<8x128xf32>
    %748 = arith.addf %745, %747 : vector<8x128xf32>
    %749 = vector.extract_strided_slice %748 {offsets = [0, 0], sizes = [8, 32], strides = [1, 1]} : vector<8x128xf32> to vector<8x32xf32>
    %750 = arith.negf %749 : vector<8x32xf32>
    %751 = math.exp %750 : vector<8x32xf32>
    %cst_184 = arith.constant 1.000000e+00 : f32
    %752 = vector.broadcast %cst_184 : f32 to vector<8x32xf32>
    %753 = arith.addf %752, %751 : vector<8x32xf32>
    %754 = arith.divf %752, %753 : vector<8x32xf32>
    %755 = vector.extract_strided_slice %748 {offsets = [0, 32], sizes = [8, 32], strides = [1, 1]} : vector<8x128xf32> to vector<8x32xf32>
    %756 = arith.negf %755 : vector<8x32xf32>
    %757 = math.exp %756 : vector<8x32xf32>
    %cst_185 = arith.constant 1.000000e+00 : f32
    %758 = vector.broadcast %cst_185 : f32 to vector<8x32xf32>
    %759 = arith.addf %758, %757 : vector<8x32xf32>
    %760 = arith.divf %758, %759 : vector<8x32xf32>
    %761 = vector.extract_strided_slice %748 {offsets = [0, 64], sizes = [8, 32], strides = [1, 1]} : vector<8x128xf32> to vector<8x32xf32>
    %762 = math.tanh %761 : vector<8x32xf32>
    %763 = vector.extract_strided_slice %748 {offsets = [0, 96], sizes = [8, 32], strides = [1, 1]} : vector<8x128xf32> to vector<8x32xf32>
    %764 = arith.negf %763 : vector<8x32xf32>
    %765 = math.exp %764 : vector<8x32xf32>
    %cst_186 = arith.constant 1.000000e+00 : f32
    %766 = vector.broadcast %cst_186 : f32 to vector<8x32xf32>
    %767 = arith.addf %766, %765 : vector<8x32xf32>
    %768 = arith.divf %766, %767 : vector<8x32xf32>
    %769 = arith.mulf %760, %679 : vector<8x32xf32>
    %770 = arith.mulf %754, %762 : vector<8x32xf32>
    %771 = arith.addf %769, %770 : vector<8x32xf32>
    %772 = math.tanh %771 : vector<8x32xf32>
    %773 = arith.mulf %768, %772 : vector<8x32xf32>
    %774 = vector.broadcast %741 : i32 to vector<8x1xi32>
    %775 = arith.cmpi slt, %774, %19 : vector<8x1xi32>
    %776 = vector.shape_cast %775 : vector<8x1xi1> to vector<8x1xi1>
    %777 = vector.broadcast %776 : vector<8x1xi1> to vector<8x32xi1>
    %778 = arith.select %777, %773, %676 : vector<8x32xi1>, vector<8x32xf32>
    %779 = vector.shape_cast %775 : vector<8x1xi1> to vector<8x1xi1>
    %780 = vector.broadcast %779 : vector<8x1xi1> to vector<8x32xi1>
    %781 = arith.select %780, %771, %679 : vector<8x32xi1>, vector<8x32xf32>
    %cst_187 = arith.constant 0.000000e+00 : f32
    %782 = vector.shape_cast %775 : vector<8x1xi1> to vector<8x1xi1>
    %783 = vector.broadcast %782 : vector<8x1xi1> to vector<8x32xi1>
    %784 = vector.broadcast %cst_187 : f32 to vector<8x32xf32>
    %785 = arith.select %783, %778, %784 : vector<8x32xi1>, vector<8x32xf32>
    %786 = arith.truncf %785 : vector<8x32xf32> to vector<8x32xbf16>
    %c0_188 = arith.constant 0 : index
    %787 = arith.index_cast %743 : i32 to index
    %c0_189 = arith.constant 0 : index
    %788 = vector.load %arg11[%c0_188, %787, %c0_189] : memref<1x64x32xbf16, #tpu.memory_space<vmem>>, vector<1x8x32xbf16>
    %789 = vector.shape_cast %788 : vector<1x8x32xbf16> to vector<8x32xbf16>
    %790 = vector.shape_cast %786 : vector<8x32xbf16> to vector<1x8x32xbf16>
    tpu.vector_store %arg11[%c0_188, %787, %c0_189], %790 {strides = array<i32>} : memref<1x64x32xbf16, #tpu.memory_space<vmem>>, vector<1x8x32xbf16>,
    %c7_i32_190 = arith.constant 7 : i32
    %791 = arith.subi %c7_i32_190, %c7_i32_179 : i32
    %c7_i32_191 = arith.constant 7 : i32
    %792 = arith.subi %c7_i32_191, %741 : i32
    %c8_i32_192 = arith.constant 8 : i32
    %793 = arith.muli %791, %c8_i32_192 : i32
    %794 = tpu.assume_multiple %793, 8 : i32
    %795 = arith.index_cast %794 : i32 to index
    %c0_193 = arith.constant 0 : index
    %796 = vector.load %arg18[%795, %c0_193] : memref<64x128xf32, #tpu.memory_space<vmem>>, vector<8x128xf32>
    %797 = arith.truncf %727 : vector<8x32xf32> to vector<8x32xbf16>
    %cst_194 = arith.constant dense<0.000000e+00> : vector<8x128xf32>
    %798 = tpu.matmul %797, %21, %cst_194 {dimension_numbers = #tpu.dot_dimension_numbers<[1], [0], [0], [1], [0, 0, 1, 1], [], []>} : vector<8x32xbf16>, vector<32x128xbf16>, vector<8x128xf32> -> vector<8x128xf32>
    %799 = arith.addf %796, %798 : vector<8x128xf32>
    %800 = vector.extract_strided_slice %799 {offsets = [0, 0], sizes = [8, 32], strides = [1, 1]} : vector<8x128xf32> to vector<8x32xf32>
    %801 = arith.negf %800 : vector<8x32xf32>
    %802 = math.exp %801 : vector<8x32xf32>
    %cst_195 = arith.constant 1.000000e+00 : f32
    %803 = vector.broadcast %cst_195 : f32 to vector<8x32xf32>
    %804 = arith.addf %803, %802 : vector<8x32xf32>
    %805 = arith.divf %803, %804 : vector<8x32xf32>
    %806 = vector.extract_strided_slice %799 {offsets = [0, 32], sizes = [8, 32], strides = [1, 1]} : vector<8x128xf32> to vector<8x32xf32>
    %807 = arith.negf %806 : vector<8x32xf32>
    %808 = math.exp %807 : vector<8x32xf32>
    %cst_196 = arith.constant 1.000000e+00 : f32
    %809 = vector.broadcast %cst_196 : f32 to vector<8x32xf32>
    %810 = arith.addf %809, %808 : vector<8x32xf32>
    %811 = arith.divf %809, %810 : vector<8x32xf32>
    %812 = vector.extract_strided_slice %799 {offsets = [0, 64], sizes = [8, 32], strides = [1, 1]} : vector<8x128xf32> to vector<8x32xf32>
    %813 = math.tanh %812 : vector<8x32xf32>
    %814 = vector.extract_strided_slice %799 {offsets = [0, 96], sizes = [8, 32], strides = [1, 1]} : vector<8x128xf32> to vector<8x32xf32>
    %815 = arith.negf %814 : vector<8x32xf32>
    %816 = math.exp %815 : vector<8x32xf32>
    %cst_197 = arith.constant 1.000000e+00 : f32
    %817 = vector.broadcast %cst_197 : f32 to vector<8x32xf32>
    %818 = arith.addf %817, %816 : vector<8x32xf32>
    %819 = arith.divf %817, %818 : vector<8x32xf32>
    %820 = arith.mulf %811, %730 : vector<8x32xf32>
    %821 = arith.mulf %805, %813 : vector<8x32xf32>
    %822 = arith.addf %820, %821 : vector<8x32xf32>
    %823 = math.tanh %822 : vector<8x32xf32>
    %824 = arith.mulf %819, %823 : vector<8x32xf32>
    %825 = vector.broadcast %792 : i32 to vector<8x1xi32>
    %826 = arith.cmpi slt, %825, %19 : vector<8x1xi32>
    %827 = vector.shape_cast %826 : vector<8x1xi1> to vector<8x1xi1>
    %828 = vector.broadcast %827 : vector<8x1xi1> to vector<8x32xi1>
    %829 = arith.select %828, %824, %727 : vector<8x32xi1>, vector<8x32xf32>
    %830 = vector.shape_cast %826 : vector<8x1xi1> to vector<8x1xi1>
    %831 = vector.broadcast %830 : vector<8x1xi1> to vector<8x32xi1>
    %832 = arith.select %831, %822, %730 : vector<8x32xi1>, vector<8x32xf32>
    %cst_198 = arith.constant 0.000000e+00 : f32
    %833 = vector.shape_cast %826 : vector<8x1xi1> to vector<8x1xi1>
    %834 = vector.broadcast %833 : vector<8x1xi1> to vector<8x32xi1>
    %835 = vector.broadcast %cst_198 : f32 to vector<8x32xf32>
    %836 = arith.select %834, %829, %835 : vector<8x32xi1>, vector<8x32xf32>
    %837 = arith.truncf %836 : vector<8x32xf32> to vector<8x32xbf16>
    %c0_199 = arith.constant 0 : index
    %838 = arith.index_cast %794 : i32 to index
    %c0_200 = arith.constant 0 : index
    %839 = vector.load %arg12[%c0_199, %838, %c0_200] : memref<1x64x32xbf16, #tpu.memory_space<vmem>>, vector<1x8x32xbf16>
    %840 = vector.shape_cast %839 : vector<1x8x32xbf16> to vector<8x32xbf16>
    %841 = vector.shape_cast %837 : vector<8x32xbf16> to vector<1x8x32xbf16>
    tpu.vector_store %arg12[%c0_199, %838, %c0_200], %841 {strides = array<i32>} : memref<1x64x32xbf16, #tpu.memory_space<vmem>>, vector<1x8x32xbf16>,
    %c8_i32_201 = arith.constant 8 : i32
    %c0_202 = arith.constant 0 : index
    %c0_203 = arith.constant 0 : index
    %842 = vector.load %arg13[%c0_202, %c0_203] : memref<8x32xf32, #tpu.memory_space<vmem>>, vector<8x32xf32>
    tpu.vector_store %arg13[%c0_202, %c0_203], %778 {strides = array<i32>} : memref<8x32xf32, #tpu.memory_space<vmem>>, vector<8x32xf32>,
    %c0_204 = arith.constant 0 : index
    %c0_205 = arith.constant 0 : index
    %843 = vector.load %arg14[%c0_204, %c0_205] : memref<8x32xf32, #tpu.memory_space<vmem>>, vector<8x32xf32>
    tpu.vector_store %arg14[%c0_204, %c0_205], %781 {strides = array<i32>} : memref<8x32xf32, #tpu.memory_space<vmem>>, vector<8x32xf32>,
    %c0_206 = arith.constant 0 : index
    %c0_207 = arith.constant 0 : index
    %844 = vector.load %arg15[%c0_206, %c0_207] : memref<8x32xf32, #tpu.memory_space<vmem>>, vector<8x32xf32>
    tpu.vector_store %arg15[%c0_206, %c0_207], %829 {strides = array<i32>} : memref<8x32xf32, #tpu.memory_space<vmem>>, vector<8x32xf32>,
    %c0_208 = arith.constant 0 : index
    %c0_209 = arith.constant 0 : index
    %845 = vector.load %arg16[%c0_208, %c0_209] : memref<8x32xf32, #tpu.memory_space<vmem>>, vector<8x32xf32>
    tpu.vector_store %arg16[%c0_208, %c0_209], %832 {strides = array<i32>} : memref<8x32xf32, #tpu.memory_space<vmem>>, vector<8x32xf32>,
    return
  }
  func.func @transform_0(%arg0: i32, %arg1: i32) -> (i32, i32) {
    %c0_i32 = arith.constant 0 : i32
    %c0_i32_0 = arith.constant 0 : i32
    return %arg0, %c0_i32 : i32, i32
  }
  func.func @transform_1(%arg0: i32, %arg1: i32) -> (i32, i32, i32) {
    %c0_i32 = arith.constant 0 : i32
    %c0_i32_0 = arith.constant 0 : i32
    return %arg0, %arg1, %c0_i32 : i32, i32, i32
  }
  func.func @transform_2(%arg0: i32, %arg1: i32) -> (i32, i32, i32) {
    %c0_i32 = arith.constant 0 : i32
    %0 = arith.subi %c0_i32, %arg1 : i32
    %c0_i32_0 = arith.constant 0 : i32
    %c0_i32_1 = arith.constant 0 : i32
    return %arg0, %0, %c0_i32_0 : i32, i32, i32
  }
  func.func @transform_3(%arg0: i32, %arg1: i32) -> (i32, i32) {
    %c0_i32 = arith.constant 0 : i32
    %c0_i32_0 = arith.constant 0 : i32
    %c0_i32_1 = arith.constant 0 : i32
    return %c0_i32, %c0_i32_0 : i32, i32
  }
  func.func @transform_4(%arg0: i32, %arg1: i32) -> (i32, i32) {
    %c0_i32 = arith.constant 0 : i32
    %c0_i32_0 = arith.constant 0 : i32
    %c0_i32_1 = arith.constant 0 : i32
    return %c0_i32, %c0_i32_0 : i32, i32
  }
  func.func @transform_5(%arg0: i32, %arg1: i32) -> (i32, i32) {
    %c0_i32 = arith.constant 0 : i32
    %c0_i32_0 = arith.constant 0 : i32
    %c0_i32_1 = arith.constant 0 : i32
    return %c0_i32, %c0_i32_0 : i32, i32
  }
  func.func @transform_6(%arg0: i32, %arg1: i32) -> (i32, i32) {
    %c0_i32 = arith.constant 0 : i32
    %c0_i32_0 = arith.constant 0 : i32
    %c0_i32_1 = arith.constant 0 : i32
    return %c0_i32, %c0_i32_0 : i32, i32
  }
  func.func @transform_7(%arg0: i32, %arg1: i32) -> (i32, i32) {
    %c0_i32 = arith.constant 0 : i32
    %c0_i32_0 = arith.constant 0 : i32
    %c0_i32_1 = arith.constant 0 : i32
    return %c0_i32, %c0_i32_0 : i32, i32
  }
  func.func @transform_8(%arg0: i32, %arg1: i32) -> (i32, i32) {
    %c0_i32 = arith.constant 0 : i32
    %c0_i32_0 = arith.constant 0 : i32
    %c0_i32_1 = arith.constant 0 : i32
    return %c0_i32, %c0_i32_0 : i32, i32
  }
  func.func @transform_9(%arg0: i32, %arg1: i32) -> (i32, i32, i32) {
    %c0_i32 = arith.constant 0 : i32
    %c0_i32_0 = arith.constant 0 : i32
    return %arg0, %arg1, %c0_i32 : i32, i32, i32
  }
  func.func @transform_10(%arg0: i32, %arg1: i32) -> (i32, i32, i32) {
    %c0_i32 = arith.constant 0 : i32
    %0 = arith.subi %c0_i32, %arg1 : i32
    %c0_i32_0 = arith.constant 0 : i32
    %c0_i32_1 = arith.constant 0 : i32
    return %arg0, %0, %c0_i32_0 : i32, i32, i32
  }
}

</mosaic_0001>

<llo_original>
// kernel: tpu_custom_call.1
$region0: #{tpu_custom_call.1}
  #allocation0 [shape = 'u32[]', space=smem, size = 0x4, offset = 0x4, fixed_abs, tag = 'smem constant byte address 0x4 - core index']
  #allocation1 [shape = 'u32[144,128]{1,0:T(1,128)}', space=vmem, size = 0x12000, scoped, tag = 'internal scratch']
  #allocation2 [shape = 'f32[8,32]{1,0:T(8,128)}', space=vmem, size = 0x1000, scoped, tag = 'scratch operand']
  #allocation3 [shape = 'f32[8,32]{1,0:T(8,128)}', space=vmem, size = 0x1000, scoped, tag = 'scratch operand']
  #allocation4 [shape = 'f32[8,32]{1,0:T(8,128)}', space=vmem, size = 0x1000, scoped, tag = 'scratch operand']
  #allocation5 [shape = 'f32[8,32]{1,0:T(8,128)}', space=vmem, size = 0x1000, scoped, tag = 'scratch operand']
  #allocation6 [shape = 'f32[64,128]{1,0:T(8,128)}', space=vmem, size = 0x8000, scoped, tag = 'scratch operand']
  #allocation7 [shape = 'f32[64,128]{1,0:T(8,128)}', space=vmem, size = 0x8000, scoped, tag = 'scratch operand']
  %s0 = inlined_call_operand.vmem [shape: s32[8,1], index: 0, kind: input, shape index: {}]
  %s1 = inlined_call_operand.vmem [shape: bf16[1,64,16], index: 1, kind: input, shape index: {}]
  %s2 = inlined_call_operand.vmem [shape: bf16[1,64,16], index: 2, kind: input, shape index: {}]
  %s3 = inlined_call_operand.vmem [shape: bf16[16,128], index: 3, kind: input, shape index: {}]
  %s4 = inlined_call_operand.vmem [shape: bf16[16,128], index: 4, kind: input, shape index: {}]
  %s5 = inlined_call_operand.vmem [shape: f32[1,128], index: 5, kind: input, shape index: {}]
  %s6 = inlined_call_operand.vmem [shape: f32[1,128], index: 6, kind: input, shape index: {}]
  %s7 = inlined_call_operand.vmem [shape: bf16[32,128], index: 7, kind: input, shape index: {}]
  %s8 = inlined_call_operand.vmem [shape: bf16[32,128], index: 8, kind: input, shape index: {}]
  %s9 = inlined_call_operand.vmem [shape: bf16[1,64,32], index: 9, kind: output, shape index: {0}]
  %s10 = inlined_call_operand.vmem [shape: bf16[1,64,32], index: 10, kind: output, shape index: {1}]
  %11 = xla_tuple %s9, %s10
  %s12 = sld [smem:[#allocation0]]
  $region58: #{tpu_custom_call.1} parent=0
    _
  %s14 = ssub.s32 1, %s12
  %s15 = scalar_select 0, %s14, %s12
  // Predicated region
  $region2: #{tpu_custom_call.1} parent=0 // pred_check
    _
  $region3: #{tpu_custom_call.1} parent=0 // pred_check_branch
    %17 = sbr.rel (0) target = $region5
  $region4: #{tpu_custom_call.1} parent=0 // pred_region
    _
  $region5: #{tpu_custom_call.1} parent=0 // pred_fallthru
    _
  // Predicated region
  $region6: #{tpu_custom_call.1} parent=0 // pred_check
    _
  $region7: #{tpu_custom_call.1} parent=0 // pred_check_branch
    %19 = sbr.rel (0) target = $region9
  $region8: #{tpu_custom_call.1} parent=0 // pred_region
    _
  $region9: #{tpu_custom_call.1} parent=0 // pred_fallthru
    _
  // Predicated region
  $region10: #{tpu_custom_call.1} parent=0 // pred_check
    _
  $region11: #{tpu_custom_call.1} parent=0 // pred_check_branch
    %21 = sbr.rel (0) target = $region13
  $region12: #{tpu_custom_call.1} parent=0 // pred_region
    %s22 = ssub.s32 0, 0
    %s23 = smul.u32 8, %s22
    %p24 = scmp.lt.s32.totalorder %s23, 7
    %s25 = scalar_select %p24, %s23, 7
    %s26 = smul.addr %s25, 4
    %s27 = scalar_lea.vmem %s2, %s26
    %s28 = ssub.s32 0, 0
    %s29 = smul.u32 8, %s28
  $region13: #{tpu_custom_call.1} parent=0 // pred_fallthru
    _
  // Predicated region
  $region14: #{tpu_custom_call.1} parent=0 // pred_check
    _
  $region15: #{tpu_custom_call.1} parent=0 // pred_check_branch
    %31 = sbr.rel (0) target = $region17
  $region16: #{tpu_custom_call.1} parent=0 // pred_region
    _
  $region17: #{tpu_custom_call.1} parent=0 // pred_fallthru
    _
  // Predicated region
  $region18: #{tpu_custom_call.1} parent=0 // pred_check
    _
  $region19: #{tpu_custom_call.1} parent=0 // pred_check_branch
    %33 = sbr.rel (0) target = $region21
  $region20: #{tpu_custom_call.1} parent=0 // pred_region
    _
  $region21: #{tpu_custom_call.1} parent=0 // pred_fallthru
    _
  // Predicated region
  $region22: #{tpu_custom_call.1} parent=0 // pred_check
    _
  $region23: #{tpu_custom_call.1} parent=0 // pred_check_branch
    %35 = sbr.rel (0) target = $region25
  $region24: #{tpu_custom_call.1} parent=0 // pred_region
    _
  $region25: #{tpu_custom_call.1} parent=0 // pred_fallthru
    _
  // Predicated region
  $region26: #{tpu_custom_call.1} parent=0 // pred_check
    _
  $region27: #{tpu_custom_call.1} parent=0 // pred_check_branch
    %37 = sbr.rel (0) target = $region29
  $region28: #{tpu_custom_call.1} parent=0 // pred_region
    _
  $region29: #{tpu_custom_call.1} parent=0 // pred_fallthru
    _
  // Predicated region
  $region30: #{tpu_custom_call.1} parent=0 // pred_check
    _
  $region31: #{tpu_custom_call.1} parent=0 // pred_check_branch
    %39 = sbr.rel (0) target = $region33
  $region32: #{tpu_custom_call.1} parent=0 // pred_region
    _
  $region33: #{tpu_custom_call.1} parent=0 // pred_fallthru
    _
  // Predicated region
  $region34: #{tpu_custom_call.1} parent=0 // pred_check
    _
  $region35: #{tpu_custom_call.1} parent=0 // pred_check_branch
    %41 = sbr.rel (0) target = $region37
  $region36: #{tpu_custom_call.1} parent=0 // pred_region
    _
  $region37: #{tpu_custom_call.1} parent=0 // pred_fallthru
    _
  %s42 = ssub.s32 0, 0
  %s43 = smul.u32 8, %s42
  %p44 = scmp.lt.s32.totalorder %s43, 7
  %s45 = scalar_select %p44, %s43, 7
  %s46 = smul.addr %s45, 4
  %s47 = scalar_lea.vmem %s2, %s46
  %s48 = ssub.s32 0, 0
  %s49 = smul.u32 8, %s48
  %p50 = scmp.lt.s32.totalorder %s49, 7
  %s51 = scalar_select %p50, %s49, 7
  %s52 = smul.addr %s51, 4
  %s53 = scalar_lea.vmem %s10, %s52
  %s54 = ssub.s32 0, 0
  %s55 = smul.u32 8, %s54
  %p56 = scmp.lt.s32.totalorder %s55, 7
  %s57 = scalar_select %p56, %s55, 7
  %s58 = smul.addr %s57, 4
  %s59 = scalar_lea.vmem %s2, %s58
  %s60 = ssub.s32 0, 0
  %s61 = smul.u32 8, %s60
  %s62 = ssub.s32 0, 0
  %s63 = smul.u32 8, %s62
  %p64 = scmp.lt.s32.totalorder %s63, 7
  %s65 = scalar_select %p64, %s63, 7
  %s66 = smul.addr %s65, 4
  %s67 = scalar_lea.vmem %s10, %s66
  %s68 = ssub.s32 0, 0
  %s69 = smul.u32 8, %s68
  %p71 = scmp.eq.s32.totalorder 0, 0
  // Predicated region
  $region38: #{tpu_custom_call.1} parent=0 // pred_check
    %p72 = pneg %p71
  $region39: #{tpu_custom_call.1} parent=0 // pred_check_branch
    %74 = sbr.rel (%p72) target = $region41
  $region40: #{tpu_custom_call.1} parent=0 // pred_region
    %vm75 = vcmask 261120
    %76 = vst.msk [vmem:[#allocation2] sm:$0xff] %vm75, 0.0
    %77 = vst.msk [vmem:[#allocation3] sm:$0xff] %vm75, 0.0
    %78 = vst.msk [vmem:[#allocation4] sm:$0xff] %vm75, 0.0
    %79 = vst.msk [vmem:[#allocation5] sm:$0xff] %vm75, 0.0
  $region41: #{tpu_custom_call.1} parent=0 // pred_fallthru
    _
  %v80 = vld [vmem:[%s1] sm:$0xf]
  %v81 = vld [vmem:[%s1 + $0x4] sm:$0xf]
  %v82 = vld [vmem:[%s1 + $0x8] sm:$0xf]
  %v83 = vld [vmem:[%s1 + $0xc] sm:$0xf]
  %v84 = vld [vmem:[%s1 + $0x10] sm:$0xf]
  %v85 = vld [vmem:[%s1 + $0x14] sm:$0xf]
  %v86 = vld [vmem:[%s1 + $0x18] sm:$0xf]
  %v87 = vld [vmem:[%s1 + $0x1c] sm:$0xf]
  %v88 = vld [vmem:[%s3] sm:$0xf]
  %v89 = vld [vmem:[%s3 + $0x4] sm:$0xf]
  %v90 = vld [vmem:[%s5] sm:$0x1]
  %v92 = vlaneseq
  %v93 = vshrl.u32 %v92, 7
  %v94 = vsub.s32 0, %v93
  %v95 = vrot.slane %v90, %v94
  %v105 = vunpack.c.l.b16 %v80
  %v106 = vunpack.c.l.b16 %v81
  %v107 = vunpack.c.l.b16 %v82
  %v108 = vunpack.c.l.b16 %v83
  %v109 = vunpack.c.l.b16 %v84
  %v110 = vunpack.c.l.b16 %v85
  %v111 = vunpack.c.l.b16 %v86
  %v112 = vunpack.c.l.b16 %v87
  %v113 = vpack.c.b16 %v106, %v105
  %v114 = vpack.c.b16 %v108, %v107
  %v115 = vpack.c.b16 %v110, %v109
  %v116 = vpack.c.b16 %v112, %v111
  %v119 = vunpack.c.l.b16 %v88
  %v120 = vunpack.c.l.b16 %v89
  %v121 = vpack.c.b16 %v120, %v119
  %vm123 = vcmask 130048
  %v125 = vsel %vm123, %v113, 0
  %v128 = vsel %vm123, %v114, 0
  %v131 = vsel %vm123, %v115, 0
  %v134 = vsel %vm123, %v116, 0
  %136 = vmatprep.subr.bf16.mxu0 0
  %137 = vmatpush1.bf16.msra.mxu0 %v121
  %138 = vmatprep.subr.bf16.mxu0 0
  %139 = vmatpush1.bf16.msra.mxu0 0
  %140 = vmatprep.subr.bf16.mxu0 0
  %141 = vmatpush1.bf16.msra.mxu0 0
  %142 = vmatprep.subr.bf16.mxu0 0
  %143 = vmatpush1.bf16.msra.mxu0 0
  %144 = vmatprep.subr.bf16.mxu0 0
  %145 = vmatpush1.bf16.msra.mxu0 0
  %146 = vmatprep.subr.bf16.mxu0 0
  %147 = vmatpush1.bf16.msra.mxu0 0
  %148 = vmatprep.subr.bf16.mxu0 0
  %149 = vmatpush1.bf16.msra.mxu0 0
  %150 = vmatprep.subr.bf16.mxu0 0
  %151 = vmatpush1.bf16.msra.mxu0 0
  %152 = vmatprep.subr.bf16.mxu0 0
  %153 = vmatpush1.bf16.msra.mxu0 0
  %154 = vmatprep.subr.bf16.mxu0 0
  %155 = vmatpush1.bf16.msra.mxu0 0
  %156 = vmatprep.subr.bf16.mxu0 0
  %157 = vmatpush1.bf16.msra.mxu0 0
  %158 = vmatprep.subr.bf16.mxu0 0
  %159 = vmatpush1.bf16.msra.mxu0 0
  %160 = vmatprep.subr.bf16.mxu0 0
  %161 = vmatpush1.bf16.msra.mxu0 0
  %162 = vmatprep.subr.bf16.mxu0 0
  %163 = vmatpush1.bf16.msra.mxu0 0
  %164 = vmatprep.subr.bf16.mxu0 0
  %165 = vmatpush1.bf16.msra.mxu0 0
  %166 = vmatprep.subr.bf16.mxu0 0
  %167 = vmatpush1.bf16.msra.mxu0 0
  %168 = vmatprep.mubr.bf16.mxu0 0
  %169 = vmatmul.mubr.bf16.gmra.mrb[0].mxu0 %v125
  %v170 = vpop.f32.mrb[0].mxu0
  %v171 = vadd.f32 %v95, %v170
  %v172 = vpop.f32.mrb[0].mxu0
  %v173 = vpop.f32.mrb[0].mxu0
  %v174 = vadd.f32 %v95, %v173
  %v175 = vpop.f32.mrb[0].mxu0
  %176 = vmatprep.mubr.bf16.mxu0 0
  %177 = vmatmul.mubr.bf16.gmra.mrb[0].mxu0 %v128
  %v178 = vpop.f32.mrb[0].mxu0
  %v179 = vadd.f32 %v95, %v178
  %v180 = vpop.f32.mrb[0].mxu0
  %v181 = vpop.f32.mrb[0].mxu0
  %v182 = vadd.f32 %v95, %v181
  %v183 = vpop.f32.mrb[0].mxu0
  %184 = vmatprep.mubr.bf16.mxu0 0
  %185 = vmatmul.mubr.bf16.gmra.mrb[0].mxu0 %v131
  %v186 = vpop.f32.mrb[0].mxu0
  %v187 = vadd.f32 %v95, %v186
  %v188 = vpop.f32.mrb[0].mxu0
  %v189 = vpop.f32.mrb[0].mxu0
  %v190 = vadd.f32 %v95, %v189
  %v191 = vpop.f32.mrb[0].mxu0
  %192 = vmatprep.mubr.bf16.mxu0 0
  %193 = vmatmul.mubr.bf16.gmra.mrb[0].mxu0 %v134
  %v194 = vpop.f32.mrb[0].mxu0
  %v195 = vadd.f32 %v95, %v194
  %v196 = vpop.f32.mrb[0].mxu0
  %v197 = vpop.f32.mrb[0].mxu0
  %v198 = vadd.f32 %v95, %v197
  %v199 = vpop.f32.mrb[0].mxu0
  %200 = vdwg.mxu0
  %201 = vst [vmem:[#allocation6] sm:$0xff] %v171
  %202 = vst [vmem:[#allocation6 + $0x8] sm:$0xff] %v174
  %203 = vst [vmem:[#allocation6 + $0x10] sm:$0xff] %v179
  %204 = vst [vmem:[#allocation6 + $0x18] sm:$0xff] %v182
  %205 = vst [vmem:[#allocation6 + $0x20] sm:$0xff] %v187
  %206 = vst [vmem:[#allocation6 + $0x28] sm:$0xff] %v190
  %207 = vst [vmem:[#allocation6 + $0x30] sm:$0xff] %v195
  %208 = vst [vmem:[#allocation6 + $0x38] sm:$0xff] %v198
  %v209 = vld [vmem:[%s59] sm:$0xf]
  %v210 = vld [vmem:[%s59 + $0x4] sm:$0xf]
  %v211 = vld [vmem:[%s59 + $0x8] sm:$0xf]
  %v212 = vld [vmem:[%s59 + $0xc] sm:$0xf]
  %v213 = vld [vmem:[%s59 + $0x10] sm:$0xf]
  %v214 = vld [vmem:[%s59 + $0x14] sm:$0xf]
  %v215 = vld [vmem:[%s59 + $0x18] sm:$0xf]
  %v216 = vld [vmem:[%s59 + $0x1c] sm:$0xf]
  %v217 = vld [vmem:[%s4] sm:$0xf]
  %v218 = vld [vmem:[%s4 + $0x4] sm:$0xf]
  %v219 = vld [vmem:[%s6] sm:$0x1]
  %v221 = vlaneseq
  %v222 = vshrl.u32 %v221, 7
  %v223 = vsub.s32 0, %v222
  %v224 = vrot.slane %v219, %v223
  %v234 = vunpack.c.l.b16 %v209
  %v235 = vunpack.c.l.b16 %v210
  %v236 = vunpack.c.l.b16 %v211
  %v237 = vunpack.c.l.b16 %v212
  %v238 = vunpack.c.l.b16 %v213
  %v239 = vunpack.c.l.b16 %v214
  %v240 = vunpack.c.l.b16 %v215
  %v241 = vunpack.c.l.b16 %v216
  %v242 = vpack.c.b16 %v235, %v234
  %v243 = vpack.c.b16 %v237, %v236
  %v244 = vpack.c.b16 %v239, %v238
  %v245 = vpack.c.b16 %v241, %v240
  %v248 = vunpack.c.l.b16 %v217
  %v249 = vunpack.c.l.b16 %v218
  %v250 = vpack.c.b16 %v249, %v248
  %v253 = vsel %vm123, %v242, 0
  %v256 = vsel %vm123, %v243, 0
  %v259 = vsel %vm123, %v244, 0
  %v262 = vsel %vm123, %v245, 0
  %264 = vmatprep.subr.bf16.mxu0 0
  %265 = vmatpush1.bf16.msra.mxu0 %v250
  %266 = vmatprep.subr.bf16.mxu0 0
  %267 = vmatpush1.bf16.msra.mxu0 0
  %268 = vmatprep.subr.bf16.mxu0 0
  %269 = vmatpush1.bf16.msra.mxu0 0
  %270 = vmatprep.subr.bf16.mxu0 0
  %271 = vmatpush1.bf16.msra.mxu0 0
  %272 = vmatprep.subr.bf16.mxu0 0
  %273 = vmatpush1.bf16.msra.mxu0 0
  %274 = vmatprep.subr.bf16.mxu0 0
  %275 = vmatpush1.bf16.msra.mxu0 0
  %276 = vmatprep.subr.bf16.mxu0 0
  %277 = vmatpush1.bf16.msra.mxu0 0
  %278 = vmatprep.subr.bf16.mxu0 0
  %279 = vmatpush1.bf16.msra.mxu0 0
  %280 = vmatprep.subr.bf16.mxu0 0
  %281 = vmatpush1.bf16.msra.mxu0 0
  %282 = vmatprep.subr.bf16.mxu0 0
  %283 = vmatpush1.bf16.msra.mxu0 0
  %284 = vmatprep.subr.bf16.mxu0 0
  %285 = vmatpush1.bf16.msra.mxu0 0
  %286 = vmatprep.subr.bf16.mxu0 0
  %287 = vmatpush1.bf16.msra.mxu0 0
  %288 = vmatprep.subr.bf16.mxu0 0
  %289 = vmatpush1.bf16.msra.mxu0 0
  %290 = vmatprep.subr.bf16.mxu0 0
  %291 = vmatpush1.bf16.msra.mxu0 0
  %292 = vmatprep.subr.bf16.mxu0 0
  %293 = vmatpush1.bf16.msra.mxu0 0
  %294 = vmatprep.subr.bf16.mxu0 0
  %295 = vmatpush1.bf16.msra.mxu0 0
  %296 = vmatprep.mubr.bf16.mxu0 0
  %297 = vmatmul.mubr.bf16.gmra.mrb[0].mxu0 %v253
  %v298 = vpop.f32.mrb[0].mxu0
  %v299 = vadd.f32 %v224, %v298
  %v300 = vpop.f32.mrb[0].mxu0
  %v301 = vpop.f32.mrb[0].mxu0
  %v302 = vadd.f32 %v224, %v301
  %v303 = vpop.f32.mrb[0].mxu0
  %304 = vmatprep.mubr.bf16.mxu0 0
  %305 = vmatmul.mubr.bf16.gmra.mrb[0].mxu0 %v256
  %v306 = vpop.f32.mrb[0].mxu0
  %v307 = vadd.f32 %v224, %v306
  %v308 = vpop.f32.mrb[0].mxu0
  %v309 = vpop.f32.mrb[0].mxu0
  %v310 = vadd.f32 %v224, %v309
  %v311 = vpop.f32.mrb[0].mxu0
  %312 = vmatprep.mubr.bf16.mxu0 0
  %313 = vmatmul.mubr.bf16.gmra.mrb[0].mxu0 %v259
  %v314 = vpop.f32.mrb[0].mxu0
  %v315 = vadd.f32 %v224, %v314
  %v316 = vpop.f32.mrb[0].mxu0
  %v317 = vpop.f32.mrb[0].mxu0
  %v318 = vadd.f32 %v224, %v317
  %v319 = vpop.f32.mrb[0].mxu0
  %320 = vmatprep.mubr.bf16.mxu0 0
  %321 = vmatmul.mubr.bf16.gmra.mrb[0].mxu0 %v262
  %v322 = vpop.f32.mrb[0].mxu0
  %v323 = vadd.f32 %v224, %v322
  %v324 = vpop.f32.mrb[0].mxu0
  %v325 = vpop.f32.mrb[0].mxu0
  %v326 = vadd.f32 %v224, %v325
  %v327 = vpop.f32.mrb[0].mxu0
  %328 = vdwg.mxu0
  %329 = vst [vmem:[#allocation7] sm:$0xff] %v299
  %330 = vst [vmem:[#allocation7 + $0x8] sm:$0xff] %v302
  %331 = vst [vmem:[#allocation7 + $0x10] sm:$0xff] %v307
  %332 = vst [vmem:[#allocation7 + $0x18] sm:$0xff] %v310
  %333 = vst [vmem:[#allocation7 + $0x20] sm:$0xff] %v315
  %334 = vst [vmem:[#allocation7 + $0x28] sm:$0xff] %v318
  %335 = vst [vmem:[#allocation7 + $0x30] sm:$0xff] %v323
  %336 = vst [vmem:[#allocation7 + $0x38] sm:$0xff] %v326
  %v337 = vld [vmem:[%s0] sm:$0xff]
  %v338 = vld [vmem:[%s7] sm:$0xf]
  %v339 = vld [vmem:[%s7 + $0x4] sm:$0xf]
  %v340 = vld [vmem:[%s7 + $0x8] sm:$0xf]
  %v341 = vld [vmem:[%s7 + $0xc] sm:$0xf]
  %v342 = vld [vmem:[%s8] sm:$0xf]
  %v343 = vld [vmem:[%s8 + $0x4] sm:$0xf]
  %v344 = vld [vmem:[%s8 + $0x8] sm:$0xf]
  %v345 = vld [vmem:[%s8 + $0xc] sm:$0xf]
  %v346 = vld [vmem:[#allocation2] sm:$0xff]
  %v347 = vld [vmem:[#allocation3] sm:$0xff]
  %v348 = vld [vmem:[#allocation4] sm:$0xff]
  %v349 = vld [vmem:[#allocation5] sm:$0xff]
  %s350 = smul.u32 0, 8
  %v351 = vld [vmem:[#allocation6] sm:$0xff]
  %v352 = vpack.c.bf16 %v346, %v346
  %v357 = vunpack.c.l.b16 %v338
  %v358 = vunpack.c.l.b16 %v339
  %v359 = vunpack.c.l.b16 %v340
  %v360 = vunpack.c.l.b16 %v341
  %v361 = vpack.c.b16 %v358, %v357
  %v362 = vpack.c.b16 %v360, %v359
  %vm365 = vcmask 261120
  %v367 = vsel %vm365, %v352, 0
  %369 = vmatprep.subr.bf16.mxu0 0
  %370 = vmatpush1.bf16.msra.mxu0 %v361
  %371 = vmatprep.subr.bf16.mxu0 0
  %372 = vmatpush1.bf16.msra.mxu0 %v362
  %373 = vmatprep.subr.bf16.mxu0 0
  %374 = vmatpush1.bf16.msra.mxu0 0
  %375 = vmatprep.subr.bf16.mxu0 0
  %376 = vmatpush1.bf16.msra.mxu0 0
  %377 = vmatprep.subr.bf16.mxu0 0
  %378 = vmatpush1.bf16.msra.mxu0 0
  %379 = vmatprep.subr.bf16.mxu0 0
  %380 = vmatpush1.bf16.msra.mxu0 0
  %381 = vmatprep.subr.bf16.mxu0 0
  %382 = vmatpush1.bf16.msra.mxu0 0
  %383 = vmatprep.subr.bf16.mxu0 0
  %384 = vmatpush1.bf16.msra.mxu0 0
  %385 = vmatprep.subr.bf16.mxu0 0
  %386 = vmatpush1.bf16.msra.mxu0 0
  %387 = vmatprep.subr.bf16.mxu0 0
  %388 = vmatpush1.bf16.msra.mxu0 0
  %389 = vmatprep.subr.bf16.mxu0 0
  %390 = vmatpush1.bf16.msra.mxu0 0
  %391 = vmatprep.subr.bf16.mxu0 0
  %392 = vmatpush1.bf16.msra.mxu0 0
  %393 = vmatprep.subr.bf16.mxu0 0
  %394 = vmatpush1.bf16.msra.mxu0 0
  %395 = vmatprep.subr.bf16.mxu0 0
  %396 = vmatpush1.bf16.msra.mxu0 0
  %397 = vmatprep.subr.bf16.mxu0 0
  %398 = vmatpush1.bf16.msra.mxu0 0
  %399 = vmatprep.subr.bf16.mxu0 0
  %400 = vmatpush1.bf16.msra.mxu0 0
  %401 = vmatprep.mubr.bf16.mxu0 0
  %402 = vmatmul.mubr.bf16.gmra.mrb[0].mxu0 %v367
  %v403 = vpop.f32.mrb[0].mxu0
  %v404 = vadd.f32 0.0, %v403
  %v405 = vpop.f32.mrb[0].mxu0
  %v406 = vpop.f32.mrb[0].mxu0
  %v407 = vpop.f32.mrb[0].mxu0
  %408 = vdwg.mxu0
  %v409 = vadd.f32 %v351, %v404
  %v410 = vxor.u32 %v409, 2147483648
  %v411 = vmul.f32 %v410, 1.442695
  %v412 = vpow.pop %v411
  %v413 = vadd.f32 %v412, 1.0
  %v414 = vrcp.pop %v413
  %v415 = vmul.f32 1.0, %v414
  %v416 = vtanh.pop %v409
  %418 = vrot.lane.b32.xlu0 %v347, 32
  %v419 = vpop.permute.xlu0 %418
  %v421 = vmul.f32 %v415, %v419
  %423 = vrot.lane.b32.xlu0 %v416, 64
  %v424 = vpop.permute.xlu0 %423
  %v426 = vmul.f32 %v415, %v424
  %428 = vrot.lane.b32.xlu0 %v426, 32
  %v429 = vpop.permute.xlu0 %428
  %v431 = vadd.f32 %v421, %v429
  %v432 = vtanh.pop %v431
  %434 = vrot.lane.b32.xlu0 %v432, 64
  %v435 = vpop.permute.xlu0 %434
  %v437 = vmul.f32 %v415, %v435
  %v438 = vstv %s350
  %vm439 = vcmp.lt.s32.totalorder %v438, %v337
  %v440 = vsel %vm439, 1, 0
  %441 = vset.pattern.permute.xlu0 0
  %442 = vperm.xlu0 %441, %v440
  %v443 = vpop.permute.xlu0 %442
  %vm444 = vcmp.eq.s32.totalorder %v443, 1
  %446 = vrot.lane.b32.xlu0 %v346, 96
  %v447 = vpop.permute.xlu0 %446
  %v449 = vsel %vm444, %v437, %v447
  %v450 = vsel %vm444, %v431, %v419
  %v451 = vsel %vm444, %v437, 0.0
  %v452 = vpack.c.bf16 %v451, %v451
  %v454 = vunpack.c.l.b16 %v452
  %v455 = vpack.c.b16 %v454, %v454
  %456 = vrot.lane.b32.xlu0 %v455, 32
  %v457 = vpop.permute.xlu0 %456
  %vm459 = vcmask 257024
  %460 = vst.msk [vmem:[%s9] sm:$0xf] %vm459, %v457
  %s461 = ssub.s32 7, %s350
  %s462 = scalar_lea.vmem [#allocation7], 56
  %v463 = vld [vmem:[%s462] sm:$0xff]
  %v464 = vpack.c.bf16 %v348, %v348
  %v469 = vunpack.c.l.b16 %v342
  %v470 = vunpack.c.l.b16 %v343
  %v471 = vunpack.c.l.b16 %v344
  %v472 = vunpack.c.l.b16 %v345
  %v473 = vpack.c.b16 %v470, %v469
  %v474 = vpack.c.b16 %v472, %v471
  %v478 = vsel %vm365, %v464, 0
  %480 = vmatprep.subr.bf16.mxu0 0
  %481 = vmatpush1.bf16.msra.mxu0 %v473
  %482 = vmatprep.subr.bf16.mxu0 0
  %483 = vmatpush1.bf16.msra.mxu0 %v474
  %484 = vmatprep.subr.bf16.mxu0 0
  %485 = vmatpush1.bf16.msra.mxu0 0
  %486 = vmatprep.subr.bf16.mxu0 0
  %487 = vmatpush1.bf16.msra.mxu0 0
  %488 = vmatprep.subr.bf16.mxu0 0
  %489 = vmatpush1.bf16.msra.mxu0 0
  %490 = vmatprep.subr.bf16.mxu0 0
  %491 = vmatpush1.bf16.msra.mxu0 0
  %492 = vmatprep.subr.bf16.mxu0 0
  %493 = vmatpush1.bf16.msra.mxu0 0
  %494 = vmatprep.subr.bf16.mxu0 0
  %495 = vmatpush1.bf16.msra.mxu0 0
  %496 = vmatprep.subr.bf16.mxu0 0
  %497 = vmatpush1.bf16.msra.mxu0 0
  %498 = vmatprep.subr.bf16.mxu0 0
  %499 = vmatpush1.bf16.msra.mxu0 0
  %500 = vmatprep.subr.bf16.mxu0 0
  %501 = vmatpush1.bf16.msra.mxu0 0
  %502 = vmatprep.subr.bf16.mxu0 0
  %503 = vmatpush1.bf16.msra.mxu0 0
  %504 = vmatprep.subr.bf16.mxu0 0
  %505 = vmatpush1.bf16.msra.mxu0 0
  %506 = vmatprep.subr.bf16.mxu0 0
  %507 = vmatpush1.bf16.msra.mxu0 0
  %508 = vmatprep.subr.bf16.mxu0 0
  %509 = vmatpush1.bf16.msra.mxu0 0
  %510 = vmatprep.subr.bf16.mxu0 0
  %511 = vmatpush1.bf16.msra.mxu0 0
  %512 = vmatprep.mubr.bf16.mxu0 0
  %513 = vmatmul.mubr.bf16.gmra.mrb[0].mxu0 %v478
  %v514 = vpop.f32.mrb[0].mxu0
  %v515 = vadd.f32 0.0, %v514
  %v516 = vpop.f32.mrb[0].mxu0
  %v517 = vpop.f32.mrb[0].mxu0
  %v518 = vpop.f32.mrb[0].mxu0
  %519 = vdwg.mxu0
  %v520 = vadd.f32 %v463, %v515
  %v521 = vxor.u32 %v520, 2147483648
  %v522 = vmul.f32 %v521, 1.442695
  %v523 = vpow.pop %v522
  %v524 = vadd.f32 %v523, 1.0
  %v525 = vrcp.pop %v524
  %v526 = vmul.f32 1.0, %v525
  %v527 = vtanh.pop %v520
  %529 = vrot.lane.b32.xlu0 %v349, 32
  %v530 = vpop.permute.xlu0 %529
  %v532 = vmul.f32 %v526, %v530
  %534 = vrot.lane.b32.xlu0 %v527, 64
  %v535 = vpop.permute.xlu0 %534
  %v537 = vmul.f32 %v526, %v535
  %539 = vrot.lane.b32.xlu0 %v537, 32
  %v540 = vpop.permute.xlu0 %539
  %v542 = vadd.f32 %v532, %v540
  %v543 = vtanh.pop %v542
  %545 = vrot.lane.b32.xlu0 %v543, 64
  %v546 = vpop.permute.xlu0 %545
  %v548 = vmul.f32 %v526, %v546
  %v549 = vstv %s461
  %vm550 = vcmp.lt.s32.totalorder %v549, %v337
  %v551 = vsel %vm550, 1, 0
  %552 = vset.pattern.permute.xlu0 0
  %553 = vperm.xlu0 %552, %v551
  %v554 = vpop.permute.xlu0 %553
  %vm555 = vcmp.eq.s32.totalorder %v554, 1
  %557 = vrot.lane.b32.xlu0 %v348, 96
  %v558 = vpop.permute.xlu0 %557
  %v560 = vsel %vm555, %v548, %v558
  %v561 = vsel %vm555, %v542, %v530
  %v562 = vsel %vm555, %v548, 0.0
  %v563 = vpack.c.bf16 %v562, %v562
  %v565 = vunpack.c.l.b16 %v563
  %v566 = vpack.c.b16 %v565, %v565
  %567 = vrot.lane.b32.xlu0 %v566, 32
  %v568 = vpop.permute.xlu0 %567
  %s570 = scalar_lea.vmem %s67, 28
  %571 = vst.msk [vmem:[%s570] sm:$0xf] %vm459, %v568
  %s572 = sadd.s32 %s350, 1
  %s573 = scalar_lea.vmem [#allocation6], 8
  %v574 = vld [vmem:[%s573] sm:$0xff]
  %v575 = vpack.c.bf16 %v449, %v449
  %577 = vrot.lane.b32.xlu0 %v575, 32
  %v578 = vpop.permute.xlu0 %577
  %v580 = vsel %vm365, %v578, 0
  %582 = vmatprep.subr.bf16.mxu0 0
  %583 = vmatpush1.bf16.msra.mxu0 %v361
  %584 = vmatprep.subr.bf16.mxu0 0
  %585 = vmatpush1.bf16.msra.mxu0 %v362
  %586 = vmatprep.subr.bf16.mxu0 0
  %587 = vmatpush1.bf16.msra.mxu0 0
  %588 = vmatprep.subr.bf16.mxu0 0
  %589 = vmatpush1.bf16.msra.mxu0 0
  %590 = vmatprep.subr.bf16.mxu0 0
  %591 = vmatpush1.bf16.msra.mxu0 0
  %592 = vmatprep.subr.bf16.mxu0 0
  %593 = vmatpush1.bf16.msra.mxu0 0
  %594 = vmatprep.subr.bf16.mxu0 0
  %595 = vmatpush1.bf16.msra.mxu0 0
  %596 = vmatprep.subr.bf16.mxu0 0
  %597 = vmatpush1.bf16.msra.mxu0 0
  %598 = vmatprep.subr.bf16.mxu0 0
  %599 = vmatpush1.bf16.msra.mxu0 0
  %600 = vmatprep.subr.bf16.mxu0 0
  %601 = vmatpush1.bf16.msra.mxu0 0
  %602 = vmatprep.subr.bf16.mxu0 0
  %603 = vmatpush1.bf16.msra.mxu0 0
  %604 = vmatprep.subr.bf16.mxu0 0
  %605 = vmatpush1.bf16.msra.mxu0 0
  %606 = vmatprep.subr.bf16.mxu0 0
  %607 = vmatpush1.bf16.msra.mxu0 0
  %608 = vmatprep.subr.bf16.mxu0 0
  %609 = vmatpush1.bf16.msra.mxu0 0
  %610 = vmatprep.subr.bf16.mxu0 0
  %611 = vmatpush1.bf16.msra.mxu0 0
  %612 = vmatprep.subr.bf16.mxu0 0
  %613 = vmatpush1.bf16.msra.mxu0 0
  %614 = vmatprep.mubr.bf16.mxu0 0
  %615 = vmatmul.mubr.bf16.gmra.mrb[0].mxu0 %v580
  %v616 = vpop.f32.mrb[0].mxu0
  %v617 = vadd.f32 0.0, %v616
  %v618 = vpop.f32.mrb[0].mxu0
  %v619 = vpop.f32.mrb[0].mxu0
  %v620 = vpop.f32.mrb[0].mxu0
  %621 = vdwg.mxu0
  %v622 = vadd.f32 %v574, %v617
  %v623 = vxor.u32 %v622, 2147483648
  %v624 = vmul.f32 %v623, 1.442695
  %v625 = vpow.pop %v624
  %v626 = vadd.f32 %v625, 1.0
  %v627 = vrcp.pop %v626
  %v628 = vmul.f32 1.0, %v627
  %v629 = vtanh.pop %v622
  %v630 = vmul.f32 %v628, %v450
  %632 = vrot.lane.b32.xlu0 %v629, 64
  %v633 = vpop.permute.xlu0 %632
  %v635 = vmul.f32 %v628, %v633
  %637 = vrot.lane.b32.xlu0 %v635, 32
  %v638 = vpop.permute.xlu0 %637
  %v640 = vadd.f32 %v630, %v638
  %v641 = vtanh.pop %v640
  %643 = vrot.lane.b32.xlu0 %v641, 64
  %v644 = vpop.permute.xlu0 %643
  %v646 = vmul.f32 %v628, %v644
  %v647 = vstv %s572
  %vm648 = vcmp.lt.s32.totalorder %v647, %v337
  %v649 = vsel %vm648, 1, 0
  %650 = vset.pattern.permute.xlu0 0
  %651 = vperm.xlu0 %650, %v649
  %v652 = vpop.permute.xlu0 %651
  %vm653 = vcmp.eq.s32.totalorder %v652, 1
  %v654 = vsel %vm653, %v646, %v449
  %v655 = vsel %vm653, %v640, %v450
  %v656 = vsel %vm653, %v646, 0.0
  %v657 = vpack.c.bf16 %v656, %v656
  %v659 = vunpack.c.l.b16 %v657
  %v660 = vpack.c.b16 %v659, %v659
  %661 = vrot.lane.b32.xlu0 %v660, 32
  %v662 = vpop.permute.xlu0 %661
  %s664 = scalar_lea.vmem %s9, 4
  %665 = vst.msk [vmem:[%s664] sm:$0xf] %vm459, %v662
  %s666 = ssub.s32 6, %s350
  %s667 = scalar_lea.vmem [#allocation7], 48
  %v668 = vld [vmem:[%s667] sm:$0xff]
  %v669 = vpack.c.bf16 %v560, %v560
  %671 = vrot.lane.b32.xlu0 %v669, 32
  %v672 = vpop.permute.xlu0 %671
  %v674 = vsel %vm365, %v672, 0
  %676 = vmatprep.subr.bf16.mxu0 0
  %677 = vmatpush1.bf16.msra.mxu0 %v473
  %678 = vmatprep.subr.bf16.mxu0 0
  %679 = vmatpush1.bf16.msra.mxu0 %v474
  %680 = vmatprep.subr.bf16.mxu0 0
  %681 = vmatpush1.bf16.msra.mxu0 0
  %682 = vmatprep.subr.bf16.mxu0 0
  %683 = vmatpush1.bf16.msra.mxu0 0
  %684 = vmatprep.subr.bf16.mxu0 0
  %685 = vmatpush1.bf16.msra.mxu0 0
  %686 = vmatprep.subr.bf16.mxu0 0
  %687 = vmatpush1.bf16.msra.mxu0 0
  %688 = vmatprep.subr.bf16.mxu0 0
  %689 = vmatpush1.bf16.msra.mxu0 0
  %690 = vmatprep.subr.bf16.mxu0 0
  %691 = vmatpush1.bf16.msra.mxu0 0
  %692 = vmatprep.subr.bf16.mxu0 0
  %693 = vmatpush1.bf16.msra.mxu0 0
  %694 = vmatprep.subr.bf16.mxu0 0
  %695 = vmatpush1.bf16.msra.mxu0 0
  %696 = vmatprep.subr.bf16.mxu0 0
  %697 = vmatpush1.bf16.msra.mxu0 0
  %698 = vmatprep.subr.bf16.mxu0 0
  %699 = vmatpush1.bf16.msra.mxu0 0
  %700 = vmatprep.subr.bf16.mxu0 0
  %701 = vmatpush1.bf16.msra.mxu0 0
  %702 = vmatprep.subr.bf16.mxu0 0
  %703 = vmatpush1.bf16.msra.mxu0 0
  %704 = vmatprep.subr.bf16.mxu0 0
  %705 = vmatpush1.bf16.msra.mxu0 0
  %706 = vmatprep.subr.bf16.mxu0 0
  %707 = vmatpush1.bf16.msra.mxu0 0
  %708 = vmatprep.mubr.bf16.mxu0 0
  %709 = vmatmul.mubr.bf16.gmra.mrb[0].mxu0 %v674
  %v710 = vpop.f32.mrb[0].mxu0
  %v711 = vadd.f32 0.0, %v710
  %v712 = vpop.f32.mrb[0].mxu0
  %v713 = vpop.f32.mrb[0].mxu0
  %v714 = vpop.f32.mrb[0].mxu0
  %715 = vdwg.mxu0
  %v716 = vadd.f32 %v668, %v711
  %v717 = vxor.u32 %v716, 2147483648
  %v718 = vmul.f32 %v717, 1.442695
  %v719 = vpow.pop %v718
  %v720 = vadd.f32 %v719, 1.0
  %v721 = vrcp.pop %v720
  %v722 = vmul.f32 1.0, %v721
  %v723 = vtanh.pop %v716
  %v724 = vmul.f32 %v722, %v561
  %726 = vrot.lane.b32.xlu0 %v723, 64
  %v727 = vpop.permute.xlu0 %726
  %v729 = vmul.f32 %v722, %v727
  %731 = vrot.lane.b32.xlu0 %v729, 32
  %v732 = vpop.permute.xlu0 %731
  %v734 = vadd.f32 %v724, %v732
  %v735 = vtanh.pop %v734
  %737 = vrot.lane.b32.xlu0 %v735, 64
  %v738 = vpop.permute.xlu0 %737
  %v740 = vmul.f32 %v722, %v738
  %v741 = vstv %s666
  %vm742 = vcmp.lt.s32.totalorder %v741, %v337
  %v743 = vsel %vm742, 1, 0
  %744 = vset.pattern.permute.xlu0 0
  %745 = vperm.xlu0 %744, %v743
  %v746 = vpop.permute.xlu0 %745
  %vm747 = vcmp.eq.s32.totalorder %v746, 1
  %v748 = vsel %vm747, %v740, %v560
  %v749 = vsel %vm747, %v734, %v561
  %v750 = vsel %vm747, %v740, 0.0
  %v751 = vpack.c.bf16 %v750, %v750
  %v753 = vunpack.c.l.b16 %v751
  %v754 = vpack.c.b16 %v753, %v753
  %755 = vrot.lane.b32.xlu0 %v754, 32
  %v756 = vpop.permute.xlu0 %755
  %s758 = scalar_lea.vmem %s67, 24
  %759 = vst.msk [vmem:[%s758] sm:$0xf] %vm459, %v756
  %s760 = sadd.s32 %s350, 2
  %s761 = scalar_lea.vmem [#allocation6], 16
  %v762 = vld [vmem:[%s761] sm:$0xff]
  %v763 = vpack.c.bf16 %v654, %v654
  %765 = vrot.lane.b32.xlu0 %v763, 32
  %v766 = vpop.permute.xlu0 %765
  %v768 = vsel %vm365, %v766, 0
  %770 = vmatprep.subr.bf16.mxu0 0
  %771 = vmatpush1.bf16.msra.mxu0 %v361
  %772 = vmatprep.subr.bf16.mxu0 0
  %773 = vmatpush1.bf16.msra.mxu0 %v362
  %774 = vmatprep.subr.bf16.mxu0 0
  %775 = vmatpush1.bf16.msra.mxu0 0
  %776 = vmatprep.subr.bf16.mxu0 0
  %777 = vmatpush1.bf16.msra.mxu0 0
  %778 = vmatprep.subr.bf16.mxu0 0
  %779 = vmatpush1.bf16.msra.mxu0 0
  %780 = vmatprep.subr.bf16.mxu0 0
  %781 = vmatpush1.bf16.msra.mxu0 0
  %782 = vmatprep.subr.bf16.mxu0 0
  %783 = vmatpush1.bf16.msra.mxu0 0
  %784 = vmatprep.subr.bf16.mxu0 0
  %785 = vmatpush1.bf16.msra.mxu0 0
  %786 = vmatprep.subr.bf16.mxu0 0
  %787 = vmatpush1.bf16.msra.mxu0 0
  %788 = vmatprep.subr.bf16.mxu0 0
  %789 = vmatpush1.bf16.msra.mxu0 0
  %790 = vmatprep.subr.bf16.mxu0 0
  %791 = vmatpush1.bf16.msra.mxu0 0
  %792 = vmatprep.subr.bf16.mxu0 0
  %793 = vmatpush1.bf16.msra.mxu0 0
  %794 = vmatprep.subr.bf16.mxu0 0
  %795 = vmatpush1.bf16.msra.mxu0 0
  %796 = vmatprep.subr.bf16.mxu0 0
  %797 = vmatpush1.bf16.msra.mxu0 0
  %798 = vmatprep.subr.bf16.mxu0 0
  %799 = vmatpush1.bf16.msra.mxu0 0
  %800 = vmatprep.subr.bf16.mxu0 0
  %801 = vmatpush1.bf16.msra.mxu0 0
  %802 = vmatprep.mubr.bf16.mxu0 0
  %803 = vmatmul.mubr.bf16.gmra.mrb[0].mxu0 %v768
  %v804 = vpop.f32.mrb[0].mxu0
  %v805 = vadd.f32 0.0, %v804
  %v806 = vpop.f32.mrb[0].mxu0
  %v807 = vpop.f32.mrb[0].mxu0
  %v808 = vpop.f32.mrb[0].mxu0
  %809 = vdwg.mxu0
  %v810 = vadd.f32 %v762, %v805
  %v811 = vxor.u32 %v810, 2147483648
  %v812 = vmul.f32 %v811, 1.442695
  %v813 = vpow.pop %v812
  %v814 = vadd.f32 %v813, 1.0
  %v815 = vrcp.pop %v814
  %v816 = vmul.f32 1.0, %v815
  %v817 = vtanh.pop %v810
  %v818 = vmul.f32 %v816, %v655
  %820 = vrot.lane.b32.xlu0 %v817, 64
  %v821 = vpop.permute.xlu0 %820
  %v823 = vmul.f32 %v816, %v821
  %825 = vrot.lane.b32.xlu0 %v823, 32
  %v826 = vpop.permute.xlu0 %825
  %v828 = vadd.f32 %v818, %v826
  %v829 = vtanh.pop %v828
  %831 = vrot.lane.b32.xlu0 %v829, 64
  %v832 = vpop.permute.xlu0 %831
  %v834 = vmul.f32 %v816, %v832
  %v835 = vstv %s760
  %vm836 = vcmp.lt.s32.totalorder %v835, %v337
  %v837 = vsel %vm836, 1, 0
  %838 = vset.pattern.permute.xlu0 0
  %839 = vperm.xlu0 %838, %v837
  %v840 = vpop.permute.xlu0 %839
  %vm841 = vcmp.eq.s32.totalorder %v840, 1
  %v842 = vsel %vm841, %v834, %v654
  %v843 = vsel %vm841, %v828, %v655
  %v844 = vsel %vm841, %v834, 0.0
  %v845 = vpack.c.bf16 %v844, %v844
  %v847 = vunpack.c.l.b16 %v845
  %v848 = vpack.c.b16 %v847, %v847
  %849 = vrot.lane.b32.xlu0 %v848, 32
  %v850 = vpop.permute.xlu0 %849
  %s852 = scalar_lea.vmem %s9, 8
  %853 = vst.msk [vmem:[%s852] sm:$0xf] %vm459, %v850
  %s854 = ssub.s32 5, %s350
  %s855 = scalar_lea.vmem [#allocation7], 40
  %v856 = vld [vmem:[%s855] sm:$0xff]
  %v857 = vpack.c.bf16 %v748, %v748
  %859 = vrot.lane.b32.xlu0 %v857, 32
  %v860 = vpop.permute.xlu0 %859
  %v862 = vsel %vm365, %v860, 0
  %864 = vmatprep.subr.bf16.mxu0 0
  %865 = vmatpush1.bf16.msra.mxu0 %v473
  %866 = vmatprep.subr.bf16.mxu0 0
  %867 = vmatpush1.bf16.msra.mxu0 %v474
  %868 = vmatprep.subr.bf16.mxu0 0
  %869 = vmatpush1.bf16.msra.mxu0 0
  %870 = vmatprep.subr.bf16.mxu0 0
  %871 = vmatpush1.bf16.msra.mxu0 0
  %872 = vmatprep.subr.bf16.mxu0 0
  %873 = vmatpush1.bf16.msra.mxu0 0
  %874 = vmatprep.subr.bf16.mxu0 0
  %875 = vmatpush1.bf16.msra.mxu0 0
  %876 = vmatprep.subr.bf16.mxu0 0
  %877 = vmatpush1.bf16.msra.mxu0 0
  %878 = vmatprep.subr.bf16.mxu0 0
  %879 = vmatpush1.bf16.msra.mxu0 0
  %880 = vmatprep.subr.bf16.mxu0 0
  %881 = vmatpush1.bf16.msra.mxu0 0
  %882 = vmatprep.subr.bf16.mxu0 0
  %883 = vmatpush1.bf16.msra.mxu0 0
  %884 = vmatprep.subr.bf16.mxu0 0
  %885 = vmatpush1.bf16.msra.mxu0 0
  %886 = vmatprep.subr.bf16.mxu0 0
  %887 = vmatpush1.bf16.msra.mxu0 0
  %888 = vmatprep.subr.bf16.mxu0 0
  %889 = vmatpush1.bf16.msra.mxu0 0
  %890 = vmatprep.subr.bf16.mxu0 0
  %891 = vmatpush1.bf16.msra.mxu0 0
  %892 = vmatprep.subr.bf16.mxu0 0
  %893 = vmatpush1.bf16.msra.mxu0 0
  %894 = vmatprep.subr.bf16.mxu0 0
  %895 = vmatpush1.bf16.msra.mxu0 0
  %896 = vmatprep.mubr.bf16.mxu0 0
  %897 = vmatmul.mubr.bf16.gmra.mrb[0].mxu0 %v862
  %v898 = vpop.f32.mrb[0].mxu0
  %v899 = vadd.f32 0.0, %v898
  %v900 = vpop.f32.mrb[0].mxu0
  %v901 = vpop.f32.mrb[0].mxu0
  %v902 = vpop.f32.mrb[0].mxu0
  %903 = vdwg.mxu0
  %v904 = vadd.f32 %v856, %v899
  %v905 = vxor.u32 %v904, 2147483648
  %v906 = vmul.f32 %v905, 1.442695
  %v907 = vpow.pop %v906
  %v908 = vadd.f32 %v907, 1.0
  %v909 = vrcp.pop %v908
  %v910 = vmul.f32 1.0, %v909
  %v911 = vtanh.pop %v904
  %v912 = vmul.f32 %v910, %v749
  %914 = vrot.lane.b32.xlu0 %v911, 64
  %v915 = vpop.permute.xlu0 %914
  %v917 = vmul.f32 %v910, %v915
  %919 = vrot.lane.b32.xlu0 %v917, 32
  %v920 = vpop.permute.xlu0 %919
  %v922 = vadd.f32 %v912, %v920
  %v923 = vtanh.pop %v922
  %925 = vrot.lane.b32.xlu0 %v923, 64
  %v926 = vpop.permute.xlu0 %925
  %v928 = vmul.f32 %v910, %v926
  %v929 = vstv %s854
  %vm930 = vcmp.lt.s32.totalorder %v929, %v337
  %v931 = vsel %vm930, 1, 0
  %932 = vset.pattern.permute.xlu0 0
  %933 = vperm.xlu0 %932, %v931
  %v934 = vpop.permute.xlu0 %933
  %vm935 = vcmp.eq.s32.totalorder %v934, 1
  %v936 = vsel %vm935, %v928, %v748
  %v937 = vsel %vm935, %v922, %v749
  %v938 = vsel %vm935, %v928, 0.0
  %v939 = vpack.c.bf16 %v938, %v938
  %v941 = vunpack.c.l.b16 %v939
  %v942 = vpack.c.b16 %v941, %v941
  %943 = vrot.lane.b32.xlu0 %v942, 32
  %v944 = vpop.permute.xlu0 %943
  %s946 = scalar_lea.vmem %s67, 20
  %947 = vst.msk [vmem:[%s946] sm:$0xf] %vm459, %v944
  %s948 = sadd.s32 %s350, 3
  %s949 = scalar_lea.vmem [#allocation6], 24
  %v950 = vld [vmem:[%s949] sm:$0xff]
  %v951 = vpack.c.bf16 %v842, %v842
  %953 = vrot.lane.b32.xlu0 %v951, 32
  %v954 = vpop.permute.xlu0 %953
  %v956 = vsel %vm365, %v954, 0
  %958 = vmatprep.subr.bf16.mxu0 0
  %959 = vmatpush1.bf16.msra.mxu0 %v361
  %960 = vmatprep.subr.bf16.mxu0 0
  %961 = vmatpush1.bf16.msra.mxu0 %v362
  %962 = vmatprep.subr.bf16.mxu0 0
  %963 = vmatpush1.bf16.msra.mxu0 0
  %964 = vmatprep.subr.bf16.mxu0 0
  %965 = vmatpush1.bf16.msra.mxu0 0
  %966 = vmatprep.subr.bf16.mxu0 0
  %967 = vmatpush1.bf16.msra.mxu0 0
  %968 = vmatprep.subr.bf16.mxu0 0
  %969 = vmatpush1.bf16.msra.mxu0 0
  %970 = vmatprep.subr.bf16.mxu0 0
  %971 = vmatpush1.bf16.msra.mxu0 0
  %972 = vmatprep.subr.bf16.mxu0 0
  %973 = vmatpush1.bf16.msra.mxu0 0
  %974 = vmatprep.subr.bf16.mxu0 0
  %975 = vmatpush1.bf16.msra.mxu0 0
  %976 = vmatprep.subr.bf16.mxu0 0
  %977 = vmatpush1.bf16.msra.mxu0 0
  %978 = vmatprep.subr.bf16.mxu0 0
  %979 = vmatpush1.bf16.msra.mxu0 0
  %980 = vmatprep.subr.bf16.mxu0 0
  %981 = vmatpush1.bf16.msra.mxu0 0
  %982 = vmatprep.subr.bf16.mxu0 0
  %983 = vmatpush1.bf16.msra.mxu0 0
  %984 = vmatprep.subr.bf16.mxu0 0
  %985 = vmatpush1.bf16.msra.mxu0 0
  %986 = vmatprep.subr.bf16.mxu0 0
  %987 = vmatpush1.bf16.msra.mxu0 0
  %988 = vmatprep.subr.bf16.mxu0 0
  %989 = vmatpush1.bf16.msra.mxu0 0
  %990 = vmatprep.mubr.bf16.mxu0 0
  %991 = vmatmul.mubr.bf16.gmra.mrb[0].mxu0 %v956
  %v992 = vpop.f32.mrb[0].mxu0
  %v993 = vadd.f32 0.0, %v992
  %v994 = vpop.f32.mrb[0].mxu0
  %v995 = vpop.f32.mrb[0].mxu0
  %v996 = vpop.f32.mrb[0].mxu0
  %997 = vdwg.mxu0
  %v998 = vadd.f32 %v950, %v993
  %v999 = vxor.u32 %v998, 2147483648
  %v1000 = vmul.f32 %v999, 1.442695
  %v1001 = vpow.pop %v1000
  %v1002 = vadd.f32 %v1001, 1.0
  %v1003 = vrcp.pop %v1002
  %v1004 = vmul.f32 1.0, %v1003
  %v1005 = vtanh.pop %v998
  %v1006 = vmul.f32 %v1004, %v843
  %1008 = vrot.lane.b32.xlu0 %v1005, 64
  %v1009 = vpop.permute.xlu0 %1008
  %v1011 = vmul.f32 %v1004, %v1009
  %1013 = vrot.lane.b32.xlu0 %v1011, 32
  %v1014 = vpop.permute.xlu0 %1013
  %v1016 = vadd.f32 %v1006, %v1014
  %v1017 = vtanh.pop %v1016
  %1019 = vrot.lane.b32.xlu0 %v1017, 64
  %v1020 = vpop.permute.xlu0 %1019
  %v1022 = vmul.f32 %v1004, %v1020
  %v1023 = vstv %s948
  %vm1024 = vcmp.lt.s32.totalorder %v1023, %v337
  %v1025 = vsel %vm1024, 1, 0
  %1026 = vset.pattern.permute.xlu0 0
  %1027 = vperm.xlu0 %1026, %v1025
  %v1028 = vpop.permute.xlu0 %1027
  %vm1029 = vcmp.eq.s32.totalorder %v1028, 1
  %v1030 = vsel %vm1029, %v1022, %v842
  %v1031 = vsel %vm1029, %v1016, %v843
  %v1032 = vsel %vm1029, %v1022, 0.0
  %v1033 = vpack.c.bf16 %v1032, %v1032
  %v1035 = vunpack.c.l.b16 %v1033
  %v1036 = vpack.c.b16 %v1035, %v1035
  %1037 = vrot.lane.b32.xlu0 %v1036, 32
  %v1038 = vpop.permute.xlu0 %1037
  %s1040 = scalar_lea.vmem %s9, 12
  %1041 = vst.msk [vmem:[%s1040] sm:$0xf] %vm459, %v1038
  %s1042 = ssub.s32 4, %s350
  %s1043 = scalar_lea.vmem [#allocation7], 32
  %v1044 = vld [vmem:[%s1043] sm:$0xff]
  %v1045 = vpack.c.bf16 %v936, %v936
  %1047 = vrot.lane.b32.xlu0 %v1045, 32
  %v1048 = vpop.permute.xlu0 %1047
  %v1050 = vsel %vm365, %v1048, 0
  %1052 = vmatprep.subr.bf16.mxu0 0
  %1053 = vmatpush1.bf16.msra.mxu0 %v473
  %1054 = vmatprep.subr.bf16.mxu0 0
  %1055 = vmatpush1.bf16.msra.mxu0 %v474
  %1056 = vmatprep.subr.bf16.mxu0 0
  %1057 = vmatpush1.bf16.msra.mxu0 0
  %1058 = vmatprep.subr.bf16.mxu0 0
  %1059 = vmatpush1.bf16.msra.mxu0 0
  %1060 = vmatprep.subr.bf16.mxu0 0
  %1061 = vmatpush1.bf16.msra.mxu0 0
  %1062 = vmatprep.subr.bf16.mxu0 0
  %1063 = vmatpush1.bf16.msra.mxu0 0
  %1064 = vmatprep.subr.bf16.mxu0 0
  %1065 = vmatpush1.bf16.msra.mxu0 0
  %1066 = vmatprep.subr.bf16.mxu0 0
  %1067 = vmatpush1.bf16.msra.mxu0 0
  %1068 = vmatprep.subr.bf16.mxu0 0
  %1069 = vmatpush1.bf16.msra.mxu0 0
  %1070 = vmatprep.subr.bf16.mxu0 0
  %1071 = vmatpush1.bf16.msra.mxu0 0
  %1072 = vmatprep.subr.bf16.mxu0 0
  %1073 = vmatpush1.bf16.msra.mxu0 0
  %1074 = vmatprep.subr.bf16.mxu0 0
  %1075 = vmatpush1.bf16.msra.mxu0 0
  %1076 = vmatprep.subr.bf16.mxu0 0
  %1077 = vmatpush1.bf16.msra.mxu0 0
  %1078 = vmatprep.subr.bf16.mxu0 0
  %1079 = vmatpush1.bf16.msra.mxu0 0
  %1080 = vmatprep.subr.bf16.mxu0 0
  %1081 = vmatpush1.bf16.msra.mxu0 0
  %1082 = vmatprep.subr.bf16.mxu0 0
  %1083 = vmatpush1.bf16.msra.mxu0 0
  %1084 = vmatprep.mubr.bf16.mxu0 0
  %1085 = vmatmul.mubr.bf16.gmra.mrb[0].mxu0 %v1050
  %v1086 = vpop.f32.mrb[0].mxu0
  %v1087 = vadd.f32 0.0, %v1086
  %v1088 = vpop.f32.mrb[0].mxu0
  %v1089 = vpop.f32.mrb[0].mxu0
  %v1090 = vpop.f32.mrb[0].mxu0
  %1091 = vdwg.mxu0
  %v1092 = vadd.f32 %v1044, %v1087
  %v1093 = vxor.u32 %v1092, 2147483648
  %v1094 = vmul.f32 %v1093, 1.442695
  %v1095 = vpow.pop %v1094
  %v1096 = vadd.f32 %v1095, 1.0
  %v1097 = vrcp.pop %v1096
  %v1098 = vmul.f32 1.0, %v1097
  %v1099 = vtanh.pop %v1092
  %v1100 = vmul.f32 %v1098, %v937
  %1102 = vrot.lane.b32.xlu0 %v1099, 64
  %v1103 = vpop.permute.xlu0 %1102
  %v1105 = vmul.f32 %v1098, %v1103
  %1107 = vrot.lane.b32.xlu0 %v1105, 32
  %v1108 = vpop.permute.xlu0 %1107
  %v1110 = vadd.f32 %v1100, %v1108
  %v1111 = vtanh.pop %v1110
  %1113 = vrot.lane.b32.xlu0 %v1111, 64
  %v1114 = vpop.permute.xlu0 %1113
  %v1116 = vmul.f32 %v1098, %v1114
  %v1117 = vstv %s1042
  %vm1118 = vcmp.lt.s32.totalorder %v1117, %v337
  %v1119 = vsel %vm1118, 1, 0
  %1120 = vset.pattern.permute.xlu0 0
  %1121 = vperm.xlu0 %1120, %v1119
  %v1122 = vpop.permute.xlu0 %1121
  %vm1123 = vcmp.eq.s32.totalorder %v1122, 1
  %v1124 = vsel %vm1123, %v1116, %v936
  %v1125 = vsel %vm1123, %v1110, %v937
  %v1126 = vsel %vm1123, %v1116, 0.0
  %v1127 = vpack.c.bf16 %v1126, %v1126
  %v1129 = vunpack.c.l.b16 %v1127
  %v1130 = vpack.c.b16 %v1129, %v1129
  %1131 = vrot.lane.b32.xlu0 %v1130, 32
  %v1132 = vpop.permute.xlu0 %1131
  %s1134 = scalar_lea.vmem %s67, 16
  %1135 = vst.msk [vmem:[%s1134] sm:$0xf] %vm459, %v1132
  %s1136 = sadd.s32 %s350, 4
  %s1137 = scalar_lea.vmem [#allocation6], 32
  %v1138 = vld [vmem:[%s1137] sm:$0xff]
  %v1139 = vpack.c.bf16 %v1030, %v1030
  %1141 = vrot.lane.b32.xlu0 %v1139, 32
  %v1142 = vpop.permute.xlu0 %1141
  %v1144 = vsel %vm365, %v1142, 0
  %1146 = vmatprep.subr.bf16.mxu0 0
  %1147 = vmatpush1.bf16.msra.mxu0 %v361
  %1148 = vmatprep.subr.bf16.mxu0 0
  %1149 = vmatpush1.bf16.msra.mxu0 %v362
  %1150 = vmatprep.subr.bf16.mxu0 0
  %1151 = vmatpush1.bf16.msra.mxu0 0
  %1152 = vmatprep.subr.bf16.mxu0 0
  %1153 = vmatpush1.bf16.msra.mxu0 0
  %1154 = vmatprep.subr.bf16.mxu0 0
  %1155 = vmatpush1.bf16.msra.mxu0 0
  %1156 = vmatprep.subr.bf16.mxu0 0
  %1157 = vmatpush1.bf16.msra.mxu0 0
  %1158 = vmatprep.subr.bf16.mxu0 0
  %1159 = vmatpush1.bf16.msra.mxu0 0
  %1160 = vmatprep.subr.bf16.mxu0 0
  %1161 = vmatpush1.bf16.msra.mxu0 0
  %1162 = vmatprep.subr.bf16.mxu0 0
  %1163 = vmatpush1.bf16.msra.mxu0 0
  %1164 = vmatprep.subr.bf16.mxu0 0
  %1165 = vmatpush1.bf16.msra.mxu0 0
  %1166 = vmatprep.subr.bf16.mxu0 0
  %1167 = vmatpush1.bf16.msra.mxu0 0
  %1168 = vmatprep.subr.bf16.mxu0 0
  %1169 = vmatpush1.bf16.msra.mxu0 0
  %1170 = vmatprep.subr.bf16.mxu0 0
  %1171 = vmatpush1.bf16.msra.mxu0 0
  %1172 = vmatprep.subr.bf16.mxu0 0
  %1173 = vmatpush1.bf16.msra.mxu0 0
  %1174 = vmatprep.subr.bf16.mxu0 0
  %1175 = vmatpush1.bf16.msra.mxu0 0
  %1176 = vmatprep.subr.bf16.mxu0 0
  %1177 = vmatpush1.bf16.msra.mxu0 0
  %1178 = vmatprep.mubr.bf16.mxu0 0
  %1179 = vmatmul.mubr.bf16.gmra.mrb[0].mxu0 %v1144
  %v1180 = vpop.f32.mrb[0].mxu0
  %v1181 = vadd.f32 0.0, %v1180
  %v1182 = vpop.f32.mrb[0].mxu0
  %v1183 = vpop.f32.mrb[0].mxu0
  %v1184 = vpop.f32.mrb[0].mxu0
  %1185 = vdwg.mxu0
  %v1186 = vadd.f32 %v1138, %v1181
  %v1187 = vxor.u32 %v1186, 2147483648
  %v1188 = vmul.f32 %v1187, 1.442695
  %v1189 = vpow.pop %v1188
  %v1190 = vadd.f32 %v1189, 1.0
  %v1191 = vrcp.pop %v1190
  %v1192 = vmul.f32 1.0, %v1191
  %v1193 = vtanh.pop %v1186
  %v1194 = vmul.f32 %v1192, %v1031
  %1196 = vrot.lane.b32.xlu0 %v1193, 64
  %v1197 = vpop.permute.xlu0 %1196
  %v1199 = vmul.f32 %v1192, %v1197
  %1201 = vrot.lane.b32.xlu0 %v1199, 32
  %v1202 = vpop.permute.xlu0 %1201
  %v1204 = vadd.f32 %v1194, %v1202
  %v1205 = vtanh.pop %v1204
  %1207 = vrot.lane.b32.xlu0 %v1205, 64
  %v1208 = vpop.permute.xlu0 %1207
  %v1210 = vmul.f32 %v1192, %v1208
  %v1211 = vstv %s1136
  %vm1212 = vcmp.lt.s32.totalorder %v1211, %v337
  %v1213 = vsel %vm1212, 1, 0
  %1214 = vset.pattern.permute.xlu0 0
  %1215 = vperm.xlu0 %1214, %v1213
  %v1216 = vpop.permute.xlu0 %1215
  %vm1217 = vcmp.eq.s32.totalorder %v1216, 1
  %v1218 = vsel %vm1217, %v1210, %v1030
  %v1219 = vsel %vm1217, %v1204, %v1031
  %v1220 = vsel %vm1217, %v1210, 0.0
  %v1221 = vpack.c.bf16 %v1220, %v1220
  %v1223 = vunpack.c.l.b16 %v1221
  %v1224 = vpack.c.b16 %v1223, %v1223
  %1225 = vrot.lane.b32.xlu0 %v1224, 32
  %v1226 = vpop.permute.xlu0 %1225
  %s1228 = scalar_lea.vmem %s9, 16
  %1229 = vst.msk [vmem:[%s1228] sm:$0xf] %vm459, %v1226
  %s1230 = ssub.s32 3, %s350
  %s1231 = scalar_lea.vmem [#allocation7], 24
  %v1232 = vld [vmem:[%s1231] sm:$0xff]
  %v1233 = vpack.c.bf16 %v1124, %v1124
  %1235 = vrot.lane.b32.xlu0 %v1233, 32
  %v1236 = vpop.permute.xlu0 %1235
  %v1238 = vsel %vm365, %v1236, 0
  %1240 = vmatprep.subr.bf16.mxu0 0
  %1241 = vmatpush1.bf16.msra.mxu0 %v473
  %1242 = vmatprep.subr.bf16.mxu0 0
  %1243 = vmatpush1.bf16.msra.mxu0 %v474
  %1244 = vmatprep.subr.bf16.mxu0 0
  %1245 = vmatpush1.bf16.msra.mxu0 0
  %1246 = vmatprep.subr.bf16.mxu0 0
  %1247 = vmatpush1.bf16.msra.mxu0 0
  %1248 = vmatprep.subr.bf16.mxu0 0
  %1249 = vmatpush1.bf16.msra.mxu0 0
  %1250 = vmatprep.subr.bf16.mxu0 0
  %1251 = vmatpush1.bf16.msra.mxu0 0
  %1252 = vmatprep.subr.bf16.mxu0 0
  %1253 = vmatpush1.bf16.msra.mxu0 0
  %1254 = vmatprep.subr.bf16.mxu0 0
  %1255 = vmatpush1.bf16.msra.mxu0 0
  %1256 = vmatprep.subr.bf16.mxu0 0
  %1257 = vmatpush1.bf16.msra.mxu0 0
  %1258 = vmatprep.subr.bf16.mxu0 0
  %1259 = vmatpush1.bf16.msra.mxu0 0
  %1260 = vmatprep.subr.bf16.mxu0 0
  %1261 = vmatpush1.bf16.msra.mxu0 0
  %1262 = vmatprep.subr.bf16.mxu0 0
  %1263 = vmatpush1.bf16.msra.mxu0 0
  %1264 = vmatprep.subr.bf16.mxu0 0
  %1265 = vmatpush1.bf16.msra.mxu0 0
  %1266 = vmatprep.subr.bf16.mxu0 0
  %1267 = vmatpush1.bf16.msra.mxu0 0
  %1268 = vmatprep.subr.bf16.mxu0 0
  %1269 = vmatpush1.bf16.msra.mxu0 0
  %1270 = vmatprep.subr.bf16.mxu0 0
  %1271 = vmatpush1.bf16.msra.mxu0 0
  %1272 = vmatprep.mubr.bf16.mxu0 0
  %1273 = vmatmul.mubr.bf16.gmra.mrb[0].mxu0 %v1238
  %v1274 = vpop.f32.mrb[0].mxu0
  %v1275 = vadd.f32 0.0, %v1274
  %v1276 = vpop.f32.mrb[0].mxu0
  %v1277 = vpop.f32.mrb[0].mxu0
  %v1278 = vpop.f32.mrb[0].mxu0
  %1279 = vdwg.mxu0
  %v1280 = vadd.f32 %v1232, %v1275
  %v1281 = vxor.u32 %v1280, 2147483648
  %v1282 = vmul.f32 %v1281, 1.442695
  %v1283 = vpow.pop %v1282
  %v1284 = vadd.f32 %v1283, 1.0
  %v1285 = vrcp.pop %v1284
  %v1286 = vmul.f32 1.0, %v1285
  %v1287 = vtanh.pop %v1280
  %v1288 = vmul.f32 %v1286, %v1125
  %1290 = vrot.lane.b32.xlu0 %v1287, 64
  %v1291 = vpop.permute.xlu0 %1290
  %v1293 = vmul.f32 %v1286, %v1291
  %1295 = vrot.lane.b32.xlu0 %v1293, 32
  %v1296 = vpop.permute.xlu0 %1295
  %v1298 = vadd.f32 %v1288, %v1296
  %v1299 = vtanh.pop %v1298
  %1301 = vrot.lane.b32.xlu0 %v1299, 64
  %v1302 = vpop.permute.xlu0 %1301
  %v1304 = vmul.f32 %v1286, %v1302
  %v1305 = vstv %s1230
  %vm1306 = vcmp.lt.s32.totalorder %v1305, %v337
  %v1307 = vsel %vm1306, 1, 0
  %1308 = vset.pattern.permute.xlu0 0
  %1309 = vperm.xlu0 %1308, %v1307
  %v1310 = vpop.permute.xlu0 %1309
  %vm1311 = vcmp.eq.s32.totalorder %v1310, 1
  %v1312 = vsel %vm1311, %v1304, %v1124
  %v1313 = vsel %vm1311, %v1298, %v1125
  %v1314 = vsel %vm1311, %v1304, 0.0
  %v1315 = vpack.c.bf16 %v1314, %v1314
  %v1317 = vunpack.c.l.b16 %v1315
  %v1318 = vpack.c.b16 %v1317, %v1317
  %1319 = vrot.lane.b32.xlu0 %v1318, 32
  %v1320 = vpop.permute.xlu0 %1319
  %s1322 = scalar_lea.vmem %s67, 12
  %1323 = vst.msk [vmem:[%s1322] sm:$0xf] %vm459, %v1320
  %s1324 = sadd.s32 %s350, 5
  %s1325 = scalar_lea.vmem [#allocation6], 40
  %v1326 = vld [vmem:[%s1325] sm:$0xff]
  %v1327 = vpack.c.bf16 %v1218, %v1218
  %1329 = vrot.lane.b32.xlu0 %v1327, 32
  %v1330 = vpop.permute.xlu0 %1329
  %v1332 = vsel %vm365, %v1330, 0
  %1334 = vmatprep.subr.bf16.mxu0 0
  %1335 = vmatpush1.bf16.msra.mxu0 %v361
  %1336 = vmatprep.subr.bf16.mxu0 0
  %1337 = vmatpush1.bf16.msra.mxu0 %v362
  %1338 = vmatprep.subr.bf16.mxu0 0
  %1339 = vmatpush1.bf16.msra.mxu0 0
  %1340 = vmatprep.subr.bf16.mxu0 0
  %1341 = vmatpush1.bf16.msra.mxu0 0
  %1342 = vmatprep.subr.bf16.mxu0 0
  %1343 = vmatpush1.bf16.msra.mxu0 0
  %1344 = vmatprep.subr.bf16.mxu0 0
  %1345 = vmatpush1.bf16.msra.mxu0 0
  %1346 = vmatprep.subr.bf16.mxu0 0
  %1347 = vmatpush1.bf16.msra.mxu0 0
  %1348 = vmatprep.subr.bf16.mxu0 0
  %1349 = vmatpush1.bf16.msra.mxu0 0
  %1350 = vmatprep.subr.bf16.mxu0 0
  %1351 = vmatpush1.bf16.msra.mxu0 0
  %1352 = vmatprep.subr.bf16.mxu0 0
  %1353 = vmatpush1.bf16.msra.mxu0 0
  %1354 = vmatprep.subr.bf16.mxu0 0
  %1355 = vmatpush1.bf16.msra.mxu0 0
  %1356 = vmatprep.subr.bf16.mxu0 0
  %1357 = vmatpush1.bf16.msra.mxu0 0
  %1358 = vmatprep.subr.bf16.mxu0 0
  %1359 = vmatpush1.bf16.msra.mxu0 0
  %1360 = vmatprep.subr.bf16.mxu0 0
  %1361 = vmatpush1.bf16.msra.mxu0 0
  %1362 = vmatprep.subr.bf16.mxu0 0
  %1363 = vmatpush1.bf16.msra.mxu0 0
  %1364 = vmatprep.subr.bf16.mxu0 0
  %1365 = vmatpush1.bf16.msra.mxu0 0
  %1366 = vmatprep.mubr.bf16.mxu0 0
  %1367 = vmatmul.mubr.bf16.gmra.mrb[0].mxu0 %v1332
  %v1368 = vpop.f32.mrb[0].mxu0
  %v1369 = vadd.f32 0.0, %v1368
  %v1370 = vpop.f32.mrb[0].mxu0
  %v1371 = vpop.f32.mrb[0].mxu0
  %v1372 = vpop.f32.mrb[0].mxu0
  %1373 = vdwg.mxu0
  %v1374 = vadd.f32 %v1326, %v1369
  %v1375 = vxor.u32 %v1374, 2147483648
  %v1376 = vmul.f32 %v1375, 1.442695
  %v1377 = vpow.pop %v1376
  %v1378 = vadd.f32 %v1377, 1.0
  %v1379 = vrcp.pop %v1378
  %v1380 = vmul.f32 1.0, %v1379
  %v1381 = vtanh.pop %v1374
  %v1382 = vmul.f32 %v1380, %v1219
  %1384 = vrot.lane.b32.xlu0 %v1381, 64
  %v1385 = vpop.permute.xlu0 %1384
  %v1387 = vmul.f32 %v1380, %v1385
  %1389 = vrot.lane.b32.xlu0 %v1387, 32
  %v1390 = vpop.permute.xlu0 %1389
  %v1392 = vadd.f32 %v1382, %v1390
  %v1393 = vtanh.pop %v1392
  %1395 = vrot.lane.b32.xlu0 %v1393, 64
  %v1396 = vpop.permute.xlu0 %1395
  %v1398 = vmul.f32 %v1380, %v1396
  %v1399 = vstv %s1324
  %vm1400 = vcmp.lt.s32.totalorder %v1399, %v337
  %v1401 = vsel %vm1400, 1, 0
  %1402 = vset.pattern.permute.xlu0 0
  %1403 = vperm.xlu0 %1402, %v1401
  %v1404 = vpop.permute.xlu0 %1403
  %vm1405 = vcmp.eq.s32.totalorder %v1404, 1
  %v1406 = vsel %vm1405, %v1398, %v1218
  %v1407 = vsel %vm1405, %v1392, %v1219
  %v1408 = vsel %vm1405, %v1398, 0.0
  %v1409 = vpack.c.bf16 %v1408, %v1408
  %v1411 = vunpack.c.l.b16 %v1409
  %v1412 = vpack.c.b16 %v1411, %v1411
  %1413 = vrot.lane.b32.xlu0 %v1412, 32
  %v1414 = vpop.permute.xlu0 %1413
  %s1416 = scalar_lea.vmem %s9, 20
  %1417 = vst.msk [vmem:[%s1416] sm:$0xf] %vm459, %v1414
  %s1418 = ssub.s32 2, %s350
  %s1419 = scalar_lea.vmem [#allocation7], 16
  %v1420 = vld [vmem:[%s1419] sm:$0xff]
  %v1421 = vpack.c.bf16 %v1312, %v1312
  %1423 = vrot.lane.b32.xlu0 %v1421, 32
  %v1424 = vpop.permute.xlu0 %1423
  %v1426 = vsel %vm365, %v1424, 0
  %1428 = vmatprep.subr.bf16.mxu0 0
  %1429 = vmatpush1.bf16.msra.mxu0 %v473
  %1430 = vmatprep.subr.bf16.mxu0 0
  %1431 = vmatpush1.bf16.msra.mxu0 %v474
  %1432 = vmatprep.subr.bf16.mxu0 0
  %1433 = vmatpush1.bf16.msra.mxu0 0
  %1434 = vmatprep.subr.bf16.mxu0 0
  %1435 = vmatpush1.bf16.msra.mxu0 0
  %1436 = vmatprep.subr.bf16.mxu0 0
  %1437 = vmatpush1.bf16.msra.mxu0 0
  %1438 = vmatprep.subr.bf16.mxu0 0
  %1439 = vmatpush1.bf16.msra.mxu0 0
  %1440 = vmatprep.subr.bf16.mxu0 0
  %1441 = vmatpush1.bf16.msra.mxu0 0
  %1442 = vmatprep.subr.bf16.mxu0 0
  %1443 = vmatpush1.bf16.msra.mxu0 0
  %1444 = vmatprep.subr.bf16.mxu0 0
  %1445 = vmatpush1.bf16.msra.mxu0 0
  %1446 = vmatprep.subr.bf16.mxu0 0
  %1447 = vmatpush1.bf16.msra.mxu0 0
  %1448 = vmatprep.subr.bf16.mxu0 0
  %1449 = vmatpush1.bf16.msra.mxu0 0
  %1450 = vmatprep.subr.bf16.mxu0 0
  %1451 = vmatpush1.bf16.msra.mxu0 0
  %1452 = vmatprep.subr.bf16.mxu0 0
  %1453 = vmatpush1.bf16.msra.mxu0 0
  %1454 = vmatprep.subr.bf16.mxu0 0
  %1455 = vmatpush1.bf16.msra.mxu0 0
  %1456 = vmatprep.subr.bf16.mxu0 0
  %1457 = vmatpush1.bf16.msra.mxu0 0
  %1458 = vmatprep.subr.bf16.mxu0 0
  %1459 = vmatpush1.bf16.msra.mxu0 0
  %1460 = vmatprep.mubr.bf16.mxu0 0
  %1461 = vmatmul.mubr.bf16.gmra.mrb[0].mxu0 %v1426
  %v1462 = vpop.f32.mrb[0].mxu0
  %v1463 = vadd.f32 0.0, %v1462
  %v1464 = vpop.f32.mrb[0].mxu0
  %v1465 = vpop.f32.mrb[0].mxu0
  %v1466 = vpop.f32.mrb[0].mxu0
  %1467 = vdwg.mxu0
  %v1468 = vadd.f32 %v1420, %v1463
  %v1469 = vxor.u32 %v1468, 2147483648
  %v1470 = vmul.f32 %v1469, 1.442695
  %v1471 = vpow.pop %v1470
  %v1472 = vadd.f32 %v1471, 1.0
  %v1473 = vrcp.pop %v1472
  %v1474 = vmul.f32 1.0, %v1473
  %v1475 = vtanh.pop %v1468
  %v1476 = vmul.f32 %v1474, %v1313
  %1478 = vrot.lane.b32.xlu0 %v1475, 64
  %v1479 = vpop.permute.xlu0 %1478
  %v1481 = vmul.f32 %v1474, %v1479
  %1483 = vrot.lane.b32.xlu0 %v1481, 32
  %v1484 = vpop.permute.xlu0 %1483
  %v1486 = vadd.f32 %v1476, %v1484
  %v1487 = vtanh.pop %v1486
  %1489 = vrot.lane.b32.xlu0 %v1487, 64
  %v1490 = vpop.permute.xlu0 %1489
  %v1492 = vmul.f32 %v1474, %v1490
  %v1493 = vstv %s1418
  %vm1494 = vcmp.lt.s32.totalorder %v1493, %v337
  %v1495 = vsel %vm1494, 1, 0
  %1496 = vset.pattern.permute.xlu0 0
  %1497 = vperm.xlu0 %1496, %v1495
  %v1498 = vpop.permute.xlu0 %1497
  %vm1499 = vcmp.eq.s32.totalorder %v1498, 1
  %v1500 = vsel %vm1499, %v1492, %v1312
  %v1501 = vsel %vm1499, %v1486, %v1313
  %v1502 = vsel %vm1499, %v1492, 0.0
  %v1503 = vpack.c.bf16 %v1502, %v1502
  %v1505 = vunpack.c.l.b16 %v1503
  %v1506 = vpack.c.b16 %v1505, %v1505
  %1507 = vrot.lane.b32.xlu0 %v1506, 32
  %v1508 = vpop.permute.xlu0 %1507
  %s1510 = scalar_lea.vmem %s67, 8
  %1511 = vst.msk [vmem:[%s1510] sm:$0xf] %vm459, %v1508
  %s1512 = sadd.s32 %s350, 6
  %s1513 = scalar_lea.vmem [#allocation6], 48
  %v1514 = vld [vmem:[%s1513] sm:$0xff]
  %v1515 = vpack.c.bf16 %v1406, %v1406
  %1517 = vrot.lane.b32.xlu0 %v1515, 32
  %v1518 = vpop.permute.xlu0 %1517
  %v1520 = vsel %vm365, %v1518, 0
  %1522 = vmatprep.subr.bf16.mxu0 0
  %1523 = vmatpush1.bf16.msra.mxu0 %v361
  %1524 = vmatprep.subr.bf16.mxu0 0
  %1525 = vmatpush1.bf16.msra.mxu0 %v362
  %1526 = vmatprep.subr.bf16.mxu0 0
  %1527 = vmatpush1.bf16.msra.mxu0 0
  %1528 = vmatprep.subr.bf16.mxu0 0
  %1529 = vmatpush1.bf16.msra.mxu0 0
  %1530 = vmatprep.subr.bf16.mxu0 0
  %1531 = vmatpush1.bf16.msra.mxu0 0
  %1532 = vmatprep.subr.bf16.mxu0 0
  %1533 = vmatpush1.bf16.msra.mxu0 0
  %1534 = vmatprep.subr.bf16.mxu0 0
  %1535 = vmatpush1.bf16.msra.mxu0 0
  %1536 = vmatprep.subr.bf16.mxu0 0
  %1537 = vmatpush1.bf16.msra.mxu0 0
  %1538 = vmatprep.subr.bf16.mxu0 0
  %1539 = vmatpush1.bf16.msra.mxu0 0
  %1540 = vmatprep.subr.bf16.mxu0 0
  %1541 = vmatpush1.bf16.msra.mxu0 0
  %1542 = vmatprep.subr.bf16.mxu0 0
  %1543 = vmatpush1.bf16.msra.mxu0 0
  %1544 = vmatprep.subr.bf16.mxu0 0
  %1545 = vmatpush1.bf16.msra.mxu0 0
  %1546 = vmatprep.subr.bf16.mxu0 0
  %1547 = vmatpush1.bf16.msra.mxu0 0
  %1548 = vmatprep.subr.bf16.mxu0 0
  %1549 = vmatpush1.bf16.msra.mxu0 0
  %1550 = vmatprep.subr.bf16.mxu0 0
  %1551 = vmatpush1.bf16.msra.mxu0 0
  %1552 = vmatprep.subr.bf16.mxu0 0
  %1553 = vmatpush1.bf16.msra.mxu0 0
  %1554 = vmatprep.mubr.bf16.mxu0 0
  %1555 = vmatmul.mubr.bf16.gmra.mrb[0].mxu0 %v1520
  %v1556 = vpop.f32.mrb[0].mxu0
  %v1557 = vadd.f32 0.0, %v1556
  %v1558 = vpop.f32.mrb[0].mxu0
  %v1559 = vpop.f32.mrb[0].mxu0
  %v1560 = vpop.f32.mrb[0].mxu0
  %1561 = vdwg.mxu0
  %v1562 = vadd.f32 %v1514, %v1557
  %v1563 = vxor.u32 %v1562, 2147483648
  %v1564 = vmul.f32 %v1563, 1.442695
  %v1565 = vpow.pop %v1564
  %v1566 = vadd.f32 %v1565, 1.0
  %v1567 = vrcp.pop %v1566
  %v1568 = vmul.f32 1.0, %v1567
  %v1569 = vtanh.pop %v1562
  %v1570 = vmul.f32 %v1568, %v1407
  %1572 = vrot.lane.b32.xlu0 %v1569, 64
  %v1573 = vpop.permute.xlu0 %1572
  %v1575 = vmul.f32 %v1568, %v1573
  %1577 = vrot.lane.b32.xlu0 %v1575, 32
  %v1578 = vpop.permute.xlu0 %1577
  %v1580 = vadd.f32 %v1570, %v1578
  %v1581 = vtanh.pop %v1580
  %1583 = vrot.lane.b32.xlu0 %v1581, 64
  %v1584 = vpop.permute.xlu0 %1583
  %v1586 = vmul.f32 %v1568, %v1584
  %v1587 = vstv %s1512
  %vm1588 = vcmp.lt.s32.totalorder %v1587, %v337
  %v1589 = vsel %vm1588, 1, 0
  %1590 = vset.pattern.permute.xlu0 0
  %1591 = vperm.xlu0 %1590, %v1589
  %v1592 = vpop.permute.xlu0 %1591
  %vm1593 = vcmp.eq.s32.totalorder %v1592, 1
  %v1594 = vsel %vm1593, %v1586, %v1406
  %v1595 = vsel %vm1593, %v1580, %v1407
  %v1596 = vsel %vm1593, %v1586, 0.0
  %v1597 = vpack.c.bf16 %v1596, %v1596
  %v1599 = vunpack.c.l.b16 %v1597
  %v1600 = vpack.c.b16 %v1599, %v1599
  %1601 = vrot.lane.b32.xlu0 %v1600, 32
  %v1602 = vpop.permute.xlu0 %1601
  %s1604 = scalar_lea.vmem %s9, 24
  %1605 = vst.msk [vmem:[%s1604] sm:$0xf] %vm459, %v1602
  %s1606 = ssub.s32 1, %s350
  %s1607 = scalar_lea.vmem [#allocation7], 8
  %v1608 = vld [vmem:[%s1607] sm:$0xff]
  %v1609 = vpack.c.bf16 %v1500, %v1500
  %1611 = vrot.lane.b32.xlu0 %v1609, 32
  %v1612 = vpop.permute.xlu0 %1611
  %v1614 = vsel %vm365, %v1612, 0
  %1616 = vmatprep.subr.bf16.mxu0 0
  %1617 = vmatpush1.bf16.msra.mxu0 %v473
  %1618 = vmatprep.subr.bf16.mxu0 0
  %1619 = vmatpush1.bf16.msra.mxu0 %v474
  %1620 = vmatprep.subr.bf16.mxu0 0
  %1621 = vmatpush1.bf16.msra.mxu0 0
  %1622 = vmatprep.subr.bf16.mxu0 0
  %1623 = vmatpush1.bf16.msra.mxu0 0
  %1624 = vmatprep.subr.bf16.mxu0 0
  %1625 = vmatpush1.bf16.msra.mxu0 0
  %1626 = vmatprep.subr.bf16.mxu0 0
  %1627 = vmatpush1.bf16.msra.mxu0 0
  %1628 = vmatprep.subr.bf16.mxu0 0
  %1629 = vmatpush1.bf16.msra.mxu0 0
  %1630 = vmatprep.subr.bf16.mxu0 0
  %1631 = vmatpush1.bf16.msra.mxu0 0
  %1632 = vmatprep.subr.bf16.mxu0 0
  %1633 = vmatpush1.bf16.msra.mxu0 0
  %1634 = vmatprep.subr.bf16.mxu0 0
  %1635 = vmatpush1.bf16.msra.mxu0 0
  %1636 = vmatprep.subr.bf16.mxu0 0
  %1637 = vmatpush1.bf16.msra.mxu0 0
  %1638 = vmatprep.subr.bf16.mxu0 0
  %1639 = vmatpush1.bf16.msra.mxu0 0
  %1640 = vmatprep.subr.bf16.mxu0 0
  %1641 = vmatpush1.bf16.msra.mxu0 0
  %1642 = vmatprep.subr.bf16.mxu0 0
  %1643 = vmatpush1.bf16.msra.mxu0 0
  %1644 = vmatprep.subr.bf16.mxu0 0
  %1645 = vmatpush1.bf16.msra.mxu0 0
  %1646 = vmatprep.subr.bf16.mxu0 0
  %1647 = vmatpush1.bf16.msra.mxu0 0
  %1648 = vmatprep.mubr.bf16.mxu0 0
  %1649 = vmatmul.mubr.bf16.gmra.mrb[0].mxu0 %v1614
  %v1650 = vpop.f32.mrb[0].mxu0
  %v1651 = vadd.f32 0.0, %v1650
  %v1652 = vpop.f32.mrb[0].mxu0
  %v1653 = vpop.f32.mrb[0].mxu0
  %v1654 = vpop.f32.mrb[0].mxu0
  %1655 = vdwg.mxu0
  %v1656 = vadd.f32 %v1608, %v1651
  %v1657 = vxor.u32 %v1656, 2147483648
  %v1658 = vmul.f32 %v1657, 1.442695
  %v1659 = vpow.pop %v1658
  %v1660 = vadd.f32 %v1659, 1.0
  %v1661 = vrcp.pop %v1660
  %v1662 = vmul.f32 1.0, %v1661
  %v1663 = vtanh.pop %v1656
  %v1664 = vmul.f32 %v1662, %v1501
  %1666 = vrot.lane.b32.xlu0 %v1663, 64
  %v1667 = vpop.permute.xlu0 %1666
  %v1669 = vmul.f32 %v1662, %v1667
  %1671 = vrot.lane.b32.xlu0 %v1669, 32
  %v1672 = vpop.permute.xlu0 %1671
  %v1674 = vadd.f32 %v1664, %v1672
  %v1675 = vtanh.pop %v1674
  %1677 = vrot.lane.b32.xlu0 %v1675, 64
  %v1678 = vpop.permute.xlu0 %1677
  %v1680 = vmul.f32 %v1662, %v1678
  %v1681 = vstv %s1606
  %vm1682 = vcmp.lt.s32.totalorder %v1681, %v337
  %v1683 = vsel %vm1682, 1, 0
  %1684 = vset.pattern.permute.xlu0 0
  %1685 = vperm.xlu0 %1684, %v1683
  %v1686 = vpop.permute.xlu0 %1685
  %vm1687 = vcmp.eq.s32.totalorder %v1686, 1
  %v1688 = vsel %vm1687, %v1680, %v1500
  %v1689 = vsel %vm1687, %v1674, %v1501
  %v1690 = vsel %vm1687, %v1680, 0.0
  %v1691 = vpack.c.bf16 %v1690, %v1690
  %v1693 = vunpack.c.l.b16 %v1691
  %v1694 = vpack.c.b16 %v1693, %v1693
  %1695 = vrot.lane.b32.xlu0 %v1694, 32
  %v1696 = vpop.permute.xlu0 %1695
  %s1698 = scalar_lea.vmem %s67, 4
  %1699 = vst.msk [vmem:[%s1698] sm:$0xf] %vm459, %v1696
  %s1700 = sadd.s32 %s350, 7
  %s1701 = scalar_lea.vmem [#allocation6], 56
  %v1702 = vld [vmem:[%s1701] sm:$0xff]
  %v1703 = vpack.c.bf16 %v1594, %v1594
  %1705 = vrot.lane.b32.xlu0 %v1703, 32
  %v1706 = vpop.permute.xlu0 %1705
  %v1708 = vsel %vm365, %v1706, 0
  %1710 = vmatprep.subr.bf16.mxu0 0
  %1711 = vmatpush1.bf16.msra.mxu0 %v361
  %1712 = vmatprep.subr.bf16.mxu0 0
  %1713 = vmatpush1.bf16.msra.mxu0 %v362
  %1714 = vmatprep.subr.bf16.mxu0 0
  %1715 = vmatpush1.bf16.msra.mxu0 0
  %1716 = vmatprep.subr.bf16.mxu0 0
  %1717 = vmatpush1.bf16.msra.mxu0 0
  %1718 = vmatprep.subr.bf16.mxu0 0
  %1719 = vmatpush1.bf16.msra.mxu0 0
  %1720 = vmatprep.subr.bf16.mxu0 0
  %1721 = vmatpush1.bf16.msra.mxu0 0
  %1722 = vmatprep.subr.bf16.mxu0 0
  %1723 = vmatpush1.bf16.msra.mxu0 0
  %1724 = vmatprep.subr.bf16.mxu0 0
  %1725 = vmatpush1.bf16.msra.mxu0 0
  %1726 = vmatprep.subr.bf16.mxu0 0
  %1727 = vmatpush1.bf16.msra.mxu0 0
  %1728 = vmatprep.subr.bf16.mxu0 0
  %1729 = vmatpush1.bf16.msra.mxu0 0
  %1730 = vmatprep.subr.bf16.mxu0 0
  %1731 = vmatpush1.bf16.msra.mxu0 0
  %1732 = vmatprep.subr.bf16.mxu0 0
  %1733 = vmatpush1.bf16.msra.mxu0 0
  %1734 = vmatprep.subr.bf16.mxu0 0
  %1735 = vmatpush1.bf16.msra.mxu0 0
  %1736 = vmatprep.subr.bf16.mxu0 0
  %1737 = vmatpush1.bf16.msra.mxu0 0
  %1738 = vmatprep.subr.bf16.mxu0 0
  %1739 = vmatpush1.bf16.msra.mxu0 0
  %1740 = vmatprep.subr.bf16.mxu0 0
  %1741 = vmatpush1.bf16.msra.mxu0 0
  %1742 = vmatprep.mubr.bf16.mxu0 0
  %1743 = vmatmul.mubr.bf16.gmra.mrb[0].mxu0 %v1708
  %v1744 = vpop.f32.mrb[0].mxu0
  %v1745 = vadd.f32 0.0, %v1744
  %v1746 = vpop.f32.mrb[0].mxu0
  %v1747 = vpop.f32.mrb[0].mxu0
  %v1748 = vpop.f32.mrb[0].mxu0
  %1749 = vdwg.mxu0
  %v1750 = vadd.f32 %v1702, %v1745
  %v1751 = vxor.u32 %v1750, 2147483648
  %v1752 = vmul.f32 %v1751, 1.442695
  %v1753 = vpow.pop %v1752
  %v1754 = vadd.f32 %v1753, 1.0
  %v1755 = vrcp.pop %v1754
  %v1756 = vmul.f32 1.0, %v1755
  %v1757 = vtanh.pop %v1750
  %v1758 = vmul.f32 %v1756, %v1595
  %1760 = vrot.lane.b32.xlu0 %v1757, 64
  %v1761 = vpop.permute.xlu0 %1760
  %v1763 = vmul.f32 %v1756, %v1761
  %1765 = vrot.lane.b32.xlu0 %v1763, 32
  %v1766 = vpop.permute.xlu0 %1765
  %v1768 = vadd.f32 %v1758, %v1766
  %v1769 = vtanh.pop %v1768
  %1771 = vrot.lane.b32.xlu0 %v1769, 64
  %v1772 = vpop.permute.xlu0 %1771
  %v1774 = vmul.f32 %v1756, %v1772
  %v1775 = vstv %s1700
  %vm1776 = vcmp.lt.s32.totalorder %v1775, %v337
  %v1777 = vsel %vm1776, 1, 0
  %1778 = vset.pattern.permute.xlu0 0
  %1779 = vperm.xlu0 %1778, %v1777
  %v1780 = vpop.permute.xlu0 %1779
  %vm1781 = vcmp.eq.s32.totalorder %v1780, 1
  %v1782 = vsel %vm1781, %v1774, %v1594
  %v1783 = vsel %vm1781, %v1768, %v1595
  %v1784 = vsel %vm1781, %v1774, 0.0
  %v1785 = vpack.c.bf16 %v1784, %v1784
  %v1787 = vunpack.c.l.b16 %v1785
  %v1788 = vpack.c.b16 %v1787, %v1787
  %1789 = vrot.lane.b32.xlu0 %v1788, 32
  %v1790 = vpop.permute.xlu0 %1789
  %s1792 = scalar_lea.vmem %s9, 28
  %1793 = vst.msk [vmem:[%s1792] sm:$0xf] %vm459, %v1790
  %s1794 = ssub.s32 0, %s350
  %v1795 = vld [vmem:[#allocation7] sm:$0xff]
  %v1796 = vpack.c.bf16 %v1688, %v1688
  %1798 = vrot.lane.b32.xlu0 %v1796, 32
  %v1799 = vpop.permute.xlu0 %1798
  %v1801 = vsel %vm365, %v1799, 0
  %1803 = vmatprep.subr.bf16.mxu0 0
  %1804 = vmatpush1.bf16.msra.mxu0 %v473
  %1805 = vmatprep.subr.bf16.mxu0 0
  %1806 = vmatpush1.bf16.msra.mxu0 %v474
  %1807 = vmatprep.subr.bf16.mxu0 0
  %1808 = vmatpush1.bf16.msra.mxu0 0
  %1809 = vmatprep.subr.bf16.mxu0 0
  %1810 = vmatpush1.bf16.msra.mxu0 0
  %1811 = vmatprep.subr.bf16.mxu0 0
  %1812 = vmatpush1.bf16.msra.mxu0 0
  %1813 = vmatprep.subr.bf16.mxu0 0
  %1814 = vmatpush1.bf16.msra.mxu0 0
  %1815 = vmatprep.subr.bf16.mxu0 0
  %1816 = vmatpush1.bf16.msra.mxu0 0
  %1817 = vmatprep.subr.bf16.mxu0 0
  %1818 = vmatpush1.bf16.msra.mxu0 0
  %1819 = vmatprep.subr.bf16.mxu0 0
  %1820 = vmatpush1.bf16.msra.mxu0 0
  %1821 = vmatprep.subr.bf16.mxu0 0
  %1822 = vmatpush1.bf16.msra.mxu0 0
  %1823 = vmatprep.subr.bf16.mxu0 0
  %1824 = vmatpush1.bf16.msra.mxu0 0
  %1825 = vmatprep.subr.bf16.mxu0 0
  %1826 = vmatpush1.bf16.msra.mxu0 0
  %1827 = vmatprep.subr.bf16.mxu0 0
  %1828 = vmatpush1.bf16.msra.mxu0 0
  %1829 = vmatprep.subr.bf16.mxu0 0
  %1830 = vmatpush1.bf16.msra.mxu0 0
  %1831 = vmatprep.subr.bf16.mxu0 0
  %1832 = vmatpush1.bf16.msra.mxu0 0
  %1833 = vmatprep.subr.bf16.mxu0 0
  %1834 = vmatpush1.bf16.msra.mxu0 0
  %1835 = vmatprep.mubr.bf16.mxu0 0
  %1836 = vmatmul.mubr.bf16.gmra.mrb[0].mxu0 %v1801
  %v1837 = vpop.f32.mrb[0].mxu0
  %v1838 = vadd.f32 0.0, %v1837
  %v1839 = vpop.f32.mrb[0].mxu0
  %v1840 = vpop.f32.mrb[0].mxu0
  %v1841 = vpop.f32.mrb[0].mxu0
  %1842 = vdwg.mxu0
  %v1843 = vadd.f32 %v1795, %v1838
  %v1844 = vxor.u32 %v1843, 2147483648
  %v1845 = vmul.f32 %v1844, 1.442695
  %v1846 = vpow.pop %v1845
  %v1847 = vadd.f32 %v1846, 1.0
  %v1848 = vrcp.pop %v1847
  %v1849 = vmul.f32 1.0, %v1848
  %v1850 = vtanh.pop %v1843
  %v1851 = vmul.f32 %v1849, %v1689
  %1853 = vrot.lane.b32.xlu0 %v1850, 64
  %v1854 = vpop.permute.xlu0 %1853
  %v1856 = vmul.f32 %v1849, %v1854
  %1858 = vrot.lane.b32.xlu0 %v1856, 32
  %v1859 = vpop.permute.xlu0 %1858
  %v1861 = vadd.f32 %v1851, %v1859
  %v1862 = vtanh.pop %v1861
  %1864 = vrot.lane.b32.xlu0 %v1862, 64
  %v1865 = vpop.permute.xlu0 %1864
  %v1867 = vmul.f32 %v1849, %v1865
  %v1868 = vstv %s1794
  %vm1869 = vcmp.lt.s32.totalorder %v1868, %v337
  %v1870 = vsel %vm1869, 1, 0
  %1871 = vset.pattern.permute.xlu0 0
  %1872 = vperm.xlu0 %1871, %v1870
  %v1873 = vpop.permute.xlu0 %1872
  %vm1874 = vcmp.eq.s32.totalorder %v1873, 1
  %v1875 = vsel %vm1874, %v1867, %v1688
  %v1876 = vsel %vm1874, %v1861, %v1689
  %v1877 = vsel %vm1874, %v1867, 0.0
  %v1878 = vpack.c.bf16 %v1877, %v1877
  %v1880 = vunpack.c.l.b16 %v1878
  %v1881 = vpack.c.b16 %v1880, %v1880
  %1882 = vrot.lane.b32.xlu0 %v1881, 32
  %v1883 = vpop.permute.xlu0 %1882
  %1885 = vst.msk [vmem:[%s67] sm:$0xf] %vm459, %v1883
  %1887 = vrot.lane.b32.xlu0 %v1782, 32
  %v1888 = vpop.permute.xlu0 %1887
  %1890 = vst.msk [vmem:[#allocation2] sm:$0xff] %vm365, %v1888
  %1892 = vrot.lane.b32.xlu0 %v1783, 96
  %v1893 = vpop.permute.xlu0 %1892
  %1895 = vst.msk [vmem:[#allocation3] sm:$0xff] %vm365, %v1893
  %1897 = vrot.lane.b32.xlu0 %v1875, 32
  %v1898 = vpop.permute.xlu0 %1897
  %1900 = vst.msk [vmem:[#allocation4] sm:$0xff] %vm365, %v1898
  %1902 = vrot.lane.b32.xlu0 %v1876, 96
  %v1903 = vpop.permute.xlu0 %1902
  %1905 = vst.msk [vmem:[#allocation5] sm:$0xff] %vm365, %v1903
  %s1906 = ssub.s32 0, 0
  %s1907 = smul.u32 8, %s1906
  %p1908 = scmp.lt.s32.totalorder %s1907, 7
  %s1909 = scalar_select %p1908, %s1907, 7
  %s1910 = smul.addr %s1909, 4
  %s1911 = scalar_lea.vmem %s10, %s1910
  // Predicated region
  $region42: #{tpu_custom_call.1} parent=0 // pred_check
    _
  $region43: #{tpu_custom_call.1} parent=0 // pred_check_branch
    %1913 = sbr.rel (0) target = $region45
  $region44: #{tpu_custom_call.1} parent=0 // pred_region
    _
  $region45: #{tpu_custom_call.1} parent=0 // pred_fallthru
    _
  // Predicated region
  $region46: #{tpu_custom_call.1} parent=0 // pred_check
    _
  $region47: #{tpu_custom_call.1} parent=0 // pred_check_branch
    %1915 = sbr.rel (0) target = $region49
  $region48: #{tpu_custom_call.1} parent=0 // pred_region
    %s1916 = ssub.s32 0, 0
    %s1917 = smul.u32 8, %s1916
  $region49: #{tpu_custom_call.1} parent=0 // pred_fallthru
    _
  // Predicated region
  $region50: #{tpu_custom_call.1} parent=0 // pred_check
    _
  $region51: #{tpu_custom_call.1} parent=0 // pred_check_branch
    %1919 = sbr.rel (0) target = $region53
  $region52: #{tpu_custom_call.1} parent=0 // pred_region
    _
  $region53: #{tpu_custom_call.1} parent=0 // pred_fallthru
    _
  // Predicated region
  $region54: #{tpu_custom_call.1} parent=0 // pred_check
    _
  $region55: #{tpu_custom_call.1} parent=0 // pred_check_branch
    %1921 = sbr.rel (0) target = $region57
  $region56: #{tpu_custom_call.1} parent=0 // pred_region
    %s1922 = ssub.s32 0, 0
    %s1923 = smul.u32 8, %s1922
    %p1924 = scmp.lt.s32.totalorder %s1923, 7
    %s1925 = scalar_select %p1924, %s1923, 7
    %s1926 = smul.addr %s1925, 4
    %s1927 = scalar_lea.vmem %s10, %s1926
  $region57: #{tpu_custom_call.1} parent=0 // pred_fallthru
    _

</llo_original>
